<compile_context>
chip_gen: v6e
topology: v6e:2x2x1
jax: 0.10.0
libtpu: 0.0.40
codegen_flags: <defaults>
</compile_context>

<pallas_src>
import functools

import jax
import jax.numpy as jnp
from jax import lax
from jax.experimental import pallas as pl
from jax.experimental.pallas import tpu as pltpu

OUT_SCALE = 0.001  # SiamFC_HEAD out_scale


# ---------------------------------------------------------------------------
# Weight preprocessing (wrapper side, weight-only, tiny)
# ---------------------------------------------------------------------------
def _block_diag(blk, n):
    """(K, N) block -> (n*K, n*N) block-diagonal matrix."""
    return jnp.kron(jnp.eye(n, dtype=blk.dtype), blk)


def _prep_conv1_s2(w_oihw, bias, w_in, wo):
    """3x3 stride-2 conv as 6 tap matmuls over the row/column-paired layout.

    Kernel operand rows hold two original image rows [row 2r | row 2r+1]
    (each w_in*cin wide).  For every tap, the needed inputs form one
    contiguous column range and the weights form a block-diagonal matrix, so
    the conv is:  out += slice(rows, cols) @ Wblk   (K = 2*cin per block).
    """
    c_out, c_in, kh, kw = w_oihw.shape
    taps, blocks = [], []
    for rd in (0, 1):                       # paired-row offset
        for half in (0, 1):                 # which original row in the pair
            dh = 2 * rd + half
            if dh >= kh:
                continue
            for pd in (0, 1):               # column-pair offset
                dw0 = 2 * pd
                blk = jnp.zeros((2 * c_in, c_out), jnp.float32)
                blk = blk.at[:c_in].set(jnp.transpose(w_oihw[:, :, dh, dw0]))
                if dw0 + 1 < kw:
                    blk = blk.at[c_in:].set(
                        jnp.transpose(w_oihw[:, :, dh, dw0 + 1]))
                blocks.append(_block_diag(blk, wo))
                taps.append((rd,
                             half * (w_in * c_in) + pd * (2 * c_in),
                             wo * 2 * c_in))
    w_stack = jnp.stack(blocks).astype(jnp.bfloat16)   # (6, Wo*2C, Wo*Cout)
    b_row = jnp.tile(bias.astype(jnp.float32), (wo,))[None]   # (1, Wo*Cout)
    return w_stack, b_row, tuple(taps)


def _prep_conv_s1(w_oihw, bias, wo):
    """3x3 stride-1 conv as 9 block-diagonal tap matmuls (flattened layout)."""
    c_out, c_in, kh, kw = w_oihw.shape
    taps, blocks = [], []
    for dh in range(kh):
        for dw in range(kw):
            blk = jnp.transpose(w_oihw[:, :, dh, dw]).astype(jnp.float32)
            blocks.append(_block_diag(blk, wo))
            taps.append((dh, dw * c_in, wo * c_in))
    w_stack = jnp.stack(blocks).astype(jnp.bfloat16)   # (9, Wo*Cin, Wo*Cout)
    b_row = jnp.tile(bias.astype(jnp.float32), (wo,))[None]
    return w_stack, b_row, tuple(taps)


# ---------------------------------------------------------------------------
# Fused Pallas kernel (per-batch grid step does the whole forward)
# ---------------------------------------------------------------------------
def _make_kernel(cfg):
    (c2,
     z1_taps, z1_ho, z2_taps, z2_ho, z2_wo,
     x1_taps, x1_ho, x2_taps, x2_ho,
     head_ho, head_wo) = cfg

    def conv(load, taps, w_ref, b_ref, rows_out, dst_ref):
        # sum over taps of bf16 MXU matmuls with f32 accumulate,
        # then f32 bias + ReLU epilogue, result kept in VMEM scratch.
        acc = None
        for t, (r0, c0, width) in enumerate(taps):
            sl = load(r0, rows_out, c0, width).astype(jnp.bfloat16)
            y = jnp.dot(sl, w_ref[t], preferred_element_type=jnp.float32)
            acc = y if acc is None else acc + y
        dst_ref[...] = jnp.maximum(acc + b_ref[...], 0.0)

    def kernel(z_ref, x_ref,
               w1z_ref, b1z_ref, w2z_ref, b2z_ref,
               w1x_ref, b1x_ref, w2x_ref, b2x_ref,
               o_ref, zf1_ref, xf1_ref, zf2_ref, xf2_ref):
        # ---- backbone, z branch (intermediates stay in VMEM) ----
        conv(lambda r, nr, c, nc: z_ref[0, r:r + nr, c:c + nc],
             z1_taps, w1z_ref, b1z_ref, z1_ho, zf1_ref)
        conv(lambda r, nr, c, nc: zf1_ref[r:r + nr, c:c + nc],
             z2_taps, w2z_ref, b2z_ref, z2_ho, zf2_ref)
        # ---- backbone, x branch ----
        conv(lambda r, nr, c, nc: x_ref[0, r:r + nr, c:c + nc],
             x1_taps, w1x_ref, b1x_ref, x1_ho, xf1_ref)
        conv(lambda r, nr, c, nc: xf1_ref[r:r + nr, c:c + nc],
             x2_taps, w2x_ref, b2x_ref, x2_ho, xf2_ref)

        # ---- SiamFC head: sliding-window correlation as a VPU epilogue ----
        zfv = zf2_ref[...]                         # (z2_ho, z2_wo*c2) f32
        span = z2_wo * c2
        rid = lax.broadcasted_iota(jnp.int32, (head_ho, head_wo), 0)
        cid = lax.broadcasted_iota(jnp.int32, (head_ho, head_wo), 1)
        acc = jnp.zeros((head_ho, head_wo), jnp.float32)
        for ho in range(head_ho):
            for wo in range(head_wo):
                win = xf2_ref[ho:ho + z2_ho, wo * c2: wo * c2 + span]
                s = jnp.sum(win * zfv, axis=1, keepdims=True)   # lane reduce
                s = jnp.sum(s, axis=0, keepdims=True)           # sublane reduce
                m = ((rid == ho) & (cid == wo)).astype(jnp.float32)
                acc = acc + s * m
        o_ref[0, 0] = (acc * OUT_SCALE).astype(o_ref.dtype)

    return kernel


# ---------------------------------------------------------------------------
# Backbone params (synthetic make_cnn_model substitute)
# ---------------------------------------------------------------------------
def init_backbone_params(key, in_ch=3, c1=8, c2=16):
    k1, k2, k3, k4 = jax.random.split(key, 4)
    return dict(
        w1=jax.random.normal(k1, (c1, in_ch, 3, 3), jnp.float32) * 0.1,
        b1=jax.random.normal(k2, (c1,), jnp.float32) * 0.1,
        w2=jax.random.normal(k3, (c2, c1, 3, 3), jnp.float32) * 0.1,
        b2=jax.random.normal(k4, (c2,), jnp.float32) * 0.1,
    )


def _backbone_dims(h, w):
    h1, w1 = (h - 3) // 2 + 1, (w - 3) // 2 + 1      # 3x3 conv, stride 2
    h2, w2 = h1 - 2, w1 - 2                          # 3x3 conv, stride 1
    return h1, w1, h2, w2


# ---------------------------------------------------------------------------
# SiamUAV_CNN_Model.forward
# ---------------------------------------------------------------------------
@functools.partial(jax.jit, static_argnames=("share",))
def siam_uav_forward(params_uav, params_sat, z_nchw, x_nchw, share=True):
    pz = params_uav
    px = params_uav if share else params_sat

    B, cin, hz, wz = z_nchw.shape
    _, _, hx, wx = x_nchw.shape
    assert hz % 2 == 0 and wz % 2 == 0 and hx % 2 == 0 and wx % 2 == 0
    c1 = pz["w1"].shape[0]
    c2 = pz["w2"].shape[0]

    hz1, wz1, hz2, wz2 = _backbone_dims(hz, wz)
    hx1, wx1, hx2, wx2 = _backbone_dims(hx, wx)
    hh, wh = hx2 - hz2 + 1, wx2 - wz2 + 1

    # NCHW -> NHWC (channels on the lane axis), then pair rows so that the
    # stride-2 conv only needs contiguous column ranges.  The reshape after
    # the transpose is free (contiguous memory).
    z2d = jnp.transpose(z_nchw, (0, 2, 3, 1)).reshape(
        B, hz // 2, 2 * wz * cin).astype(jnp.float32)
    x2d = jnp.transpose(x_nchw, (0, 2, 3, 1)).reshape(
        B, hx // 2, 2 * wx * cin).astype(jnp.float32)

    # Block-diagonal bf16 tap weights (per-branch, since Wo differs).
    w1z, b1z, z1_taps = _prep_conv1_s2(pz["w1"], pz["b1"], wz, wz1)
    w2z, b2z, z2_taps = _prep_conv_s1(pz["w2"], pz["b2"], wz2)
    w1x, b1x, x1_taps = _prep_conv1_s2(px["w1"], px["b1"], wx, wx1)
    w2x, b2x, x2_taps = _prep_conv_s1(px["w2"], px["b2"], wx2)

    cfg = (c2,
           z1_taps, hz1, z2_taps, hz2, wz2,
           x1_taps, hx1, x2_taps, hx2,
           hh, wh)
    kernel = _make_kernel(cfg)

    fmap = pl.pallas_call(
        kernel,
        out_shape=jax.ShapeDtypeStruct((B, 1, hh, wh), jnp.float32),
        grid=(B,),
        in_specs=[
            pl.BlockSpec((1, hz // 2, 2 * wz * cin), lambda b: (b, 0, 0)),
            pl.BlockSpec((1, hx // 2, 2 * wx * cin), lambda b: (b, 0, 0)),
            pl.BlockSpec(w1z.shape, lambda b: (0, 0, 0)),
            pl.BlockSpec(b1z.shape, lambda b: (0, 0)),
            pl.BlockSpec(w2z.shape, lambda b: (0, 0, 0)),
            pl.BlockSpec(b2z.shape, lambda b: (0, 0)),
            pl.BlockSpec(w1x.shape, lambda b: (0, 0, 0)),
            pl.BlockSpec(b1x.shape, lambda b: (0, 0)),
            pl.BlockSpec(w2x.shape, lambda b: (0, 0, 0)),
            pl.BlockSpec(b2x.shape, lambda b: (0, 0)),
        ],
        out_specs=pl.BlockSpec((1, 1, hh, wh), lambda b: (b, 0, 0, 0)),
        scratch_shapes=[
            pltpu.VMEM((hz1, wz1 * c1), jnp.float32),   # z conv1 activations
            pltpu.VMEM((hx1, wx1 * c1), jnp.float32),   # x conv1 activations
            pltpu.VMEM((hz2, wz2 * c2), jnp.float32),   # z conv2 activations
            pltpu.VMEM((hx2, wx2 * c2), jnp.float32),   # x conv2 activations
        ],
        compiler_params=pltpu.CompilerParams(
            dimension_semantics=("parallel",)),
    )(z2d, x2d, w1z, b1z, w2z, b2z, w1x, b1x, w2x, b2x)
    return fmap, None


# ---------------------------------------------------------------------------
# Pure-JAX reference (same bf16 quantization points as the kernel)
# ---------------------------------------------------------------------------
def _ref_conv_relu(x_nhwc, w_oihw, b, stride):
    w_hwio = jnp.transpose(w_oihw, (2, 3, 1, 0)).astype(jnp.bfloat16)
    y = lax.conv_general_dilated(
        x_nhwc.astype(jnp.bfloat16), w_hwio, (stride, stride), "VALID",
        dimension_numbers=("NHWC", "HWIO", "NHWC"),
        preferred_element_type=jnp.float32)
    return jnp.maximum(y + b[None, None, None, :].astype(jnp.float32), 0.0)


def _ref_forward(params_uav, params_sat, z_nchw, x_nchw, share=True):
    pz = params_uav
    px = params_uav if share else params_sat
    z = jnp.transpose(z_nchw, (0, 2, 3, 1))
    x = jnp.transpose(x_nchw, (0, 2, 3, 1))

    def bb(t, p):
        t = _ref_conv_relu(t, p["w1"], p["b1"], 2)
        t = _ref_conv_relu(t, p["w2"], p["b2"], 1)
        return t

    zf, xf = bb(z, pz), bb(x, px)

    def one(xe, ze):
        y = lax.conv_general_dilated(
            xe[None], ze[..., None], (1, 1), "VALID",
            dimension_numbers=("NHWC", "HWIO", "NHWC"),
            precision=lax.Precision.HIGHEST)
        return y[0, :, :, 0]

    corr = jax.vmap(one)(xf, zf) * OUT_SCALE
    return corr[:, None, :, :]


if __name__ == "__main__":
    key = jax.random.PRNGKey(0)
    kz, kx, kp = jax.random.split(key, 3)
    # z: UAV crop, x: satellite crop (NCHW, PyTorch convention)
    z = jax.random.normal(kz, (2, 3, 16, 16), jnp.float32)
    x = jax.random.normal(kx, (2, 3, 24, 24), jnp.float32)
    params = init_backbone_params(kp)

    fmap, aux = siam_uav_forward(params, params, z, x, share=True)
    fmap = jax.block_until_ready(fmap)
    assert fmap.shape == (2, 1, 5, 5) and aux is None

    ref = jax.block_until_ready(_ref_forward(params, params, z, x, share=True))
    assert jnp.allclose(fmap, ref, atol=1e-4, rtol=2e-3), "mismatch vs reference"

    # exercise the non-shared branch (same params -> same result)
    fmap2, _ = siam_uav_forward(params, params, z, x, share=False)
    fmap2 = jax.block_until_ready(fmap2)
    assert jnp.allclose(fmap2, ref, atol=1e-4, rtol=2e-3), "share=False mismatch"

    print("KERNEL_OK")
</pallas_src>

<mosaic_0001>
module attributes {stable_mosaic.version = 11 : i64} {
  func.func @kernel(%arg0: i32, %arg1: memref<1x8x96xf32, #tpu.memory_space<vmem>>, %arg2: memref<1x12x144xf32, #tpu.memory_space<vmem>>, %arg3: memref<6x42x56xbf16, #tpu.memory_space<vmem>>, %arg4: memref<1x56xf32, #tpu.memory_space<vmem>>, %arg5: memref<9x40x80xbf16, #tpu.memory_space<vmem>>, %arg6: memref<1x80xf32, #tpu.memory_space<vmem>>, %arg7: memref<6x66x88xbf16, #tpu.memory_space<vmem>>, %arg8: memref<1x88xf32, #tpu.memory_space<vmem>>, %arg9: memref<9x72x144xbf16, #tpu.memory_space<vmem>>, %arg10: memref<1x144xf32, #tpu.memory_space<vmem>>, %arg11: memref<1x1x5x5xf32, #tpu.memory_space<vmem>>, %arg12: memref<7x56xf32, #tpu.memory_space<vmem>>, %arg13: memref<11x88xf32, #tpu.memory_space<vmem>>, %arg14: memref<5x80xf32, #tpu.memory_space<vmem>>, %arg15: memref<9x144xf32, #tpu.memory_space<vmem>>) attributes {dimension_semantics = [#tpu.dimension_semantics<parallel>], iteration_bounds = array<i64: 2>, scalar_prefetch = 0 : i64, scratch_operands = 4 : i64, tpu.core_type = #tpu.core_type<tc>, window_params = [{transform_indices = @transform_0, window_bounds = array<i64: 1, 8, 96>}, {transform_indices = @transform_1, window_bounds = array<i64: 1, 12, 144>}, {pipeline_mode = #tpu.pipeline_mode<synchronous>, transform_indices = @transform_2, window_bounds = array<i64: 6, 42, 56>}, {pipeline_mode = #tpu.pipeline_mode<synchronous>, transform_indices = @transform_3, window_bounds = array<i64: 1, 56>}, {pipeline_mode = #tpu.pipeline_mode<synchronous>, transform_indices = @transform_4, window_bounds = array<i64: 9, 40, 80>}, {pipeline_mode = #tpu.pipeline_mode<synchronous>, transform_indices = @transform_5, window_bounds = array<i64: 1, 80>}, {pipeline_mode = #tpu.pipeline_mode<synchronous>, transform_indices = @transform_6, window_bounds = array<i64: 6, 66, 88>}, {pipeline_mode = #tpu.pipeline_mode<synchronous>, transform_indices = @transform_7, window_bounds = array<i64: 1, 88>}, {pipeline_mode = #tpu.pipeline_mode<synchronous>, transform_indices = @transform_8, window_bounds = array<i64: 9, 72, 144>}, {pipeline_mode = #tpu.pipeline_mode<synchronous>, transform_indices = @transform_9, window_bounds = array<i64: 1, 144>}, {transform_indices = @transform_10, window_bounds = array<i64: 1, 1, 5, 5>}]} {
    %c0 = arith.constant 0 : index
    %c0_0 = arith.constant 0 : index
    %c0_1 = arith.constant 0 : index
    %0 = vector.load %arg1[%c0, %c0_0, %c0_1] : memref<1x8x96xf32, #tpu.memory_space<vmem>>, vector<1x7x42xf32>
    %1 = vector.shape_cast %0 : vector<1x7x42xf32> to vector<7x42xf32>
    %2 = arith.truncf %1 : vector<7x42xf32> to vector<7x42xbf16>
    %c0_2 = arith.constant 0 : index
    %c0_3 = arith.constant 0 : index
    %c0_4 = arith.constant 0 : index
    %3 = vector.load %arg3[%c0_2, %c0_3, %c0_4] : memref<6x42x56xbf16, #tpu.memory_space<vmem>>, vector<1x42x56xbf16>
    %4 = vector.shape_cast %3 : vector<1x42x56xbf16> to vector<42x56xbf16>
    %cst = arith.constant dense<0.000000e+00> : vector<7x56xf32>
    %5 = tpu.matmul %2, %4, %cst {dimension_numbers = #tpu.dot_dimension_numbers<[1], [0], [0], [1], [0, 0, 1, 1], [], []>} : vector<7x42xbf16>, vector<42x56xbf16>, vector<7x56xf32> -> vector<7x56xf32>
    %c0_5 = arith.constant 0 : index
    %c0_6 = arith.constant 0 : index
    %c6 = arith.constant 6 : index
    %6 = vector.load %arg1[%c0_5, %c0_6, %c6] : memref<1x8x96xf32, #tpu.memory_space<vmem>>, vector<1x7x42xf32>
    %7 = vector.shape_cast %6 : vector<1x7x42xf32> to vector<7x42xf32>
    %8 = arith.truncf %7 : vector<7x42xf32> to vector<7x42xbf16>
    %c1 = arith.constant 1 : index
    %c0_7 = arith.constant 0 : index
    %c0_8 = arith.constant 0 : index
    %9 = vector.load %arg3[%c1, %c0_7, %c0_8] : memref<6x42x56xbf16, #tpu.memory_space<vmem>>, vector<1x42x56xbf16>
    %10 = vector.shape_cast %9 : vector<1x42x56xbf16> to vector<42x56xbf16>
    %cst_9 = arith.constant dense<0.000000e+00> : vector<7x56xf32>
    %11 = tpu.matmul %8, %10, %cst_9 {dimension_numbers = #tpu.dot_dimension_numbers<[1], [0], [0], [1], [0, 0, 1, 1], [], []>} : vector<7x42xbf16>, vector<42x56xbf16>, vector<7x56xf32> -> vector<7x56xf32>
    %12 = arith.addf %5, %11 : vector<7x56xf32>
    %c0_10 = arith.constant 0 : index
    %c0_11 = arith.constant 0 : index
    %c48 = arith.constant 48 : index
    %13 = vector.load %arg1[%c0_10, %c0_11, %c48] : memref<1x8x96xf32, #tpu.memory_space<vmem>>, vector<1x7x42xf32>
    %14 = vector.shape_cast %13 : vector<1x7x42xf32> to vector<7x42xf32>
    %15 = arith.truncf %14 : vector<7x42xf32> to vector<7x42xbf16>
    %c2 = arith.constant 2 : index
    %c0_12 = arith.constant 0 : index
    %c0_13 = arith.constant 0 : index
    %16 = vector.load %arg3[%c2, %c0_12, %c0_13] : memref<6x42x56xbf16, #tpu.memory_space<vmem>>, vector<1x42x56xbf16>
    %17 = vector.shape_cast %16 : vector<1x42x56xbf16> to vector<42x56xbf16>
    %cst_14 = arith.constant dense<0.000000e+00> : vector<7x56xf32>
    %18 = tpu.matmul %15, %17, %cst_14 {dimension_numbers = #tpu.dot_dimension_numbers<[1], [0], [0], [1], [0, 0, 1, 1], [], []>} : vector<7x42xbf16>, vector<42x56xbf16>, vector<7x56xf32> -> vector<7x56xf32>
    %19 = arith.addf %12, %18 : vector<7x56xf32>
    %c0_15 = arith.constant 0 : index
    %c0_16 = arith.constant 0 : index
    %c54 = arith.constant 54 : index
    %20 = vector.load %arg1[%c0_15, %c0_16, %c54] : memref<1x8x96xf32, #tpu.memory_space<vmem>>, vector<1x7x42xf32>
    %21 = vector.shape_cast %20 : vector<1x7x42xf32> to vector<7x42xf32>
    %22 = arith.truncf %21 : vector<7x42xf32> to vector<7x42xbf16>
    %c3 = arith.constant 3 : index
    %c0_17 = arith.constant 0 : index
    %c0_18 = arith.constant 0 : index
    %23 = vector.load %arg3[%c3, %c0_17, %c0_18] : memref<6x42x56xbf16, #tpu.memory_space<vmem>>, vector<1x42x56xbf16>
    %24 = vector.shape_cast %23 : vector<1x42x56xbf16> to vector<42x56xbf16>
    %cst_19 = arith.constant dense<0.000000e+00> : vector<7x56xf32>
    %25 = tpu.matmul %22, %24, %cst_19 {dimension_numbers = #tpu.dot_dimension_numbers<[1], [0], [0], [1], [0, 0, 1, 1], [], []>} : vector<7x42xbf16>, vector<42x56xbf16>, vector<7x56xf32> -> vector<7x56xf32>
    %26 = arith.addf %19, %25 : vector<7x56xf32>
    %c0_20 = arith.constant 0 : index
    %c1_21 = arith.constant 1 : index
    %c0_22 = arith.constant 0 : index
    %27 = vector.load %arg1[%c0_20, %c1_21, %c0_22] : memref<1x8x96xf32, #tpu.memory_space<vmem>>, vector<1x7x42xf32>
    %28 = vector.shape_cast %27 : vector<1x7x42xf32> to vector<7x42xf32>
    %29 = arith.truncf %28 : vector<7x42xf32> to vector<7x42xbf16>
    %c4 = arith.constant 4 : index
    %c0_23 = arith.constant 0 : index
    %c0_24 = arith.constant 0 : index
    %30 = vector.load %arg3[%c4, %c0_23, %c0_24] : memref<6x42x56xbf16, #tpu.memory_space<vmem>>, vector<1x42x56xbf16>
    %31 = vector.shape_cast %30 : vector<1x42x56xbf16> to vector<42x56xbf16>
    %cst_25 = arith.constant dense<0.000000e+00> : vector<7x56xf32>
    %32 = tpu.matmul %29, %31, %cst_25 {dimension_numbers = #tpu.dot_dimension_numbers<[1], [0], [0], [1], [0, 0, 1, 1], [], []>} : vector<7x42xbf16>, vector<42x56xbf16>, vector<7x56xf32> -> vector<7x56xf32>
    %33 = arith.addf %26, %32 : vector<7x56xf32>
    %c0_26 = arith.constant 0 : index
    %c1_27 = arith.constant 1 : index
    %c6_28 = arith.constant 6 : index
    %34 = vector.load %arg1[%c0_26, %c1_27, %c6_28] : memref<1x8x96xf32, #tpu.memory_space<vmem>>, vector<1x7x42xf32>
    %35 = vector.shape_cast %34 : vector<1x7x42xf32> to vector<7x42xf32>
    %36 = arith.truncf %35 : vector<7x42xf32> to vector<7x42xbf16>
    %c5 = arith.constant 5 : index
    %c0_29 = arith.constant 0 : index
    %c0_30 = arith.constant 0 : index
    %37 = vector.load %arg3[%c5, %c0_29, %c0_30] : memref<6x42x56xbf16, #tpu.memory_space<vmem>>, vector<1x42x56xbf16>
    %38 = vector.shape_cast %37 : vector<1x42x56xbf16> to vector<42x56xbf16>
    %cst_31 = arith.constant dense<0.000000e+00> : vector<7x56xf32>
    %39 = tpu.matmul %36, %38, %cst_31 {dimension_numbers = #tpu.dot_dimension_numbers<[1], [0], [0], [1], [0, 0, 1, 1], [], []>} : vector<7x42xbf16>, vector<42x56xbf16>, vector<7x56xf32> -> vector<7x56xf32>
    %40 = arith.addf %33, %39 : vector<7x56xf32>
    %c0_32 = arith.constant 0 : index
    %c0_33 = arith.constant 0 : index
    %41 = vector.load %arg4[%c0_32, %c0_33] : memref<1x56xf32, #tpu.memory_space<vmem>>, vector<1x56xf32>
    %42 = vector.broadcast %41 : vector<1x56xf32> to vector<7x56xf32>
    %43 = arith.addf %40, %42 : vector<7x56xf32>
    %cst_34 = arith.constant 0.000000e+00 : f32
    %44 = vector.broadcast %cst_34 : f32 to vector<7x56xf32>
    %45 = arith.maximumf %43, %44 : vector<7x56xf32>
    %c0_35 = arith.constant 0 : index
    %c0_36 = arith.constant 0 : index
    %46 = vector.load %arg12[%c0_35, %c0_36] : memref<7x56xf32, #tpu.memory_space<vmem>>, vector<7x56xf32>
    tpu.vector_store %arg12[%c0_35, %c0_36], %45 {strides = array<i32>} : memref<7x56xf32, #tpu.memory_space<vmem>>, vector<7x56xf32>,
    %c0_37 = arith.constant 0 : index
    %c0_38 = arith.constant 0 : index
    %47 = vector.load %arg12[%c0_37, %c0_38] : memref<7x56xf32, #tpu.memory_space<vmem>>, vector<5x40xf32>
    %48 = arith.truncf %47 : vector<5x40xf32> to vector<5x40xbf16>
    %c0_39 = arith.constant 0 : index
    %c0_40 = arith.constant 0 : index
    %c0_41 = arith.constant 0 : index
    %49 = vector.load %arg5[%c0_39, %c0_40, %c0_41] : memref<9x40x80xbf16, #tpu.memory_space<vmem>>, vector<1x40x80xbf16>
    %50 = vector.shape_cast %49 : vector<1x40x80xbf16> to vector<40x80xbf16>
    %cst_42 = arith.constant dense<0.000000e+00> : vector<5x80xf32>
    %51 = tpu.matmul %48, %50, %cst_42 {dimension_numbers = #tpu.dot_dimension_numbers<[1], [0], [0], [1], [0, 0, 1, 1], [], []>} : vector<5x40xbf16>, vector<40x80xbf16>, vector<5x80xf32> -> vector<5x80xf32>
    %c0_43 = arith.constant 0 : index
    %c8 = arith.constant 8 : index
    %52 = vector.load %arg12[%c0_43, %c8] : memref<7x56xf32, #tpu.memory_space<vmem>>, vector<5x40xf32>
    %53 = arith.truncf %52 : vector<5x40xf32> to vector<5x40xbf16>
    %c1_44 = arith.constant 1 : index
    %c0_45 = arith.constant 0 : index
    %c0_46 = arith.constant 0 : index
    %54 = vector.load %arg5[%c1_44, %c0_45, %c0_46] : memref<9x40x80xbf16, #tpu.memory_space<vmem>>, vector<1x40x80xbf16>
    %55 = vector.shape_cast %54 : vector<1x40x80xbf16> to vector<40x80xbf16>
    %cst_47 = arith.constant dense<0.000000e+00> : vector<5x80xf32>
    %56 = tpu.matmul %53, %55, %cst_47 {dimension_numbers = #tpu.dot_dimension_numbers<[1], [0], [0], [1], [0, 0, 1, 1], [], []>} : vector<5x40xbf16>, vector<40x80xbf16>, vector<5x80xf32> -> vector<5x80xf32>
    %57 = arith.addf %51, %56 : vector<5x80xf32>
    %c0_48 = arith.constant 0 : index
    %c16 = arith.constant 16 : index
    %58 = vector.load %arg12[%c0_48, %c16] : memref<7x56xf32, #tpu.memory_space<vmem>>, vector<5x40xf32>
    %59 = arith.truncf %58 : vector<5x40xf32> to vector<5x40xbf16>
    %c2_49 = arith.constant 2 : index
    %c0_50 = arith.constant 0 : index
    %c0_51 = arith.constant 0 : index
    %60 = vector.load %arg5[%c2_49, %c0_50, %c0_51] : memref<9x40x80xbf16, #tpu.memory_space<vmem>>, vector<1x40x80xbf16>
    %61 = vector.shape_cast %60 : vector<1x40x80xbf16> to vector<40x80xbf16>
    %cst_52 = arith.constant dense<0.000000e+00> : vector<5x80xf32>
    %62 = tpu.matmul %59, %61, %cst_52 {dimension_numbers = #tpu.dot_dimension_numbers<[1], [0], [0], [1], [0, 0, 1, 1], [], []>} : vector<5x40xbf16>, vector<40x80xbf16>, vector<5x80xf32> -> vector<5x80xf32>
    %63 = arith.addf %57, %62 : vector<5x80xf32>
    %c1_53 = arith.constant 1 : index
    %c0_54 = arith.constant 0 : index
    %64 = vector.load %arg12[%c1_53, %c0_54] : memref<7x56xf32, #tpu.memory_space<vmem>>, vector<5x40xf32>
    %65 = arith.truncf %64 : vector<5x40xf32> to vector<5x40xbf16>
    %c3_55 = arith.constant 3 : index
    %c0_56 = arith.constant 0 : index
    %c0_57 = arith.constant 0 : index
    %66 = vector.load %arg5[%c3_55, %c0_56, %c0_57] : memref<9x40x80xbf16, #tpu.memory_space<vmem>>, vector<1x40x80xbf16>
    %67 = vector.shape_cast %66 : vector<1x40x80xbf16> to vector<40x80xbf16>
    %cst_58 = arith.constant dense<0.000000e+00> : vector<5x80xf32>
    %68 = tpu.matmul %65, %67, %cst_58 {dimension_numbers = #tpu.dot_dimension_numbers<[1], [0], [0], [1], [0, 0, 1, 1], [], []>} : vector<5x40xbf16>, vector<40x80xbf16>, vector<5x80xf32> -> vector<5x80xf32>
    %69 = arith.addf %63, %68 : vector<5x80xf32>
    %c1_59 = arith.constant 1 : index
    %c8_60 = arith.constant 8 : index
    %70 = vector.load %arg12[%c1_59, %c8_60] : memref<7x56xf32, #tpu.memory_space<vmem>>, vector<5x40xf32>
    %71 = arith.truncf %70 : vector<5x40xf32> to vector<5x40xbf16>
    %c4_61 = arith.constant 4 : index
    %c0_62 = arith.constant 0 : index
    %c0_63 = arith.constant 0 : index
    %72 = vector.load %arg5[%c4_61, %c0_62, %c0_63] : memref<9x40x80xbf16, #tpu.memory_space<vmem>>, vector<1x40x80xbf16>
    %73 = vector.shape_cast %72 : vector<1x40x80xbf16> to vector<40x80xbf16>
    %cst_64 = arith.constant dense<0.000000e+00> : vector<5x80xf32>
    %74 = tpu.matmul %71, %73, %cst_64 {dimension_numbers = #tpu.dot_dimension_numbers<[1], [0], [0], [1], [0, 0, 1, 1], [], []>} : vector<5x40xbf16>, vector<40x80xbf16>, vector<5x80xf32> -> vector<5x80xf32>
    %75 = arith.addf %69, %74 : vector<5x80xf32>
    %c1_65 = arith.constant 1 : index
    %c16_66 = arith.constant 16 : index
    %76 = vector.load %arg12[%c1_65, %c16_66] : memref<7x56xf32, #tpu.memory_space<vmem>>, vector<5x40xf32>
    %77 = arith.truncf %76 : vector<5x40xf32> to vector<5x40xbf16>
    %c5_67 = arith.constant 5 : index
    %c0_68 = arith.constant 0 : index
    %c0_69 = arith.constant 0 : index
    %78 = vector.load %arg5[%c5_67, %c0_68, %c0_69] : memref<9x40x80xbf16, #tpu.memory_space<vmem>>, vector<1x40x80xbf16>
    %79 = vector.shape_cast %78 : vector<1x40x80xbf16> to vector<40x80xbf16>
    %cst_70 = arith.constant dense<0.000000e+00> : vector<5x80xf32>
    %80 = tpu.matmul %77, %79, %cst_70 {dimension_numbers = #tpu.dot_dimension_numbers<[1], [0], [0], [1], [0, 0, 1, 1], [], []>} : vector<5x40xbf16>, vector<40x80xbf16>, vector<5x80xf32> -> vector<5x80xf32>
    %81 = arith.addf %75, %80 : vector<5x80xf32>
    %c2_71 = arith.constant 2 : index
    %c0_72 = arith.constant 0 : index
    %82 = vector.load %arg12[%c2_71, %c0_72] : memref<7x56xf32, #tpu.memory_space<vmem>>, vector<5x40xf32>
    %83 = arith.truncf %82 : vector<5x40xf32> to vector<5x40xbf16>
    %c6_73 = arith.constant 6 : index
    %c0_74 = arith.constant 0 : index
    %c0_75 = arith.constant 0 : index
    %84 = vector.load %arg5[%c6_73, %c0_74, %c0_75] : memref<9x40x80xbf16, #tpu.memory_space<vmem>>, vector<1x40x80xbf16>
    %85 = vector.shape_cast %84 : vector<1x40x80xbf16> to vector<40x80xbf16>
    %cst_76 = arith.constant dense<0.000000e+00> : vector<5x80xf32>
    %86 = tpu.matmul %83, %85, %cst_76 {dimension_numbers = #tpu.dot_dimension_numbers<[1], [0], [0], [1], [0, 0, 1, 1], [], []>} : vector<5x40xbf16>, vector<40x80xbf16>, vector<5x80xf32> -> vector<5x80xf32>
    %87 = arith.addf %81, %86 : vector<5x80xf32>
    %c2_77 = arith.constant 2 : index
    %c8_78 = arith.constant 8 : index
    %88 = vector.load %arg12[%c2_77, %c8_78] : memref<7x56xf32, #tpu.memory_space<vmem>>, vector<5x40xf32>
    %89 = arith.truncf %88 : vector<5x40xf32> to vector<5x40xbf16>
    %c7 = arith.constant 7 : index
    %c0_79 = arith.constant 0 : index
    %c0_80 = arith.constant 0 : index
    %90 = vector.load %arg5[%c7, %c0_79, %c0_80] : memref<9x40x80xbf16, #tpu.memory_space<vmem>>, vector<1x40x80xbf16>
    %91 = vector.shape_cast %90 : vector<1x40x80xbf16> to vector<40x80xbf16>
    %cst_81 = arith.constant dense<0.000000e+00> : vector<5x80xf32>
    %92 = tpu.matmul %89, %91, %cst_81 {dimension_numbers = #tpu.dot_dimension_numbers<[1], [0], [0], [1], [0, 0, 1, 1], [], []>} : vector<5x40xbf16>, vector<40x80xbf16>, vector<5x80xf32> -> vector<5x80xf32>
    %93 = arith.addf %87, %92 : vector<5x80xf32>
    %c2_82 = arith.constant 2 : index
    %c16_83 = arith.constant 16 : index
    %94 = vector.load %arg12[%c2_82, %c16_83] : memref<7x56xf32, #tpu.memory_space<vmem>>, vector<5x40xf32>
    %95 = arith.truncf %94 : vector<5x40xf32> to vector<5x40xbf16>
    %c8_84 = arith.constant 8 : index
    %c0_85 = arith.constant 0 : index
    %c0_86 = arith.constant 0 : index
    %96 = vector.load %arg5[%c8_84, %c0_85, %c0_86] : memref<9x40x80xbf16, #tpu.memory_space<vmem>>, vector<1x40x80xbf16>
    %97 = vector.shape_cast %96 : vector<1x40x80xbf16> to vector<40x80xbf16>
    %cst_87 = arith.constant dense<0.000000e+00> : vector<5x80xf32>
    %98 = tpu.matmul %95, %97, %cst_87 {dimension_numbers = #tpu.dot_dimension_numbers<[1], [0], [0], [1], [0, 0, 1, 1], [], []>} : vector<5x40xbf16>, vector<40x80xbf16>, vector<5x80xf32> -> vector<5x80xf32>
    %99 = arith.addf %93, %98 : vector<5x80xf32>
    %c0_88 = arith.constant 0 : index
    %c0_89 = arith.constant 0 : index
    %100 = vector.load %arg6[%c0_88, %c0_89] : memref<1x80xf32, #tpu.memory_space<vmem>>, vector<1x80xf32>
    %101 = vector.broadcast %100 : vector<1x80xf32> to vector<5x80xf32>
    %102 = arith.addf %99, %101 : vector<5x80xf32>
    %cst_90 = arith.constant 0.000000e+00 : f32
    %103 = vector.broadcast %cst_90 : f32 to vector<5x80xf32>
    %104 = arith.maximumf %102, %103 : vector<5x80xf32>
    %c0_91 = arith.constant 0 : index
    %c0_92 = arith.constant 0 : index
    %105 = vector.load %arg14[%c0_91, %c0_92] : memref<5x80xf32, #tpu.memory_space<vmem>>, vector<5x80xf32>
    tpu.vector_store %arg14[%c0_91, %c0_92], %104 {strides = array<i32>} : memref<5x80xf32, #tpu.memory_space<vmem>>, vector<5x80xf32>,
    %c0_93 = arith.constant 0 : index
    %c0_94 = arith.constant 0 : index
    %c0_95 = arith.constant 0 : index
    %106 = vector.load %arg2[%c0_93, %c0_94, %c0_95] : memref<1x12x144xf32, #tpu.memory_space<vmem>>, vector<1x11x66xf32>
    %107 = vector.shape_cast %106 : vector<1x11x66xf32> to vector<11x66xf32>
    %108 = arith.truncf %107 : vector<11x66xf32> to vector<11x66xbf16>
    %c0_96 = arith.constant 0 : index
    %c0_97 = arith.constant 0 : index
    %c0_98 = arith.constant 0 : index
    %109 = vector.load %arg7[%c0_96, %c0_97, %c0_98] : memref<6x66x88xbf16, #tpu.memory_space<vmem>>, vector<1x66x88xbf16>
    %110 = vector.shape_cast %109 : vector<1x66x88xbf16> to vector<66x88xbf16>
    %cst_99 = arith.constant dense<0.000000e+00> : vector<11x88xf32>
    %111 = tpu.matmul %108, %110, %cst_99 {dimension_numbers = #tpu.dot_dimension_numbers<[1], [0], [0], [1], [0, 0, 1, 1], [], []>} : vector<11x66xbf16>, vector<66x88xbf16>, vector<11x88xf32> -> vector<11x88xf32>
    %c0_100 = arith.constant 0 : index
    %c0_101 = arith.constant 0 : index
    %c6_102 = arith.constant 6 : index
    %112 = vector.load %arg2[%c0_100, %c0_101, %c6_102] : memref<1x12x144xf32, #tpu.memory_space<vmem>>, vector<1x11x66xf32>
    %113 = vector.shape_cast %112 : vector<1x11x66xf32> to vector<11x66xf32>
    %114 = arith.truncf %113 : vector<11x66xf32> to vector<11x66xbf16>
    %c1_103 = arith.constant 1 : index
    %c0_104 = arith.constant 0 : index
    %c0_105 = arith.constant 0 : index
    %115 = vector.load %arg7[%c1_103, %c0_104, %c0_105] : memref<6x66x88xbf16, #tpu.memory_space<vmem>>, vector<1x66x88xbf16>
    %116 = vector.shape_cast %115 : vector<1x66x88xbf16> to vector<66x88xbf16>
    %cst_106 = arith.constant dense<0.000000e+00> : vector<11x88xf32>
    %117 = tpu.matmul %114, %116, %cst_106 {dimension_numbers = #tpu.dot_dimension_numbers<[1], [0], [0], [1], [0, 0, 1, 1], [], []>} : vector<11x66xbf16>, vector<66x88xbf16>, vector<11x88xf32> -> vector<11x88xf32>
    %118 = arith.addf %111, %117 : vector<11x88xf32>
    %c0_107 = arith.constant 0 : index
    %c0_108 = arith.constant 0 : index
    %c72 = arith.constant 72 : index
    %119 = vector.load %arg2[%c0_107, %c0_108, %c72] : memref<1x12x144xf32, #tpu.memory_space<vmem>>, vector<1x11x66xf32>
    %120 = vector.shape_cast %119 : vector<1x11x66xf32> to vector<11x66xf32>
    %121 = arith.truncf %120 : vector<11x66xf32> to vector<11x66xbf16>
    %c2_109 = arith.constant 2 : index
    %c0_110 = arith.constant 0 : index
    %c0_111 = arith.constant 0 : index
    %122 = vector.load %arg7[%c2_109, %c0_110, %c0_111] : memref<6x66x88xbf16, #tpu.memory_space<vmem>>, vector<1x66x88xbf16>
    %123 = vector.shape_cast %122 : vector<1x66x88xbf16> to vector<66x88xbf16>
    %cst_112 = arith.constant dense<0.000000e+00> : vector<11x88xf32>
    %124 = tpu.matmul %121, %123, %cst_112 {dimension_numbers = #tpu.dot_dimension_numbers<[1], [0], [0], [1], [0, 0, 1, 1], [], []>} : vector<11x66xbf16>, vector<66x88xbf16>, vector<11x88xf32> -> vector<11x88xf32>
    %125 = arith.addf %118, %124 : vector<11x88xf32>
    %c0_113 = arith.constant 0 : index
    %c0_114 = arith.constant 0 : index
    %c78 = arith.constant 78 : index
    %126 = vector.load %arg2[%c0_113, %c0_114, %c78] : memref<1x12x144xf32, #tpu.memory_space<vmem>>, vector<1x11x66xf32>
    %127 = vector.shape_cast %126 : vector<1x11x66xf32> to vector<11x66xf32>
    %128 = arith.truncf %127 : vector<11x66xf32> to vector<11x66xbf16>
    %c3_115 = arith.constant 3 : index
    %c0_116 = arith.constant 0 : index
    %c0_117 = arith.constant 0 : index
    %129 = vector.load %arg7[%c3_115, %c0_116, %c0_117] : memref<6x66x88xbf16, #tpu.memory_space<vmem>>, vector<1x66x88xbf16>
    %130 = vector.shape_cast %129 : vector<1x66x88xbf16> to vector<66x88xbf16>
    %cst_118 = arith.constant dense<0.000000e+00> : vector<11x88xf32>
    %131 = tpu.matmul %128, %130, %cst_118 {dimension_numbers = #tpu.dot_dimension_numbers<[1], [0], [0], [1], [0, 0, 1, 1], [], []>} : vector<11x66xbf16>, vector<66x88xbf16>, vector<11x88xf32> -> vector<11x88xf32>
    %132 = arith.addf %125, %131 : vector<11x88xf32>
    %c0_119 = arith.constant 0 : index
    %c1_120 = arith.constant 1 : index
    %c0_121 = arith.constant 0 : index
    %133 = vector.load %arg2[%c0_119, %c1_120, %c0_121] : memref<1x12x144xf32, #tpu.memory_space<vmem>>, vector<1x11x66xf32>
    %134 = vector.shape_cast %133 : vector<1x11x66xf32> to vector<11x66xf32>
    %135 = arith.truncf %134 : vector<11x66xf32> to vector<11x66xbf16>
    %c4_122 = arith.constant 4 : index
    %c0_123 = arith.constant 0 : index
    %c0_124 = arith.constant 0 : index
    %136 = vector.load %arg7[%c4_122, %c0_123, %c0_124] : memref<6x66x88xbf16, #tpu.memory_space<vmem>>, vector<1x66x88xbf16>
    %137 = vector.shape_cast %136 : vector<1x66x88xbf16> to vector<66x88xbf16>
    %cst_125 = arith.constant dense<0.000000e+00> : vector<11x88xf32>
    %138 = tpu.matmul %135, %137, %cst_125 {dimension_numbers = #tpu.dot_dimension_numbers<[1], [0], [0], [1], [0, 0, 1, 1], [], []>} : vector<11x66xbf16>, vector<66x88xbf16>, vector<11x88xf32> -> vector<11x88xf32>
    %139 = arith.addf %132, %138 : vector<11x88xf32>
    %c0_126 = arith.constant 0 : index
    %c1_127 = arith.constant 1 : index
    %c6_128 = arith.constant 6 : index
    %140 = vector.load %arg2[%c0_126, %c1_127, %c6_128] : memref<1x12x144xf32, #tpu.memory_space<vmem>>, vector<1x11x66xf32>
    %141 = vector.shape_cast %140 : vector<1x11x66xf32> to vector<11x66xf32>
    %142 = arith.truncf %141 : vector<11x66xf32> to vector<11x66xbf16>
    %c5_129 = arith.constant 5 : index
    %c0_130 = arith.constant 0 : index
    %c0_131 = arith.constant 0 : index
    %143 = vector.load %arg7[%c5_129, %c0_130, %c0_131] : memref<6x66x88xbf16, #tpu.memory_space<vmem>>, vector<1x66x88xbf16>
    %144 = vector.shape_cast %143 : vector<1x66x88xbf16> to vector<66x88xbf16>
    %cst_132 = arith.constant dense<0.000000e+00> : vector<11x88xf32>
    %145 = tpu.matmul %142, %144, %cst_132 {dimension_numbers = #tpu.dot_dimension_numbers<[1], [0], [0], [1], [0, 0, 1, 1], [], []>} : vector<11x66xbf16>, vector<66x88xbf16>, vector<11x88xf32> -> vector<11x88xf32>
    %146 = arith.addf %139, %145 : vector<11x88xf32>
    %c0_133 = arith.constant 0 : index
    %c0_134 = arith.constant 0 : index
    %147 = vector.load %arg8[%c0_133, %c0_134] : memref<1x88xf32, #tpu.memory_space<vmem>>, vector<1x88xf32>
    %148 = vector.broadcast %147 : vector<1x88xf32> to vector<11x88xf32>
    %149 = arith.addf %146, %148 : vector<11x88xf32>
    %cst_135 = arith.constant 0.000000e+00 : f32
    %150 = vector.broadcast %cst_135 : f32 to vector<11x88xf32>
    %151 = arith.maximumf %149, %150 : vector<11x88xf32>
    %c0_136 = arith.constant 0 : index
    %c0_137 = arith.constant 0 : index
    %152 = vector.load %arg13[%c0_136, %c0_137] : memref<11x88xf32, #tpu.memory_space<vmem>>, vector<11x88xf32>
    tpu.vector_store %arg13[%c0_136, %c0_137], %151 {strides = array<i32>} : memref<11x88xf32, #tpu.memory_space<vmem>>, vector<11x88xf32>,
    %c0_138 = arith.constant 0 : index
    %c0_139 = arith.constant 0 : index
    %153 = vector.load %arg13[%c0_138, %c0_139] : memref<11x88xf32, #tpu.memory_space<vmem>>, vector<9x72xf32>
    %154 = arith.truncf %153 : vector<9x72xf32> to vector<9x72xbf16>
    %c0_140 = arith.constant 0 : index
    %c0_141 = arith.constant 0 : index
    %c0_142 = arith.constant 0 : index
    %155 = vector.load %arg9[%c0_140, %c0_141, %c0_142] : memref<9x72x144xbf16, #tpu.memory_space<vmem>>, vector<1x72x144xbf16>
    %156 = vector.shape_cast %155 : vector<1x72x144xbf16> to vector<72x144xbf16>
    %cst_143 = arith.constant dense<0.000000e+00> : vector<9x144xf32>
    %157 = tpu.matmul %154, %156, %cst_143 {dimension_numbers = #tpu.dot_dimension_numbers<[1], [0], [0], [1], [0, 0, 1, 1], [], []>} : vector<9x72xbf16>, vector<72x144xbf16>, vector<9x144xf32> -> vector<9x144xf32>
    %c0_144 = arith.constant 0 : index
    %c8_145 = arith.constant 8 : index
    %158 = vector.load %arg13[%c0_144, %c8_145] : memref<11x88xf32, #tpu.memory_space<vmem>>, vector<9x72xf32>
    %159 = arith.truncf %158 : vector<9x72xf32> to vector<9x72xbf16>
    %c1_146 = arith.constant 1 : index
    %c0_147 = arith.constant 0 : index
    %c0_148 = arith.constant 0 : index
    %160 = vector.load %arg9[%c1_146, %c0_147, %c0_148] : memref<9x72x144xbf16, #tpu.memory_space<vmem>>, vector<1x72x144xbf16>
    %161 = vector.shape_cast %160 : vector<1x72x144xbf16> to vector<72x144xbf16>
    %cst_149 = arith.constant dense<0.000000e+00> : vector<9x144xf32>
    %162 = tpu.matmul %159, %161, %cst_149 {dimension_numbers = #tpu.dot_dimension_numbers<[1], [0], [0], [1], [0, 0, 1, 1], [], []>} : vector<9x72xbf16>, vector<72x144xbf16>, vector<9x144xf32> -> vector<9x144xf32>
    %163 = arith.addf %157, %162 : vector<9x144xf32>
    %c0_150 = arith.constant 0 : index
    %c16_151 = arith.constant 16 : index
    %164 = vector.load %arg13[%c0_150, %c16_151] : memref<11x88xf32, #tpu.memory_space<vmem>>, vector<9x72xf32>
    %165 = arith.truncf %164 : vector<9x72xf32> to vector<9x72xbf16>
    %c2_152 = arith.constant 2 : index
    %c0_153 = arith.constant 0 : index
    %c0_154 = arith.constant 0 : index
    %166 = vector.load %arg9[%c2_152, %c0_153, %c0_154] : memref<9x72x144xbf16, #tpu.memory_space<vmem>>, vector<1x72x144xbf16>
    %167 = vector.shape_cast %166 : vector<1x72x144xbf16> to vector<72x144xbf16>
    %cst_155 = arith.constant dense<0.000000e+00> : vector<9x144xf32>
    %168 = tpu.matmul %165, %167, %cst_155 {dimension_numbers = #tpu.dot_dimension_numbers<[1], [0], [0], [1], [0, 0, 1, 1], [], []>} : vector<9x72xbf16>, vector<72x144xbf16>, vector<9x144xf32> -> vector<9x144xf32>
    %169 = arith.addf %163, %168 : vector<9x144xf32>
    %c1_156 = arith.constant 1 : index
    %c0_157 = arith.constant 0 : index
    %170 = vector.load %arg13[%c1_156, %c0_157] : memref<11x88xf32, #tpu.memory_space<vmem>>, vector<9x72xf32>
    %171 = arith.truncf %170 : vector<9x72xf32> to vector<9x72xbf16>
    %c3_158 = arith.constant 3 : index
    %c0_159 = arith.constant 0 : index
    %c0_160 = arith.constant 0 : index
    %172 = vector.load %arg9[%c3_158, %c0_159, %c0_160] : memref<9x72x144xbf16, #tpu.memory_space<vmem>>, vector<1x72x144xbf16>
    %173 = vector.shape_cast %172 : vector<1x72x144xbf16> to vector<72x144xbf16>
    %cst_161 = arith.constant dense<0.000000e+00> : vector<9x144xf32>
    %174 = tpu.matmul %171, %173, %cst_161 {dimension_numbers = #tpu.dot_dimension_numbers<[1], [0], [0], [1], [0, 0, 1, 1], [], []>} : vector<9x72xbf16>, vector<72x144xbf16>, vector<9x144xf32> -> vector<9x144xf32>
    %175 = arith.addf %169, %174 : vector<9x144xf32>
    %c1_162 = arith.constant 1 : index
    %c8_163 = arith.constant 8 : index
    %176 = vector.load %arg13[%c1_162, %c8_163] : memref<11x88xf32, #tpu.memory_space<vmem>>, vector<9x72xf32>
    %177 = arith.truncf %176 : vector<9x72xf32> to vector<9x72xbf16>
    %c4_164 = arith.constant 4 : index
    %c0_165 = arith.constant 0 : index
    %c0_166 = arith.constant 0 : index
    %178 = vector.load %arg9[%c4_164, %c0_165, %c0_166] : memref<9x72x144xbf16, #tpu.memory_space<vmem>>, vector<1x72x144xbf16>
    %179 = vector.shape_cast %178 : vector<1x72x144xbf16> to vector<72x144xbf16>
    %cst_167 = arith.constant dense<0.000000e+00> : vector<9x144xf32>
    %180 = tpu.matmul %177, %179, %cst_167 {dimension_numbers = #tpu.dot_dimension_numbers<[1], [0], [0], [1], [0, 0, 1, 1], [], []>} : vector<9x72xbf16>, vector<72x144xbf16>, vector<9x144xf32> -> vector<9x144xf32>
    %181 = arith.addf %175, %180 : vector<9x144xf32>
    %c1_168 = arith.constant 1 : index
    %c16_169 = arith.constant 16 : index
    %182 = vector.load %arg13[%c1_168, %c16_169] : memref<11x88xf32, #tpu.memory_space<vmem>>, vector<9x72xf32>
    %183 = arith.truncf %182 : vector<9x72xf32> to vector<9x72xbf16>
    %c5_170 = arith.constant 5 : index
    %c0_171 = arith.constant 0 : index
    %c0_172 = arith.constant 0 : index
    %184 = vector.load %arg9[%c5_170, %c0_171, %c0_172] : memref<9x72x144xbf16, #tpu.memory_space<vmem>>, vector<1x72x144xbf16>
    %185 = vector.shape_cast %184 : vector<1x72x144xbf16> to vector<72x144xbf16>
    %cst_173 = arith.constant dense<0.000000e+00> : vector<9x144xf32>
    %186 = tpu.matmul %183, %185, %cst_173 {dimension_numbers = #tpu.dot_dimension_numbers<[1], [0], [0], [1], [0, 0, 1, 1], [], []>} : vector<9x72xbf16>, vector<72x144xbf16>, vector<9x144xf32> -> vector<9x144xf32>
    %187 = arith.addf %181, %186 : vector<9x144xf32>
    %c2_174 = arith.constant 2 : index
    %c0_175 = arith.constant 0 : index
    %188 = vector.load %arg13[%c2_174, %c0_175] : memref<11x88xf32, #tpu.memory_space<vmem>>, vector<9x72xf32>
    %189 = arith.truncf %188 : vector<9x72xf32> to vector<9x72xbf16>
    %c6_176 = arith.constant 6 : index
    %c0_177 = arith.constant 0 : index
    %c0_178 = arith.constant 0 : index
    %190 = vector.load %arg9[%c6_176, %c0_177, %c0_178] : memref<9x72x144xbf16, #tpu.memory_space<vmem>>, vector<1x72x144xbf16>
    %191 = vector.shape_cast %190 : vector<1x72x144xbf16> to vector<72x144xbf16>
    %cst_179 = arith.constant dense<0.000000e+00> : vector<9x144xf32>
    %192 = tpu.matmul %189, %191, %cst_179 {dimension_numbers = #tpu.dot_dimension_numbers<[1], [0], [0], [1], [0, 0, 1, 1], [], []>} : vector<9x72xbf16>, vector<72x144xbf16>, vector<9x144xf32> -> vector<9x144xf32>
    %193 = arith.addf %187, %192 : vector<9x144xf32>
    %c2_180 = arith.constant 2 : index
    %c8_181 = arith.constant 8 : index
    %194 = vector.load %arg13[%c2_180, %c8_181] : memref<11x88xf32, #tpu.memory_space<vmem>>, vector<9x72xf32>
    %195 = arith.truncf %194 : vector<9x72xf32> to vector<9x72xbf16>
    %c7_182 = arith.constant 7 : index
    %c0_183 = arith.constant 0 : index
    %c0_184 = arith.constant 0 : index
    %196 = vector.load %arg9[%c7_182, %c0_183, %c0_184] : memref<9x72x144xbf16, #tpu.memory_space<vmem>>, vector<1x72x144xbf16>
    %197 = vector.shape_cast %196 : vector<1x72x144xbf16> to vector<72x144xbf16>
    %cst_185 = arith.constant dense<0.000000e+00> : vector<9x144xf32>
    %198 = tpu.matmul %195, %197, %cst_185 {dimension_numbers = #tpu.dot_dimension_numbers<[1], [0], [0], [1], [0, 0, 1, 1], [], []>} : vector<9x72xbf16>, vector<72x144xbf16>, vector<9x144xf32> -> vector<9x144xf32>
    %199 = arith.addf %193, %198 : vector<9x144xf32>
    %c2_186 = arith.constant 2 : index
    %c16_187 = arith.constant 16 : index
    %200 = vector.load %arg13[%c2_186, %c16_187] : memref<11x88xf32, #tpu.memory_space<vmem>>, vector<9x72xf32>
    %201 = arith.truncf %200 : vector<9x72xf32> to vector<9x72xbf16>
    %c8_188 = arith.constant 8 : index
    %c0_189 = arith.constant 0 : index
    %c0_190 = arith.constant 0 : index
    %202 = vector.load %arg9[%c8_188, %c0_189, %c0_190] : memref<9x72x144xbf16, #tpu.memory_space<vmem>>, vector<1x72x144xbf16>
    %203 = vector.shape_cast %202 : vector<1x72x144xbf16> to vector<72x144xbf16>
    %cst_191 = arith.constant dense<0.000000e+00> : vector<9x144xf32>
    %204 = tpu.matmul %201, %203, %cst_191 {dimension_numbers = #tpu.dot_dimension_numbers<[1], [0], [0], [1], [0, 0, 1, 1], [], []>} : vector<9x72xbf16>, vector<72x144xbf16>, vector<9x144xf32> -> vector<9x144xf32>
    %205 = arith.addf %199, %204 : vector<9x144xf32>
    %c0_192 = arith.constant 0 : index
    %c0_193 = arith.constant 0 : index
    %206 = vector.load %arg10[%c0_192, %c0_193] : memref<1x144xf32, #tpu.memory_space<vmem>>, vector<1x144xf32>
    %207 = vector.broadcast %206 : vector<1x144xf32> to vector<9x144xf32>
    %208 = arith.addf %205, %207 : vector<9x144xf32>
    %cst_194 = arith.constant 0.000000e+00 : f32
    %209 = vector.broadcast %cst_194 : f32 to vector<9x144xf32>
    %210 = arith.maximumf %208, %209 : vector<9x144xf32>
    %c0_195 = arith.constant 0 : index
    %c0_196 = arith.constant 0 : index
    %211 = vector.load %arg15[%c0_195, %c0_196] : memref<9x144xf32, #tpu.memory_space<vmem>>, vector<9x144xf32>
    tpu.vector_store %arg15[%c0_195, %c0_196], %210 {strides = array<i32>} : memref<9x144xf32, #tpu.memory_space<vmem>>, vector<9x144xf32>,
    %c0_197 = arith.constant 0 : index
    %c0_198 = arith.constant 0 : index
    %212 = vector.load %arg14[%c0_197, %c0_198] : memref<5x80xf32, #tpu.memory_space<vmem>>, vector<5x80xf32>
    %213 = tpu.iota {dimensions = array<i32: 0>} : vector<5x5xi32>
    %214 = tpu.iota {dimensions = array<i32: 1>} : vector<5x5xi32>
    %cst_199 = arith.constant 0.000000e+00 : f32
    %215 = vector.broadcast %cst_199 : f32 to vector<5x5xf32>
    %c0_200 = arith.constant 0 : index
    %c0_201 = arith.constant 0 : index
    %216 = vector.load %arg15[%c0_200, %c0_201] : memref<9x144xf32, #tpu.memory_space<vmem>>, vector<5x80xf32>
    %217 = arith.mulf %216, %212 : vector<5x80xf32>
    %cst_202 = arith.constant dense<0.000000e+00> : vector<5xf32>
    %218 = vector.multi_reduction <add>, %217, %cst_202 [1] : vector<5x80xf32> to vector<5xf32>
    %219 = vector.shape_cast %218 : vector<5xf32> to vector<5x1xf32>
    %cst_203 = arith.constant dense<0.000000e+00> : vector<1xf32>
    %220 = vector.multi_reduction <add>, %219, %cst_203 [0] : vector<5x1xf32> to vector<1xf32>
    %221 = vector.shape_cast %220 : vector<1xf32> to vector<1x1xf32>
    %c0_i32 = arith.constant 0 : i32
    %222 = vector.broadcast %c0_i32 : i32 to vector<5x5xi32>
    %223 = arith.cmpi eq, %213, %222 : vector<5x5xi32>
    %c0_i32_204 = arith.constant 0 : i32
    %224 = vector.broadcast %c0_i32_204 : i32 to vector<5x5xi32>
    %225 = arith.cmpi eq, %214, %224 : vector<5x5xi32>
    %226 = arith.andi %223, %225 : vector<5x5xi1>
    %227 = arith.extui %226 : vector<5x5xi1> to vector<5x5xi32>
    %228 = arith.sitofp %227 : vector<5x5xi32> to vector<5x5xf32>
    %229 = vector.broadcast %221 : vector<1x1xf32> to vector<5x5xf32>
    %230 = arith.mulf %229, %228 : vector<5x5xf32>
    %231 = arith.addf %215, %230 : vector<5x5xf32>
    %c0_205 = arith.constant 0 : index
    %c16_206 = arith.constant 16 : index
    %232 = vector.load %arg15[%c0_205, %c16_206] : memref<9x144xf32, #tpu.memory_space<vmem>>, vector<5x80xf32>
    %233 = arith.mulf %232, %212 : vector<5x80xf32>
    %cst_207 = arith.constant dense<0.000000e+00> : vector<5xf32>
    %234 = vector.multi_reduction <add>, %233, %cst_207 [1] : vector<5x80xf32> to vector<5xf32>
    %235 = vector.shape_cast %234 : vector<5xf32> to vector<5x1xf32>
    %cst_208 = arith.constant dense<0.000000e+00> : vector<1xf32>
    %236 = vector.multi_reduction <add>, %235, %cst_208 [0] : vector<5x1xf32> to vector<1xf32>
    %237 = vector.shape_cast %236 : vector<1xf32> to vector<1x1xf32>
    %c0_i32_209 = arith.constant 0 : i32
    %238 = vector.broadcast %c0_i32_209 : i32 to vector<5x5xi32>
    %239 = arith.cmpi eq, %213, %238 : vector<5x5xi32>
    %c1_i32 = arith.constant 1 : i32
    %240 = vector.broadcast %c1_i32 : i32 to vector<5x5xi32>
    %241 = arith.cmpi eq, %214, %240 : vector<5x5xi32>
    %242 = arith.andi %239, %241 : vector<5x5xi1>
    %243 = arith.extui %242 : vector<5x5xi1> to vector<5x5xi32>
    %244 = arith.sitofp %243 : vector<5x5xi32> to vector<5x5xf32>
    %245 = vector.broadcast %237 : vector<1x1xf32> to vector<5x5xf32>
    %246 = arith.mulf %245, %244 : vector<5x5xf32>
    %247 = arith.addf %231, %246 : vector<5x5xf32>
    %c0_210 = arith.constant 0 : index
    %c32 = arith.constant 32 : index
    %248 = vector.load %arg15[%c0_210, %c32] : memref<9x144xf32, #tpu.memory_space<vmem>>, vector<5x80xf32>
    %249 = arith.mulf %248, %212 : vector<5x80xf32>
    %cst_211 = arith.constant dense<0.000000e+00> : vector<5xf32>
    %250 = vector.multi_reduction <add>, %249, %cst_211 [1] : vector<5x80xf32> to vector<5xf32>
    %251 = vector.shape_cast %250 : vector<5xf32> to vector<5x1xf32>
    %cst_212 = arith.constant dense<0.000000e+00> : vector<1xf32>
    %252 = vector.multi_reduction <add>, %251, %cst_212 [0] : vector<5x1xf32> to vector<1xf32>
    %253 = vector.shape_cast %252 : vector<1xf32> to vector<1x1xf32>
    %c0_i32_213 = arith.constant 0 : i32
    %254 = vector.broadcast %c0_i32_213 : i32 to vector<5x5xi32>
    %255 = arith.cmpi eq, %213, %254 : vector<5x5xi32>
    %c2_i32 = arith.constant 2 : i32
    %256 = vector.broadcast %c2_i32 : i32 to vector<5x5xi32>
    %257 = arith.cmpi eq, %214, %256 : vector<5x5xi32>
    %258 = arith.andi %255, %257 : vector<5x5xi1>
    %259 = arith.extui %258 : vector<5x5xi1> to vector<5x5xi32>
    %260 = arith.sitofp %259 : vector<5x5xi32> to vector<5x5xf32>
    %261 = vector.broadcast %253 : vector<1x1xf32> to vector<5x5xf32>
    %262 = arith.mulf %261, %260 : vector<5x5xf32>
    %263 = arith.addf %247, %262 : vector<5x5xf32>
    %c0_214 = arith.constant 0 : index
    %c48_215 = arith.constant 48 : index
    %264 = vector.load %arg15[%c0_214, %c48_215] : memref<9x144xf32, #tpu.memory_space<vmem>>, vector<5x80xf32>
    %265 = arith.mulf %264, %212 : vector<5x80xf32>
    %cst_216 = arith.constant dense<0.000000e+00> : vector<5xf32>
    %266 = vector.multi_reduction <add>, %265, %cst_216 [1] : vector<5x80xf32> to vector<5xf32>
    %267 = vector.shape_cast %266 : vector<5xf32> to vector<5x1xf32>
    %cst_217 = arith.constant dense<0.000000e+00> : vector<1xf32>
    %268 = vector.multi_reduction <add>, %267, %cst_217 [0] : vector<5x1xf32> to vector<1xf32>
    %269 = vector.shape_cast %268 : vector<1xf32> to vector<1x1xf32>
    %c0_i32_218 = arith.constant 0 : i32
    %270 = vector.broadcast %c0_i32_218 : i32 to vector<5x5xi32>
    %271 = arith.cmpi eq, %213, %270 : vector<5x5xi32>
    %c3_i32 = arith.constant 3 : i32
    %272 = vector.broadcast %c3_i32 : i32 to vector<5x5xi32>
    %273 = arith.cmpi eq, %214, %272 : vector<5x5xi32>
    %274 = arith.andi %271, %273 : vector<5x5xi1>
    %275 = arith.extui %274 : vector<5x5xi1> to vector<5x5xi32>
    %276 = arith.sitofp %275 : vector<5x5xi32> to vector<5x5xf32>
    %277 = vector.broadcast %269 : vector<1x1xf32> to vector<5x5xf32>
    %278 = arith.mulf %277, %276 : vector<5x5xf32>
    %279 = arith.addf %263, %278 : vector<5x5xf32>
    %c0_219 = arith.constant 0 : index
    %c64 = arith.constant 64 : index
    %280 = vector.load %arg15[%c0_219, %c64] : memref<9x144xf32, #tpu.memory_space<vmem>>, vector<5x80xf32>
    %281 = arith.mulf %280, %212 : vector<5x80xf32>
    %cst_220 = arith.constant dense<0.000000e+00> : vector<5xf32>
    %282 = vector.multi_reduction <add>, %281, %cst_220 [1] : vector<5x80xf32> to vector<5xf32>
    %283 = vector.shape_cast %282 : vector<5xf32> to vector<5x1xf32>
    %cst_221 = arith.constant dense<0.000000e+00> : vector<1xf32>
    %284 = vector.multi_reduction <add>, %283, %cst_221 [0] : vector<5x1xf32> to vector<1xf32>
    %285 = vector.shape_cast %284 : vector<1xf32> to vector<1x1xf32>
    %c0_i32_222 = arith.constant 0 : i32
    %286 = vector.broadcast %c0_i32_222 : i32 to vector<5x5xi32>
    %287 = arith.cmpi eq, %213, %286 : vector<5x5xi32>
    %c4_i32 = arith.constant 4 : i32
    %288 = vector.broadcast %c4_i32 : i32 to vector<5x5xi32>
    %289 = arith.cmpi eq, %214, %288 : vector<5x5xi32>
    %290 = arith.andi %287, %289 : vector<5x5xi1>
    %291 = arith.extui %290 : vector<5x5xi1> to vector<5x5xi32>
    %292 = arith.sitofp %291 : vector<5x5xi32> to vector<5x5xf32>
    %293 = vector.broadcast %285 : vector<1x1xf32> to vector<5x5xf32>
    %294 = arith.mulf %293, %292 : vector<5x5xf32>
    %295 = arith.addf %279, %294 : vector<5x5xf32>
    %c1_223 = arith.constant 1 : index
    %c0_224 = arith.constant 0 : index
    %296 = vector.load %arg15[%c1_223, %c0_224] : memref<9x144xf32, #tpu.memory_space<vmem>>, vector<5x80xf32>
    %297 = arith.mulf %296, %212 : vector<5x80xf32>
    %cst_225 = arith.constant dense<0.000000e+00> : vector<5xf32>
    %298 = vector.multi_reduction <add>, %297, %cst_225 [1] : vector<5x80xf32> to vector<5xf32>
    %299 = vector.shape_cast %298 : vector<5xf32> to vector<5x1xf32>
    %cst_226 = arith.constant dense<0.000000e+00> : vector<1xf32>
    %300 = vector.multi_reduction <add>, %299, %cst_226 [0] : vector<5x1xf32> to vector<1xf32>
    %301 = vector.shape_cast %300 : vector<1xf32> to vector<1x1xf32>
    %c1_i32_227 = arith.constant 1 : i32
    %302 = vector.broadcast %c1_i32_227 : i32 to vector<5x5xi32>
    %303 = arith.cmpi eq, %213, %302 : vector<5x5xi32>
    %c0_i32_228 = arith.constant 0 : i32
    %304 = vector.broadcast %c0_i32_228 : i32 to vector<5x5xi32>
    %305 = arith.cmpi eq, %214, %304 : vector<5x5xi32>
    %306 = arith.andi %303, %305 : vector<5x5xi1>
    %307 = arith.extui %306 : vector<5x5xi1> to vector<5x5xi32>
    %308 = arith.sitofp %307 : vector<5x5xi32> to vector<5x5xf32>
    %309 = vector.broadcast %301 : vector<1x1xf32> to vector<5x5xf32>
    %310 = arith.mulf %309, %308 : vector<5x5xf32>
    %311 = arith.addf %295, %310 : vector<5x5xf32>
    %c1_229 = arith.constant 1 : index
    %c16_230 = arith.constant 16 : index
    %312 = vector.load %arg15[%c1_229, %c16_230] : memref<9x144xf32, #tpu.memory_space<vmem>>, vector<5x80xf32>
    %313 = arith.mulf %312, %212 : vector<5x80xf32>
    %cst_231 = arith.constant dense<0.000000e+00> : vector<5xf32>
    %314 = vector.multi_reduction <add>, %313, %cst_231 [1] : vector<5x80xf32> to vector<5xf32>
    %315 = vector.shape_cast %314 : vector<5xf32> to vector<5x1xf32>
    %cst_232 = arith.constant dense<0.000000e+00> : vector<1xf32>
    %316 = vector.multi_reduction <add>, %315, %cst_232 [0] : vector<5x1xf32> to vector<1xf32>
    %317 = vector.shape_cast %316 : vector<1xf32> to vector<1x1xf32>
    %c1_i32_233 = arith.constant 1 : i32
    %318 = vector.broadcast %c1_i32_233 : i32 to vector<5x5xi32>
    %319 = arith.cmpi eq, %213, %318 : vector<5x5xi32>
    %c1_i32_234 = arith.constant 1 : i32
    %320 = vector.broadcast %c1_i32_234 : i32 to vector<5x5xi32>
    %321 = arith.cmpi eq, %214, %320 : vector<5x5xi32>
    %322 = arith.andi %319, %321 : vector<5x5xi1>
    %323 = arith.extui %322 : vector<5x5xi1> to vector<5x5xi32>
    %324 = arith.sitofp %323 : vector<5x5xi32> to vector<5x5xf32>
    %325 = vector.broadcast %317 : vector<1x1xf32> to vector<5x5xf32>
    %326 = arith.mulf %325, %324 : vector<5x5xf32>
    %327 = arith.addf %311, %326 : vector<5x5xf32>
    %c1_235 = arith.constant 1 : index
    %c32_236 = arith.constant 32 : index
    %328 = vector.load %arg15[%c1_235, %c32_236] : memref<9x144xf32, #tpu.memory_space<vmem>>, vector<5x80xf32>
    %329 = arith.mulf %328, %212 : vector<5x80xf32>
    %cst_237 = arith.constant dense<0.000000e+00> : vector<5xf32>
    %330 = vector.multi_reduction <add>, %329, %cst_237 [1] : vector<5x80xf32> to vector<5xf32>
    %331 = vector.shape_cast %330 : vector<5xf32> to vector<5x1xf32>
    %cst_238 = arith.constant dense<0.000000e+00> : vector<1xf32>
    %332 = vector.multi_reduction <add>, %331, %cst_238 [0] : vector<5x1xf32> to vector<1xf32>
    %333 = vector.shape_cast %332 : vector<1xf32> to vector<1x1xf32>
    %c1_i32_239 = arith.constant 1 : i32
    %334 = vector.broadcast %c1_i32_239 : i32 to vector<5x5xi32>
    %335 = arith.cmpi eq, %213, %334 : vector<5x5xi32>
    %c2_i32_240 = arith.constant 2 : i32
    %336 = vector.broadcast %c2_i32_240 : i32 to vector<5x5xi32>
    %337 = arith.cmpi eq, %214, %336 : vector<5x5xi32>
    %338 = arith.andi %335, %337 : vector<5x5xi1>
    %339 = arith.extui %338 : vector<5x5xi1> to vector<5x5xi32>
    %340 = arith.sitofp %339 : vector<5x5xi32> to vector<5x5xf32>
    %341 = vector.broadcast %333 : vector<1x1xf32> to vector<5x5xf32>
    %342 = arith.mulf %341, %340 : vector<5x5xf32>
    %343 = arith.addf %327, %342 : vector<5x5xf32>
    %c1_241 = arith.constant 1 : index
    %c48_242 = arith.constant 48 : index
    %344 = vector.load %arg15[%c1_241, %c48_242] : memref<9x144xf32, #tpu.memory_space<vmem>>, vector<5x80xf32>
    %345 = arith.mulf %344, %212 : vector<5x80xf32>
    %cst_243 = arith.constant dense<0.000000e+00> : vector<5xf32>
    %346 = vector.multi_reduction <add>, %345, %cst_243 [1] : vector<5x80xf32> to vector<5xf32>
    %347 = vector.shape_cast %346 : vector<5xf32> to vector<5x1xf32>
    %cst_244 = arith.constant dense<0.000000e+00> : vector<1xf32>
    %348 = vector.multi_reduction <add>, %347, %cst_244 [0] : vector<5x1xf32> to vector<1xf32>
    %349 = vector.shape_cast %348 : vector<1xf32> to vector<1x1xf32>
    %c1_i32_245 = arith.constant 1 : i32
    %350 = vector.broadcast %c1_i32_245 : i32 to vector<5x5xi32>
    %351 = arith.cmpi eq, %213, %350 : vector<5x5xi32>
    %c3_i32_246 = arith.constant 3 : i32
    %352 = vector.broadcast %c3_i32_246 : i32 to vector<5x5xi32>
    %353 = arith.cmpi eq, %214, %352 : vector<5x5xi32>
    %354 = arith.andi %351, %353 : vector<5x5xi1>
    %355 = arith.extui %354 : vector<5x5xi1> to vector<5x5xi32>
    %356 = arith.sitofp %355 : vector<5x5xi32> to vector<5x5xf32>
    %357 = vector.broadcast %349 : vector<1x1xf32> to vector<5x5xf32>
    %358 = arith.mulf %357, %356 : vector<5x5xf32>
    %359 = arith.addf %343, %358 : vector<5x5xf32>
    %c1_247 = arith.constant 1 : index
    %c64_248 = arith.constant 64 : index
    %360 = vector.load %arg15[%c1_247, %c64_248] : memref<9x144xf32, #tpu.memory_space<vmem>>, vector<5x80xf32>
    %361 = arith.mulf %360, %212 : vector<5x80xf32>
    %cst_249 = arith.constant dense<0.000000e+00> : vector<5xf32>
    %362 = vector.multi_reduction <add>, %361, %cst_249 [1] : vector<5x80xf32> to vector<5xf32>
    %363 = vector.shape_cast %362 : vector<5xf32> to vector<5x1xf32>
    %cst_250 = arith.constant dense<0.000000e+00> : vector<1xf32>
    %364 = vector.multi_reduction <add>, %363, %cst_250 [0] : vector<5x1xf32> to vector<1xf32>
    %365 = vector.shape_cast %364 : vector<1xf32> to vector<1x1xf32>
    %c1_i32_251 = arith.constant 1 : i32
    %366 = vector.broadcast %c1_i32_251 : i32 to vector<5x5xi32>
    %367 = arith.cmpi eq, %213, %366 : vector<5x5xi32>
    %c4_i32_252 = arith.constant 4 : i32
    %368 = vector.broadcast %c4_i32_252 : i32 to vector<5x5xi32>
    %369 = arith.cmpi eq, %214, %368 : vector<5x5xi32>
    %370 = arith.andi %367, %369 : vector<5x5xi1>
    %371 = arith.extui %370 : vector<5x5xi1> to vector<5x5xi32>
    %372 = arith.sitofp %371 : vector<5x5xi32> to vector<5x5xf32>
    %373 = vector.broadcast %365 : vector<1x1xf32> to vector<5x5xf32>
    %374 = arith.mulf %373, %372 : vector<5x5xf32>
    %375 = arith.addf %359, %374 : vector<5x5xf32>
    %c2_253 = arith.constant 2 : index
    %c0_254 = arith.constant 0 : index
    %376 = vector.load %arg15[%c2_253, %c0_254] : memref<9x144xf32, #tpu.memory_space<vmem>>, vector<5x80xf32>
    %377 = arith.mulf %376, %212 : vector<5x80xf32>
    %cst_255 = arith.constant dense<0.000000e+00> : vector<5xf32>
    %378 = vector.multi_reduction <add>, %377, %cst_255 [1] : vector<5x80xf32> to vector<5xf32>
    %379 = vector.shape_cast %378 : vector<5xf32> to vector<5x1xf32>
    %cst_256 = arith.constant dense<0.000000e+00> : vector<1xf32>
    %380 = vector.multi_reduction <add>, %379, %cst_256 [0] : vector<5x1xf32> to vector<1xf32>
    %381 = vector.shape_cast %380 : vector<1xf32> to vector<1x1xf32>
    %c2_i32_257 = arith.constant 2 : i32
    %382 = vector.broadcast %c2_i32_257 : i32 to vector<5x5xi32>
    %383 = arith.cmpi eq, %213, %382 : vector<5x5xi32>
    %c0_i32_258 = arith.constant 0 : i32
    %384 = vector.broadcast %c0_i32_258 : i32 to vector<5x5xi32>
    %385 = arith.cmpi eq, %214, %384 : vector<5x5xi32>
    %386 = arith.andi %383, %385 : vector<5x5xi1>
    %387 = arith.extui %386 : vector<5x5xi1> to vector<5x5xi32>
    %388 = arith.sitofp %387 : vector<5x5xi32> to vector<5x5xf32>
    %389 = vector.broadcast %381 : vector<1x1xf32> to vector<5x5xf32>
    %390 = arith.mulf %389, %388 : vector<5x5xf32>
    %391 = arith.addf %375, %390 : vector<5x5xf32>
    %c2_259 = arith.constant 2 : index
    %c16_260 = arith.constant 16 : index
    %392 = vector.load %arg15[%c2_259, %c16_260] : memref<9x144xf32, #tpu.memory_space<vmem>>, vector<5x80xf32>
    %393 = arith.mulf %392, %212 : vector<5x80xf32>
    %cst_261 = arith.constant dense<0.000000e+00> : vector<5xf32>
    %394 = vector.multi_reduction <add>, %393, %cst_261 [1] : vector<5x80xf32> to vector<5xf32>
    %395 = vector.shape_cast %394 : vector<5xf32> to vector<5x1xf32>
    %cst_262 = arith.constant dense<0.000000e+00> : vector<1xf32>
    %396 = vector.multi_reduction <add>, %395, %cst_262 [0] : vector<5x1xf32> to vector<1xf32>
    %397 = vector.shape_cast %396 : vector<1xf32> to vector<1x1xf32>
    %c2_i32_263 = arith.constant 2 : i32
    %398 = vector.broadcast %c2_i32_263 : i32 to vector<5x5xi32>
    %399 = arith.cmpi eq, %213, %398 : vector<5x5xi32>
    %c1_i32_264 = arith.constant 1 : i32
    %400 = vector.broadcast %c1_i32_264 : i32 to vector<5x5xi32>
    %401 = arith.cmpi eq, %214, %400 : vector<5x5xi32>
    %402 = arith.andi %399, %401 : vector<5x5xi1>
    %403 = arith.extui %402 : vector<5x5xi1> to vector<5x5xi32>
    %404 = arith.sitofp %403 : vector<5x5xi32> to vector<5x5xf32>
    %405 = vector.broadcast %397 : vector<1x1xf32> to vector<5x5xf32>
    %406 = arith.mulf %405, %404 : vector<5x5xf32>
    %407 = arith.addf %391, %406 : vector<5x5xf32>
    %c2_265 = arith.constant 2 : index
    %c32_266 = arith.constant 32 : index
    %408 = vector.load %arg15[%c2_265, %c32_266] : memref<9x144xf32, #tpu.memory_space<vmem>>, vector<5x80xf32>
    %409 = arith.mulf %408, %212 : vector<5x80xf32>
    %cst_267 = arith.constant dense<0.000000e+00> : vector<5xf32>
    %410 = vector.multi_reduction <add>, %409, %cst_267 [1] : vector<5x80xf32> to vector<5xf32>
    %411 = vector.shape_cast %410 : vector<5xf32> to vector<5x1xf32>
    %cst_268 = arith.constant dense<0.000000e+00> : vector<1xf32>
    %412 = vector.multi_reduction <add>, %411, %cst_268 [0] : vector<5x1xf32> to vector<1xf32>
    %413 = vector.shape_cast %412 : vector<1xf32> to vector<1x1xf32>
    %c2_i32_269 = arith.constant 2 : i32
    %414 = vector.broadcast %c2_i32_269 : i32 to vector<5x5xi32>
    %415 = arith.cmpi eq, %213, %414 : vector<5x5xi32>
    %c2_i32_270 = arith.constant 2 : i32
    %416 = vector.broadcast %c2_i32_270 : i32 to vector<5x5xi32>
    %417 = arith.cmpi eq, %214, %416 : vector<5x5xi32>
    %418 = arith.andi %415, %417 : vector<5x5xi1>
    %419 = arith.extui %418 : vector<5x5xi1> to vector<5x5xi32>
    %420 = arith.sitofp %419 : vector<5x5xi32> to vector<5x5xf32>
    %421 = vector.broadcast %413 : vector<1x1xf32> to vector<5x5xf32>
    %422 = arith.mulf %421, %420 : vector<5x5xf32>
    %423 = arith.addf %407, %422 : vector<5x5xf32>
    %c2_271 = arith.constant 2 : index
    %c48_272 = arith.constant 48 : index
    %424 = vector.load %arg15[%c2_271, %c48_272] : memref<9x144xf32, #tpu.memory_space<vmem>>, vector<5x80xf32>
    %425 = arith.mulf %424, %212 : vector<5x80xf32>
    %cst_273 = arith.constant dense<0.000000e+00> : vector<5xf32>
    %426 = vector.multi_reduction <add>, %425, %cst_273 [1] : vector<5x80xf32> to vector<5xf32>
    %427 = vector.shape_cast %426 : vector<5xf32> to vector<5x1xf32>
    %cst_274 = arith.constant dense<0.000000e+00> : vector<1xf32>
    %428 = vector.multi_reduction <add>, %427, %cst_274 [0] : vector<5x1xf32> to vector<1xf32>
    %429 = vector.shape_cast %428 : vector<1xf32> to vector<1x1xf32>
    %c2_i32_275 = arith.constant 2 : i32
    %430 = vector.broadcast %c2_i32_275 : i32 to vector<5x5xi32>
    %431 = arith.cmpi eq, %213, %430 : vector<5x5xi32>
    %c3_i32_276 = arith.constant 3 : i32
    %432 = vector.broadcast %c3_i32_276 : i32 to vector<5x5xi32>
    %433 = arith.cmpi eq, %214, %432 : vector<5x5xi32>
    %434 = arith.andi %431, %433 : vector<5x5xi1>
    %435 = arith.extui %434 : vector<5x5xi1> to vector<5x5xi32>
    %436 = arith.sitofp %435 : vector<5x5xi32> to vector<5x5xf32>
    %437 = vector.broadcast %429 : vector<1x1xf32> to vector<5x5xf32>
    %438 = arith.mulf %437, %436 : vector<5x5xf32>
    %439 = arith.addf %423, %438 : vector<5x5xf32>
    %c2_277 = arith.constant 2 : index
    %c64_278 = arith.constant 64 : index
    %440 = vector.load %arg15[%c2_277, %c64_278] : memref<9x144xf32, #tpu.memory_space<vmem>>, vector<5x80xf32>
    %441 = arith.mulf %440, %212 : vector<5x80xf32>
    %cst_279 = arith.constant dense<0.000000e+00> : vector<5xf32>
    %442 = vector.multi_reduction <add>, %441, %cst_279 [1] : vector<5x80xf32> to vector<5xf32>
    %443 = vector.shape_cast %442 : vector<5xf32> to vector<5x1xf32>
    %cst_280 = arith.constant dense<0.000000e+00> : vector<1xf32>
    %444 = vector.multi_reduction <add>, %443, %cst_280 [0] : vector<5x1xf32> to vector<1xf32>
    %445 = vector.shape_cast %444 : vector<1xf32> to vector<1x1xf32>
    %c2_i32_281 = arith.constant 2 : i32
    %446 = vector.broadcast %c2_i32_281 : i32 to vector<5x5xi32>
    %447 = arith.cmpi eq, %213, %446 : vector<5x5xi32>
    %c4_i32_282 = arith.constant 4 : i32
    %448 = vector.broadcast %c4_i32_282 : i32 to vector<5x5xi32>
    %449 = arith.cmpi eq, %214, %448 : vector<5x5xi32>
    %450 = arith.andi %447, %449 : vector<5x5xi1>
    %451 = arith.extui %450 : vector<5x5xi1> to vector<5x5xi32>
    %452 = arith.sitofp %451 : vector<5x5xi32> to vector<5x5xf32>
    %453 = vector.broadcast %445 : vector<1x1xf32> to vector<5x5xf32>
    %454 = arith.mulf %453, %452 : vector<5x5xf32>
    %455 = arith.addf %439, %454 : vector<5x5xf32>
    %c3_283 = arith.constant 3 : index
    %c0_284 = arith.constant 0 : index
    %456 = vector.load %arg15[%c3_283, %c0_284] : memref<9x144xf32, #tpu.memory_space<vmem>>, vector<5x80xf32>
    %457 = arith.mulf %456, %212 : vector<5x80xf32>
    %cst_285 = arith.constant dense<0.000000e+00> : vector<5xf32>
    %458 = vector.multi_reduction <add>, %457, %cst_285 [1] : vector<5x80xf32> to vector<5xf32>
    %459 = vector.shape_cast %458 : vector<5xf32> to vector<5x1xf32>
    %cst_286 = arith.constant dense<0.000000e+00> : vector<1xf32>
    %460 = vector.multi_reduction <add>, %459, %cst_286 [0] : vector<5x1xf32> to vector<1xf32>
    %461 = vector.shape_cast %460 : vector<1xf32> to vector<1x1xf32>
    %c3_i32_287 = arith.constant 3 : i32
    %462 = vector.broadcast %c3_i32_287 : i32 to vector<5x5xi32>
    %463 = arith.cmpi eq, %213, %462 : vector<5x5xi32>
    %c0_i32_288 = arith.constant 0 : i32
    %464 = vector.broadcast %c0_i32_288 : i32 to vector<5x5xi32>
    %465 = arith.cmpi eq, %214, %464 : vector<5x5xi32>
    %466 = arith.andi %463, %465 : vector<5x5xi1>
    %467 = arith.extui %466 : vector<5x5xi1> to vector<5x5xi32>
    %468 = arith.sitofp %467 : vector<5x5xi32> to vector<5x5xf32>
    %469 = vector.broadcast %461 : vector<1x1xf32> to vector<5x5xf32>
    %470 = arith.mulf %469, %468 : vector<5x5xf32>
    %471 = arith.addf %455, %470 : vector<5x5xf32>
    %c3_289 = arith.constant 3 : index
    %c16_290 = arith.constant 16 : index
    %472 = vector.load %arg15[%c3_289, %c16_290] : memref<9x144xf32, #tpu.memory_space<vmem>>, vector<5x80xf32>
    %473 = arith.mulf %472, %212 : vector<5x80xf32>
    %cst_291 = arith.constant dense<0.000000e+00> : vector<5xf32>
    %474 = vector.multi_reduction <add>, %473, %cst_291 [1] : vector<5x80xf32> to vector<5xf32>
    %475 = vector.shape_cast %474 : vector<5xf32> to vector<5x1xf32>
    %cst_292 = arith.constant dense<0.000000e+00> : vector<1xf32>
    %476 = vector.multi_reduction <add>, %475, %cst_292 [0] : vector<5x1xf32> to vector<1xf32>
    %477 = vector.shape_cast %476 : vector<1xf32> to vector<1x1xf32>
    %c3_i32_293 = arith.constant 3 : i32
    %478 = vector.broadcast %c3_i32_293 : i32 to vector<5x5xi32>
    %479 = arith.cmpi eq, %213, %478 : vector<5x5xi32>
    %c1_i32_294 = arith.constant 1 : i32
    %480 = vector.broadcast %c1_i32_294 : i32 to vector<5x5xi32>
    %481 = arith.cmpi eq, %214, %480 : vector<5x5xi32>
    %482 = arith.andi %479, %481 : vector<5x5xi1>
    %483 = arith.extui %482 : vector<5x5xi1> to vector<5x5xi32>
    %484 = arith.sitofp %483 : vector<5x5xi32> to vector<5x5xf32>
    %485 = vector.broadcast %477 : vector<1x1xf32> to vector<5x5xf32>
    %486 = arith.mulf %485, %484 : vector<5x5xf32>
    %487 = arith.addf %471, %486 : vector<5x5xf32>
    %c3_295 = arith.constant 3 : index
    %c32_296 = arith.constant 32 : index
    %488 = vector.load %arg15[%c3_295, %c32_296] : memref<9x144xf32, #tpu.memory_space<vmem>>, vector<5x80xf32>
    %489 = arith.mulf %488, %212 : vector<5x80xf32>
    %cst_297 = arith.constant dense<0.000000e+00> : vector<5xf32>
    %490 = vector.multi_reduction <add>, %489, %cst_297 [1] : vector<5x80xf32> to vector<5xf32>
    %491 = vector.shape_cast %490 : vector<5xf32> to vector<5x1xf32>
    %cst_298 = arith.constant dense<0.000000e+00> : vector<1xf32>
    %492 = vector.multi_reduction <add>, %491, %cst_298 [0] : vector<5x1xf32> to vector<1xf32>
    %493 = vector.shape_cast %492 : vector<1xf32> to vector<1x1xf32>
    %c3_i32_299 = arith.constant 3 : i32
    %494 = vector.broadcast %c3_i32_299 : i32 to vector<5x5xi32>
    %495 = arith.cmpi eq, %213, %494 : vector<5x5xi32>
    %c2_i32_300 = arith.constant 2 : i32
    %496 = vector.broadcast %c2_i32_300 : i32 to vector<5x5xi32>
    %497 = arith.cmpi eq, %214, %496 : vector<5x5xi32>
    %498 = arith.andi %495, %497 : vector<5x5xi1>
    %499 = arith.extui %498 : vector<5x5xi1> to vector<5x5xi32>
    %500 = arith.sitofp %499 : vector<5x5xi32> to vector<5x5xf32>
    %501 = vector.broadcast %493 : vector<1x1xf32> to vector<5x5xf32>
    %502 = arith.mulf %501, %500 : vector<5x5xf32>
    %503 = arith.addf %487, %502 : vector<5x5xf32>
    %c3_301 = arith.constant 3 : index
    %c48_302 = arith.constant 48 : index
    %504 = vector.load %arg15[%c3_301, %c48_302] : memref<9x144xf32, #tpu.memory_space<vmem>>, vector<5x80xf32>
    %505 = arith.mulf %504, %212 : vector<5x80xf32>
    %cst_303 = arith.constant dense<0.000000e+00> : vector<5xf32>
    %506 = vector.multi_reduction <add>, %505, %cst_303 [1] : vector<5x80xf32> to vector<5xf32>
    %507 = vector.shape_cast %506 : vector<5xf32> to vector<5x1xf32>
    %cst_304 = arith.constant dense<0.000000e+00> : vector<1xf32>
    %508 = vector.multi_reduction <add>, %507, %cst_304 [0] : vector<5x1xf32> to vector<1xf32>
    %509 = vector.shape_cast %508 : vector<1xf32> to vector<1x1xf32>
    %c3_i32_305 = arith.constant 3 : i32
    %510 = vector.broadcast %c3_i32_305 : i32 to vector<5x5xi32>
    %511 = arith.cmpi eq, %213, %510 : vector<5x5xi32>
    %c3_i32_306 = arith.constant 3 : i32
    %512 = vector.broadcast %c3_i32_306 : i32 to vector<5x5xi32>
    %513 = arith.cmpi eq, %214, %512 : vector<5x5xi32>
    %514 = arith.andi %511, %513 : vector<5x5xi1>
    %515 = arith.extui %514 : vector<5x5xi1> to vector<5x5xi32>
    %516 = arith.sitofp %515 : vector<5x5xi32> to vector<5x5xf32>
    %517 = vector.broadcast %509 : vector<1x1xf32> to vector<5x5xf32>
    %518 = arith.mulf %517, %516 : vector<5x5xf32>
    %519 = arith.addf %503, %518 : vector<5x5xf32>
    %c3_307 = arith.constant 3 : index
    %c64_308 = arith.constant 64 : index
    %520 = vector.load %arg15[%c3_307, %c64_308] : memref<9x144xf32, #tpu.memory_space<vmem>>, vector<5x80xf32>
    %521 = arith.mulf %520, %212 : vector<5x80xf32>
    %cst_309 = arith.constant dense<0.000000e+00> : vector<5xf32>
    %522 = vector.multi_reduction <add>, %521, %cst_309 [1] : vector<5x80xf32> to vector<5xf32>
    %523 = vector.shape_cast %522 : vector<5xf32> to vector<5x1xf32>
    %cst_310 = arith.constant dense<0.000000e+00> : vector<1xf32>
    %524 = vector.multi_reduction <add>, %523, %cst_310 [0] : vector<5x1xf32> to vector<1xf32>
    %525 = vector.shape_cast %524 : vector<1xf32> to vector<1x1xf32>
    %c3_i32_311 = arith.constant 3 : i32
    %526 = vector.broadcast %c3_i32_311 : i32 to vector<5x5xi32>
    %527 = arith.cmpi eq, %213, %526 : vector<5x5xi32>
    %c4_i32_312 = arith.constant 4 : i32
    %528 = vector.broadcast %c4_i32_312 : i32 to vector<5x5xi32>
    %529 = arith.cmpi eq, %214, %528 : vector<5x5xi32>
    %530 = arith.andi %527, %529 : vector<5x5xi1>
    %531 = arith.extui %530 : vector<5x5xi1> to vector<5x5xi32>
    %532 = arith.sitofp %531 : vector<5x5xi32> to vector<5x5xf32>
    %533 = vector.broadcast %525 : vector<1x1xf32> to vector<5x5xf32>
    %534 = arith.mulf %533, %532 : vector<5x5xf32>
    %535 = arith.addf %519, %534 : vector<5x5xf32>
    %c4_313 = arith.constant 4 : index
    %c0_314 = arith.constant 0 : index
    %536 = vector.load %arg15[%c4_313, %c0_314] : memref<9x144xf32, #tpu.memory_space<vmem>>, vector<5x80xf32>
    %537 = arith.mulf %536, %212 : vector<5x80xf32>
    %cst_315 = arith.constant dense<0.000000e+00> : vector<5xf32>
    %538 = vector.multi_reduction <add>, %537, %cst_315 [1] : vector<5x80xf32> to vector<5xf32>
    %539 = vector.shape_cast %538 : vector<5xf32> to vector<5x1xf32>
    %cst_316 = arith.constant dense<0.000000e+00> : vector<1xf32>
    %540 = vector.multi_reduction <add>, %539, %cst_316 [0] : vector<5x1xf32> to vector<1xf32>
    %541 = vector.shape_cast %540 : vector<1xf32> to vector<1x1xf32>
    %c4_i32_317 = arith.constant 4 : i32
    %542 = vector.broadcast %c4_i32_317 : i32 to vector<5x5xi32>
    %543 = arith.cmpi eq, %213, %542 : vector<5x5xi32>
    %c0_i32_318 = arith.constant 0 : i32
    %544 = vector.broadcast %c0_i32_318 : i32 to vector<5x5xi32>
    %545 = arith.cmpi eq, %214, %544 : vector<5x5xi32>
    %546 = arith.andi %543, %545 : vector<5x5xi1>
    %547 = arith.extui %546 : vector<5x5xi1> to vector<5x5xi32>
    %548 = arith.sitofp %547 : vector<5x5xi32> to vector<5x5xf32>
    %549 = vector.broadcast %541 : vector<1x1xf32> to vector<5x5xf32>
    %550 = arith.mulf %549, %548 : vector<5x5xf32>
    %551 = arith.addf %535, %550 : vector<5x5xf32>
    %c4_319 = arith.constant 4 : index
    %c16_320 = arith.constant 16 : index
    %552 = vector.load %arg15[%c4_319, %c16_320] : memref<9x144xf32, #tpu.memory_space<vmem>>, vector<5x80xf32>
    %553 = arith.mulf %552, %212 : vector<5x80xf32>
    %cst_321 = arith.constant dense<0.000000e+00> : vector<5xf32>
    %554 = vector.multi_reduction <add>, %553, %cst_321 [1] : vector<5x80xf32> to vector<5xf32>
    %555 = vector.shape_cast %554 : vector<5xf32> to vector<5x1xf32>
    %cst_322 = arith.constant dense<0.000000e+00> : vector<1xf32>
    %556 = vector.multi_reduction <add>, %555, %cst_322 [0] : vector<5x1xf32> to vector<1xf32>
    %557 = vector.shape_cast %556 : vector<1xf32> to vector<1x1xf32>
    %c4_i32_323 = arith.constant 4 : i32
    %558 = vector.broadcast %c4_i32_323 : i32 to vector<5x5xi32>
    %559 = arith.cmpi eq, %213, %558 : vector<5x5xi32>
    %c1_i32_324 = arith.constant 1 : i32
    %560 = vector.broadcast %c1_i32_324 : i32 to vector<5x5xi32>
    %561 = arith.cmpi eq, %214, %560 : vector<5x5xi32>
    %562 = arith.andi %559, %561 : vector<5x5xi1>
    %563 = arith.extui %562 : vector<5x5xi1> to vector<5x5xi32>
    %564 = arith.sitofp %563 : vector<5x5xi32> to vector<5x5xf32>
    %565 = vector.broadcast %557 : vector<1x1xf32> to vector<5x5xf32>
    %566 = arith.mulf %565, %564 : vector<5x5xf32>
    %567 = arith.addf %551, %566 : vector<5x5xf32>
    %c4_325 = arith.constant 4 : index
    %c32_326 = arith.constant 32 : index
    %568 = vector.load %arg15[%c4_325, %c32_326] : memref<9x144xf32, #tpu.memory_space<vmem>>, vector<5x80xf32>
    %569 = arith.mulf %568, %212 : vector<5x80xf32>
    %cst_327 = arith.constant dense<0.000000e+00> : vector<5xf32>
    %570 = vector.multi_reduction <add>, %569, %cst_327 [1] : vector<5x80xf32> to vector<5xf32>
    %571 = vector.shape_cast %570 : vector<5xf32> to vector<5x1xf32>
    %cst_328 = arith.constant dense<0.000000e+00> : vector<1xf32>
    %572 = vector.multi_reduction <add>, %571, %cst_328 [0] : vector<5x1xf32> to vector<1xf32>
    %573 = vector.shape_cast %572 : vector<1xf32> to vector<1x1xf32>
    %c4_i32_329 = arith.constant 4 : i32
    %574 = vector.broadcast %c4_i32_329 : i32 to vector<5x5xi32>
    %575 = arith.cmpi eq, %213, %574 : vector<5x5xi32>
    %c2_i32_330 = arith.constant 2 : i32
    %576 = vector.broadcast %c2_i32_330 : i32 to vector<5x5xi32>
    %577 = arith.cmpi eq, %214, %576 : vector<5x5xi32>
    %578 = arith.andi %575, %577 : vector<5x5xi1>
    %579 = arith.extui %578 : vector<5x5xi1> to vector<5x5xi32>
    %580 = arith.sitofp %579 : vector<5x5xi32> to vector<5x5xf32>
    %581 = vector.broadcast %573 : vector<1x1xf32> to vector<5x5xf32>
    %582 = arith.mulf %581, %580 : vector<5x5xf32>
    %583 = arith.addf %567, %582 : vector<5x5xf32>
    %c4_331 = arith.constant 4 : index
    %c48_332 = arith.constant 48 : index
    %584 = vector.load %arg15[%c4_331, %c48_332] : memref<9x144xf32, #tpu.memory_space<vmem>>, vector<5x80xf32>
    %585 = arith.mulf %584, %212 : vector<5x80xf32>
    %cst_333 = arith.constant dense<0.000000e+00> : vector<5xf32>
    %586 = vector.multi_reduction <add>, %585, %cst_333 [1] : vector<5x80xf32> to vector<5xf32>
    %587 = vector.shape_cast %586 : vector<5xf32> to vector<5x1xf32>
    %cst_334 = arith.constant dense<0.000000e+00> : vector<1xf32>
    %588 = vector.multi_reduction <add>, %587, %cst_334 [0] : vector<5x1xf32> to vector<1xf32>
    %589 = vector.shape_cast %588 : vector<1xf32> to vector<1x1xf32>
    %c4_i32_335 = arith.constant 4 : i32
    %590 = vector.broadcast %c4_i32_335 : i32 to vector<5x5xi32>
    %591 = arith.cmpi eq, %213, %590 : vector<5x5xi32>
    %c3_i32_336 = arith.constant 3 : i32
    %592 = vector.broadcast %c3_i32_336 : i32 to vector<5x5xi32>
    %593 = arith.cmpi eq, %214, %592 : vector<5x5xi32>
    %594 = arith.andi %591, %593 : vector<5x5xi1>
    %595 = arith.extui %594 : vector<5x5xi1> to vector<5x5xi32>
    %596 = arith.sitofp %595 : vector<5x5xi32> to vector<5x5xf32>
    %597 = vector.broadcast %589 : vector<1x1xf32> to vector<5x5xf32>
    %598 = arith.mulf %597, %596 : vector<5x5xf32>
    %599 = arith.addf %583, %598 : vector<5x5xf32>
    %c4_337 = arith.constant 4 : index
    %c64_338 = arith.constant 64 : index
    %600 = vector.load %arg15[%c4_337, %c64_338] : memref<9x144xf32, #tpu.memory_space<vmem>>, vector<5x80xf32>
    %601 = arith.mulf %600, %212 : vector<5x80xf32>
    %cst_339 = arith.constant dense<0.000000e+00> : vector<5xf32>
    %602 = vector.multi_reduction <add>, %601, %cst_339 [1] : vector<5x80xf32> to vector<5xf32>
    %603 = vector.shape_cast %602 : vector<5xf32> to vector<5x1xf32>
    %cst_340 = arith.constant dense<0.000000e+00> : vector<1xf32>
    %604 = vector.multi_reduction <add>, %603, %cst_340 [0] : vector<5x1xf32> to vector<1xf32>
    %605 = vector.shape_cast %604 : vector<1xf32> to vector<1x1xf32>
    %c4_i32_341 = arith.constant 4 : i32
    %606 = vector.broadcast %c4_i32_341 : i32 to vector<5x5xi32>
    %607 = arith.cmpi eq, %213, %606 : vector<5x5xi32>
    %c4_i32_342 = arith.constant 4 : i32
    %608 = vector.broadcast %c4_i32_342 : i32 to vector<5x5xi32>
    %609 = arith.cmpi eq, %214, %608 : vector<5x5xi32>
    %610 = arith.andi %607, %609 : vector<5x5xi1>
    %611 = arith.extui %610 : vector<5x5xi1> to vector<5x5xi32>
    %612 = arith.sitofp %611 : vector<5x5xi32> to vector<5x5xf32>
    %613 = vector.broadcast %605 : vector<1x1xf32> to vector<5x5xf32>
    %614 = arith.mulf %613, %612 : vector<5x5xf32>
    %615 = arith.addf %599, %614 : vector<5x5xf32>
    %cst_343 = arith.constant 1.000000e-03 : f32
    %616 = vector.broadcast %cst_343 : f32 to vector<5x5xf32>
    %617 = arith.mulf %615, %616 : vector<5x5xf32>
    %c0_344 = arith.constant 0 : index
    %c0_345 = arith.constant 0 : index
    %c0_346 = arith.constant 0 : index
    %c0_347 = arith.constant 0 : index
    %618 = vector.load %arg11[%c0_344, %c0_345, %c0_346, %c0_347] : memref<1x1x5x5xf32, #tpu.memory_space<vmem>>, vector<1x1x5x5xf32>
    %619 = vector.shape_cast %618 : vector<1x1x5x5xf32> to vector<5x5xf32>
    %620 = vector.shape_cast %617 : vector<5x5xf32> to vector<1x1x5x5xf32>
    tpu.vector_store %arg11[%c0_344, %c0_345, %c0_346, %c0_347], %620 {strides = array<i32>} : memref<1x1x5x5xf32, #tpu.memory_space<vmem>>, vector<1x1x5x5xf32>,
    return
  }
  func.func @transform_0(%arg0: i32) -> (i32, i32, i32) {
    %c0_i32 = arith.constant 0 : i32
    %c0_i32_0 = arith.constant 0 : i32
    %c0_i32_1 = arith.constant 0 : i32
    return %arg0, %c0_i32, %c0_i32_0 : i32, i32, i32
  }
  func.func @transform_1(%arg0: i32) -> (i32, i32, i32) {
    %c0_i32 = arith.constant 0 : i32
    %c0_i32_0 = arith.constant 0 : i32
    %c0_i32_1 = arith.constant 0 : i32
    return %arg0, %c0_i32, %c0_i32_0 : i32, i32, i32
  }
  func.func @transform_2(%arg0: i32) -> (i32, i32, i32) {
    %c0_i32 = arith.constant 0 : i32
    %c0_i32_0 = arith.constant 0 : i32
    %c0_i32_1 = arith.constant 0 : i32
    %c0_i32_2 = arith.constant 0 : i32
    return %c0_i32, %c0_i32_0, %c0_i32_1 : i32, i32, i32
  }
  func.func @transform_3(%arg0: i32) -> (i32, i32) {
    %c0_i32 = arith.constant 0 : i32
    %c0_i32_0 = arith.constant 0 : i32
    %c0_i32_1 = arith.constant 0 : i32
    return %c0_i32, %c0_i32_0 : i32, i32
  }
  func.func @transform_4(%arg0: i32) -> (i32, i32, i32) {
    %c0_i32 = arith.constant 0 : i32
    %c0_i32_0 = arith.constant 0 : i32
    %c0_i32_1 = arith.constant 0 : i32
    %c0_i32_2 = arith.constant 0 : i32
    return %c0_i32, %c0_i32_0, %c0_i32_1 : i32, i32, i32
  }
  func.func @transform_5(%arg0: i32) -> (i32, i32) {
    %c0_i32 = arith.constant 0 : i32
    %c0_i32_0 = arith.constant 0 : i32
    %c0_i32_1 = arith.constant 0 : i32
    return %c0_i32, %c0_i32_0 : i32, i32
  }
  func.func @transform_6(%arg0: i32) -> (i32, i32, i32) {
    %c0_i32 = arith.constant 0 : i32
    %c0_i32_0 = arith.constant 0 : i32
    %c0_i32_1 = arith.constant 0 : i32
    %c0_i32_2 = arith.constant 0 : i32
    return %c0_i32, %c0_i32_0, %c0_i32_1 : i32, i32, i32
  }
  func.func @transform_7(%arg0: i32) -> (i32, i32) {
    %c0_i32 = arith.constant 0 : i32
    %c0_i32_0 = arith.constant 0 : i32
    %c0_i32_1 = arith.constant 0 : i32
    return %c0_i32, %c0_i32_0 : i32, i32
  }
  func.func @transform_8(%arg0: i32) -> (i32, i32, i32) {
    %c0_i32 = arith.constant 0 : i32
    %c0_i32_0 = arith.constant 0 : i32
    %c0_i32_1 = arith.constant 0 : i32
    %c0_i32_2 = arith.constant 0 : i32
    return %c0_i32, %c0_i32_0, %c0_i32_1 : i32, i32, i32
  }
  func.func @transform_9(%arg0: i32) -> (i32, i32) {
    %c0_i32 = arith.constant 0 : i32
    %c0_i32_0 = arith.constant 0 : i32
    %c0_i32_1 = arith.constant 0 : i32
    return %c0_i32, %c0_i32_0 : i32, i32
  }
  func.func @transform_10(%arg0: i32) -> (i32, i32, i32, i32) {
    %c0_i32 = arith.constant 0 : i32
    %c0_i32_0 = arith.constant 0 : i32
    %c0_i32_1 = arith.constant 0 : i32
    %c0_i32_2 = arith.constant 0 : i32
    return %arg0, %c0_i32, %c0_i32_0, %c0_i32_1 : i32, i32, i32, i32
  }
}

</mosaic_0001>

<llo_original>
// kernel: tile.38
$region0: #{tile.38}
  #allocation0 [shape = 's32[1]{0}', space=sflag, size = 0x4, scoped, tag = 'scoped memory for tile.38']
  %s0 = inlined_call_operand.vmem [shape: f32[16], index: 0, kind: input, shape index: {}]
  %s1 = inlined_call_operand.vmem [shape: f32[9,16], index: 1, kind: output, shape index: {}]
  // Predicated region
  $region2: #{tile.38} parent=0 // pred_check
    _
  $region3: #{tile.38} parent=0 // pred_check_branch
    %3 = sbr.rel (0) target = $region5
  $region4: #{tile.38} parent=0 // pred_region
    _
  $region5: #{tile.38} parent=0 // pred_fallthru
    _
  %v4 = vld [vmem:[%s0] ss:$0 sm:$0xff]
  %5 = vst [vmem:[%s1] sm:$0xff] %v4
  %s6 = scalar_lea.vmem %s1, 8
  %7 = vst [vmem:[%s6] sm:$0xff] %v4

// kernel: tile.39
$region0: #{tile.39}
  %s0 = inlined_call_operand.vmem [shape: f32[9,16], index: 0, kind: input, shape index: {}]
  %s1 = inlined_call_operand.vmem [shape: f32[1,144], index: 1, kind: output, shape index: {}]
  $region1: #{tile.39} parent=0
    #allocation0 [shape = 'u8[8192]{0}', space=vmem, size = 0x2000, scoped, tag = 'scoped mem for output reshape']
    %s2 = smov 3
    %v3 = vld [vmem:[%s0] ss:$8 sm:%s2]
    %vm4 = vcmask 130048
    %5 = vst.msk [vmem:[#allocation0] ss:$8 sm:$0x3] %vm4, %v3
    %s6 = scalar_lea.vmem %s0, 7
    %v7 = vld [vmem:[%s6] sm:$0x1]
    %8 = vrot.lane.b32.xlu0 %v7, 112
    %v9 = vpop.permute.xlu0 %8
    %vm10 = vcmask 1048448
    %11 = vst.msk [vmem:[#allocation0] sm:$0x1] %vm10, %v9
    %s12 = scalar_lea.vmem %s0, 6
    %v13 = vld [vmem:[%s12] sm:$0x1]
    %14 = vrot.lane.b32.xlu0 %v13, 96
    %v15 = vpop.permute.xlu0 %14
    %vm16 = vcmask 917248
    %17 = vst.msk [vmem:[#allocation0] sm:$0x1] %vm16, %v15
    %s18 = scalar_lea.vmem %s0, 5
    %v19 = vld [vmem:[%s18] sm:$0x1]
    %20 = vrot.lane.b32.xlu0 %v19, 80
    %v21 = vpop.permute.xlu0 %20
    %vm22 = vcmask 786048
    %23 = vst.msk [vmem:[#allocation0] sm:$0x1] %vm22, %v21
    %s24 = scalar_lea.vmem %s0, 4
    %v25 = vld [vmem:[%s24] sm:$0x1]
    %26 = vrot.lane.b32.xlu0 %v25, 64
    %v27 = vpop.permute.xlu0 %26
    %vm28 = vcmask 654848
    %29 = vst.msk [vmem:[#allocation0] sm:$0x1] %vm28, %v27
    %s30 = scalar_lea.vmem %s0, 3
    %v31 = vld [vmem:[%s30] sm:$0x1]
    %32 = vrot.lane.b32.xlu0 %v31, 48
    %v33 = vpop.permute.xlu0 %32
    %vm34 = vcmask 523648
    %35 = vst.msk [vmem:[#allocation0] sm:$0x1] %vm34, %v33
    %s36 = scalar_lea.vmem %s0, 2
    %v37 = vld [vmem:[%s36] sm:$0x1]
    %38 = vrot.lane.b32.xlu0 %v37, 32
    %v39 = vpop.permute.xlu0 %38
    %vm40 = vcmask 392448
    %41 = vst.msk [vmem:[#allocation0] sm:$0x1] %vm40, %v39
    %s42 = scalar_lea.vmem %s0, 1
    %v43 = vld [vmem:[%s42] sm:$0x1]
    %44 = vrot.lane.b32.xlu0 %v43, 16
    %v45 = vpop.permute.xlu0 %44
    %vm46 = vcmask 261248
    %47 = vst.msk [vmem:[#allocation0] sm:$0x1] %vm46, %v45
    %s49 = sshll.u32 1, 1
    %s50 = ssub.s32 %s49, 1
    %v52 = vld [vmem:[#allocation0] sm:%s50]
    %s53 = sshll.u32 1, 1
    %s54 = ssub.s32 %s53, 1
    %55 = vst [vmem:[%s1] sm:%s54] %v52
    %s56 = scalar_lea.vmem [#allocation0], 8
    %v57 = vld [vmem:[%s56] sm:%s50]
    %s58 = sshll.u32 1, 1
    %s59 = ssub.s32 %s58, 1
    %s60 = scalar_lea.vmem %s1, 1
    %61 = vst [vmem:[%s60] sm:%s59] %v57

// kernel: tile.33
$region0: #{tile.33}
  #allocation0 [shape = 's32[1]{0}', space=sflag, size = 0x4, scoped, tag = 'scoped memory for tile.33']
  %s0 = inlined_call_operand.vmem [shape: f32[8], index: 0, kind: input, shape index: {}]
  %s1 = inlined_call_operand.vmem [shape: f32[11,8], index: 1, kind: output, shape index: {}]
  // Predicated region
  $region2: #{tile.33} parent=0 // pred_check
    _
  $region3: #{tile.33} parent=0 // pred_check_branch
    %3 = sbr.rel (0) target = $region5
  $region4: #{tile.33} parent=0 // pred_region
    _
  $region5: #{tile.33} parent=0 // pred_fallthru
    _
  %v4 = vld [vmem:[%s0] ss:$0 sm:$0xff]
  %5 = vst [vmem:[%s1] sm:$0xff] %v4
  %s6 = scalar_lea.vmem %s1, 8
  %7 = vst [vmem:[%s6] sm:$0xff] %v4

// kernel: tile.34
$region0: #{tile.34}
  %s0 = inlined_call_operand.vmem [shape: f32[11,8], index: 0, kind: input, shape index: {}]
  %s1 = inlined_call_operand.vmem [shape: f32[1,88], index: 1, kind: output, shape index: {}]
  $region1: #{tile.34} parent=0
    #allocation0 [shape = 'u8[4096]{0}', space=vmem, size = 0x1000, scoped, tag = 'scoped mem for output reshape']
    %v2 = vld [vmem:[%s0] sm:$0x1]
    %vm3 = vcmask 64512
    %4 = vst.msk [vmem:[#allocation0] sm:$0x1] %vm3, %v2
    %s5 = scalar_lea.vmem %s0, 10
    %v6 = vld [vmem:[%s5] sm:$0x1]
    %7 = vrot.lane.b32.xlu0 %v6, 80
    %v8 = vpop.permute.xlu0 %7
    %vm9 = vcmask 720512
    %10 = vst.msk [vmem:[#allocation0] sm:$0x1] %vm9, %v8
    %s11 = scalar_lea.vmem %s0, 9
    %v12 = vld [vmem:[%s11] sm:$0x1]
    %13 = vrot.lane.b32.xlu0 %v12, 72
    %v14 = vpop.permute.xlu0 %13
    %vm15 = vcmask 654912
    %16 = vst.msk [vmem:[#allocation0] sm:$0x1] %vm15, %v14
    %s17 = scalar_lea.vmem %s0, 8
    %v18 = vld [vmem:[%s17] sm:$0x1]
    %19 = vrot.lane.b32.xlu0 %v18, 64
    %v20 = vpop.permute.xlu0 %19
    %vm21 = vcmask 589312
    %22 = vst.msk [vmem:[#allocation0] sm:$0x1] %vm21, %v20
    %s23 = scalar_lea.vmem %s0, 7
    %v24 = vld [vmem:[%s23] sm:$0x1]
    %25 = vrot.lane.b32.xlu0 %v24, 56
    %v26 = vpop.permute.xlu0 %25
    %vm27 = vcmask 523712
    %28 = vst.msk [vmem:[#allocation0] sm:$0x1] %vm27, %v26
    %s29 = scalar_lea.vmem %s0, 6
    %v30 = vld [vmem:[%s29] sm:$0x1]
    %31 = vrot.lane.b32.xlu0 %v30, 48
    %v32 = vpop.permute.xlu0 %31
    %vm33 = vcmask 458112
    %34 = vst.msk [vmem:[#allocation0] sm:$0x1] %vm33, %v32
    %s35 = scalar_lea.vmem %s0, 5
    %v36 = vld [vmem:[%s35] sm:$0x1]
    %37 = vrot.lane.b32.xlu0 %v36, 40
    %v38 = vpop.permute.xlu0 %37
    %vm39 = vcmask 392512
    %40 = vst.msk [vmem:[#allocation0] sm:$0x1] %vm39, %v38
    %s41 = scalar_lea.vmem %s0, 4
    %v42 = vld [vmem:[%s41] sm:$0x1]
    %43 = vrot.lane.b32.xlu0 %v42, 32
    %v44 = vpop.permute.xlu0 %43
    %vm45 = vcmask 326912
    %46 = vst.msk [vmem:[#allocation0] sm:$0x1] %vm45, %v44
    %s47 = scalar_lea.vmem %s0, 3
    %v48 = vld [vmem:[%s47] sm:$0x1]
    %49 = vrot.lane.b32.xlu0 %v48, 24
    %v50 = vpop.permute.xlu0 %49
    %vm51 = vcmask 261312
    %52 = vst.msk [vmem:[#allocation0] sm:$0x1] %vm51, %v50
    %s53 = scalar_lea.vmem %s0, 2
    %v54 = vld [vmem:[%s53] sm:$0x1]
    %55 = vrot.lane.b32.xlu0 %v54, 16
    %v56 = vpop.permute.xlu0 %55
    %vm57 = vcmask 195712
    %58 = vst.msk [vmem:[#allocation0] sm:$0x1] %vm57, %v56
    %s59 = scalar_lea.vmem %s0, 1
    %v60 = vld [vmem:[%s59] sm:$0x1]
    %61 = vrot.lane.b32.xlu0 %v60, 8
    %v62 = vpop.permute.xlu0 %61
    %vm63 = vcmask 130112
    %64 = vst.msk [vmem:[#allocation0] sm:$0x1] %vm63, %v62
    %s66 = sshll.u32 1, 1
    %s67 = ssub.s32 %s66, 1
    %v69 = vld [vmem:[#allocation0] sm:%s67]
    %s70 = sshll.u32 1, 1
    %s71 = ssub.s32 %s70, 1
    %72 = vst [vmem:[%s1] sm:%s71] %v69

// kernel: tile.23
$region0: #{tile.23}
  #allocation0 [shape = 's32[1]{0}', space=sflag, size = 0x4, scoped, tag = 'scoped memory for tile.23']
  %s0 = inlined_call_operand.vmem [shape: f32[8], index: 0, kind: input, shape index: {}]
  %s1 = inlined_call_operand.vmem [shape: f32[7,8], index: 1, kind: output, shape index: {}]
  // Predicated region
  $region2: #{tile.23} parent=0 // pred_check
    _
  $region3: #{tile.23} parent=0 // pred_check_branch
    %3 = sbr.rel (0) target = $region5
  $region4: #{tile.23} parent=0 // pred_region
    _
  $region5: #{tile.23} parent=0 // pred_fallthru
    _
  %v4 = vld [vmem:[%s0] ss:$0 sm:$0xff]
  %5 = vst [vmem:[%s1] sm:$0xff] %v4

// kernel: tile.24
$region0: #{tile.24}
  %s0 = inlined_call_operand.vmem [shape: f32[7,8], index: 0, kind: input, shape index: {}]
  %s1 = inlined_call_operand.vmem [shape: f32[1,56], index: 1, kind: output, shape index: {}]
  $region1: #{tile.24} parent=0
    #allocation0 [shape = 'u8[4096]{0}', space=vmem, size = 0x1000, scoped, tag = 'scoped mem for output reshape']
    %v2 = vld [vmem:[%s0] sm:$0x1]
    %vm3 = vcmask 64512
    %4 = vst.msk [vmem:[#allocation0] sm:$0x1] %vm3, %v2
    %s5 = scalar_lea.vmem %s0, 6
    %v6 = vld [vmem:[%s5] sm:$0x1]
    %7 = vrot.lane.b32.xlu0 %v6, 48
    %v8 = vpop.permute.xlu0 %7
    %vm9 = vcmask 458112
    %10 = vst.msk [vmem:[#allocation0] sm:$0x1] %vm9, %v8
    %s11 = scalar_lea.vmem %s0, 5
    %v12 = vld [vmem:[%s11] sm:$0x1]
    %13 = vrot.lane.b32.xlu0 %v12, 40
    %v14 = vpop.permute.xlu0 %13
    %vm15 = vcmask 392512
    %16 = vst.msk [vmem:[#allocation0] sm:$0x1] %vm15, %v14
    %s17 = scalar_lea.vmem %s0, 4
    %v18 = vld [vmem:[%s17] sm:$0x1]
    %19 = vrot.lane.b32.xlu0 %v18, 32
    %v20 = vpop.permute.xlu0 %19
    %vm21 = vcmask 326912
    %22 = vst.msk [vmem:[#allocation0] sm:$0x1] %vm21, %v20
    %s23 = scalar_lea.vmem %s0, 3
    %v24 = vld [vmem:[%s23] sm:$0x1]
    %25 = vrot.lane.b32.xlu0 %v24, 24
    %v26 = vpop.permute.xlu0 %25
    %vm27 = vcmask 261312
    %28 = vst.msk [vmem:[#allocation0] sm:$0x1] %vm27, %v26
    %s29 = scalar_lea.vmem %s0, 2
    %v30 = vld [vmem:[%s29] sm:$0x1]
    %31 = vrot.lane.b32.xlu0 %v30, 16
    %v32 = vpop.permute.xlu0 %31
    %vm33 = vcmask 195712
    %34 = vst.msk [vmem:[#allocation0] sm:$0x1] %vm33, %v32
    %s35 = scalar_lea.vmem %s0, 1
    %v36 = vld [vmem:[%s35] sm:$0x1]
    %37 = vrot.lane.b32.xlu0 %v36, 8
    %v38 = vpop.permute.xlu0 %37
    %vm39 = vcmask 130112
    %40 = vst.msk [vmem:[#allocation0] sm:$0x1] %vm39, %v38
    %s42 = sshll.u32 1, 1
    %s43 = ssub.s32 %s42, 1
    %v45 = vld [vmem:[#allocation0] sm:%s43]
    %s46 = sshll.u32 1, 1
    %s47 = ssub.s32 %s46, 1
    %48 = vst [vmem:[%s1] sm:%s47] %v45

// kernel: tile.28
$region0: #{tile.28}
  #allocation0 [shape = 's32[1]{0}', space=sflag, size = 0x4, scoped, tag = 'scoped memory for tile.28']
  %s0 = inlined_call_operand.vmem [shape: f32[16], index: 0, kind: input, shape index: {}]
  %s1 = inlined_call_operand.vmem [shape: f32[5,16], index: 1, kind: output, shape index: {}]
  // Predicated region
  $region2: #{tile.28} parent=0 // pred_check
    _
  $region3: #{tile.28} parent=0 // pred_check_branch
    %3 = sbr.rel (0) target = $region5
  $region4: #{tile.28} parent=0 // pred_region
    _
  $region5: #{tile.28} parent=0 // pred_fallthru
    _
  %v4 = vld [vmem:[%s0] ss:$0 sm:$0xff]
  %5 = vst [vmem:[%s1] sm:$0xff] %v4

// kernel: tile.29
$region0: #{tile.29}
  %s0 = inlined_call_operand.vmem [shape: f32[5,16], index: 0, kind: input, shape index: {}]
  %s1 = inlined_call_operand.vmem [shape: f32[1,80], index: 1, kind: output, shape index: {}]
  $region1: #{tile.29} parent=0
    #allocation0 [shape = 'u8[4096]{0}', space=vmem, size = 0x1000, scoped, tag = 'scoped mem for output reshape']
    %v2 = vld [vmem:[%s0] sm:$0x1]
    %vm3 = vcmask 130048
    %4 = vst.msk [vmem:[#allocation0] sm:$0x1] %vm3, %v2
    %s5 = scalar_lea.vmem %s0, 4
    %v6 = vld [vmem:[%s5] sm:$0x1]
    %7 = vrot.lane.b32.xlu0 %v6, 64
    %v8 = vpop.permute.xlu0 %7
    %vm9 = vcmask 654848
    %10 = vst.msk [vmem:[#allocation0] sm:$0x1] %vm9, %v8
    %s11 = scalar_lea.vmem %s0, 3
    %v12 = vld [vmem:[%s11] sm:$0x1]
    %13 = vrot.lane.b32.xlu0 %v12, 48
    %v14 = vpop.permute.xlu0 %13
    %vm15 = vcmask 523648
    %16 = vst.msk [vmem:[#allocation0] sm:$0x1] %vm15, %v14
    %s17 = scalar_lea.vmem %s0, 2
    %v18 = vld [vmem:[%s17] sm:$0x1]
    %19 = vrot.lane.b32.xlu0 %v18, 32
    %v20 = vpop.permute.xlu0 %19
    %vm21 = vcmask 392448
    %22 = vst.msk [vmem:[#allocation0] sm:$0x1] %vm21, %v20
    %s23 = scalar_lea.vmem %s0, 1
    %v24 = vld [vmem:[%s23] sm:$0x1]
    %25 = vrot.lane.b32.xlu0 %v24, 16
    %v26 = vpop.permute.xlu0 %25
    %vm27 = vcmask 261248
    %28 = vst.msk [vmem:[#allocation0] sm:$0x1] %vm27, %v26
    %s30 = sshll.u32 1, 1
    %s31 = ssub.s32 %s30, 1
    %v33 = vld [vmem:[#allocation0] sm:%s31]
    %s34 = sshll.u32 1, 1
    %s35 = ssub.s32 %s34, 1
    %36 = vst [vmem:[%s1] sm:%s35] %v33

// kernel: siam_uav_forward.1
$region0: #{siam_uav_forward.1}
  #allocation0 [shape = 'u32[]', space=smem, size = 0x4, offset = 0x4, fixed_abs, tag = 'smem constant byte address 0x4 - core index']
  #allocation1 [shape = 'u32[144,128]{1,0:T(1,128)}', space=vmem, size = 0x12000, scoped, tag = 'internal scratch']
  #allocation2 [shape = 'f32[7,56]{1,0:T(8,128)}', space=vmem, size = 0x1000, scoped, tag = 'scratch operand']
  #allocation3 [shape = 'f32[11,88]{1,0:T(8,128)}', space=vmem, size = 0x2000, scoped, tag = 'scratch operand']
  #allocation4 [shape = 'f32[5,80]{1,0:T(8,128)}', space=vmem, size = 0x1000, scoped, tag = 'scratch operand']
  #allocation5 [shape = 'f32[9,144]{1,0:T(8,128)}', space=vmem, size = 0x4000, scoped, tag = 'scratch operand']
  %s0 = inlined_call_operand.vmem [shape: f32[2,8,96], index: 0, kind: input, shape index: {}]
  %s1 = inlined_call_operand.vmem [shape: f32[2,12,144], index: 1, kind: input, shape index: {}]
  %s2 = inlined_call_operand.vmem [shape: bf16[6,42,56], index: 2, kind: input, shape index: {}]
  %s3 = inlined_call_operand.vmem [shape: f32[1,56], index: 3, kind: input, shape index: {}]
  %s4 = inlined_call_operand.vmem [shape: bf16[9,40,80], index: 4, kind: input, shape index: {}]
  %s5 = inlined_call_operand.vmem [shape: f32[1,80], index: 5, kind: input, shape index: {}]
  %s6 = inlined_call_operand.vmem [shape: bf16[6,66,88], index: 6, kind: input, shape index: {}]
  %s7 = inlined_call_operand.vmem [shape: f32[1,88], index: 7, kind: input, shape index: {}]
  %s8 = inlined_call_operand.vmem [shape: bf16[9,72,144], index: 8, kind: input, shape index: {}]
  %s9 = inlined_call_operand.vmem [shape: f32[1,144], index: 9, kind: input, shape index: {}]
  %s10 = inlined_call_operand.vmem [shape: f32[2,1,5,5], index: 10, kind: output, shape index: {}]
  %s11 = sld [smem:[#allocation0]]
  $region73: #{siam_uav_forward.1} parent=0
    _
  %s13 = ssub.s32 1, %s11
  %s14 = scalar_select 0, %s13, %s11
  loop: start=0, step=1, limit=4
  $region2: #{siam_uav_forward.1} parent=0 // loop_pre_header
    _
  $region3: #{siam_uav_forward.1} parent=0 // loop_header
    %s16 = sphi 0, %s20
    %p17 = scmp.ge.s32.totalorder %s16, 4
    %s26 = sphi 0, %s28
    %s29 = sphi 0, %s26
    %s30 = sphi 0, %s29
    %s46 = sphi 0, %s30
    %s52 = sphi 0, %s54
    %s55 = sphi 0, %s52
    %s56 = sphi 0, %s55
    %s72 = sphi 0, %s56
    %s76 = sphi 0, %s76
    %s78 = sphi 0, %s76
    %s79 = sphi 0, %s78
    %s93 = sphi 0, %s79
    %s97 = sphi 0, %s97
    %s99 = sphi 0, %s97
    %s100 = sphi 0, %s99
    %s114 = sphi 0, %s100
    %s118 = sphi 0, %s118
    %s120 = sphi 0, %s118
    %s121 = sphi 0, %s120
    %s135 = sphi 0, %s121
    %s139 = sphi 0, %s139
    %s141 = sphi 0, %s139
    %s142 = sphi 0, %s141
    %s156 = sphi 0, %s142
    %s160 = sphi 0, %s160
    %s162 = sphi 0, %s160
    %s163 = sphi 0, %s162
    %s177 = sphi 0, %s163
    %s181 = sphi 0, %s181
    %s183 = sphi 0, %s181
    %s184 = sphi 0, %s183
    %s198 = sphi 0, %s184
    %s202 = sphi 0, %s202
    %s204 = sphi 0, %s202
    %s205 = sphi 0, %s204
    %s219 = sphi 0, %s205
    %s223 = sphi 0, %s223
    %s225 = sphi 0, %s223
    %s226 = sphi 0, %s225
    %s240 = sphi 0, %s226
    %s246 = sphi 0, %s248
    %s249 = sphi 0, %s246
    %s250 = sphi 0, %s249
    %s266 = sphi 0, %s250
  $region4: #{siam_uav_forward.1} parent=0 // loop_header_branch
    %19 = sbr.rel (%p17) target = $region8
  $region5: #{siam_uav_forward.1} parent=0 // loop_body
    %s21 = ssub.s32 %s16, 1
    %s22 = ssub.s32 %s16, 2
    %s23 = sadd.s32 %s16, 1
    %s24 = ssub.s32 %s16, %s23
    %p25 = scmp.eq.s32.totalorder %s24, 0
    %s27 = sadd.s32 %s26, 1
    %s28 = scalar_select %p25, %s26, %s27
    %p31 = pneg %p25
    %p32 = scmp.eq.s32.totalorder %s16, 1
    %p33 = por %p31, %p32
    %p34 = scmp.ne.s32.totalorder %s26, %s29
    %p35 = scmp.eq.s32.totalorder %s16, 0
    %p36 = por %p34, %p35
    %p37 = scmp.ne.s32.totalorder %s26, %s29
    %p38 = scmp.eq.s32.totalorder %s21, 1
    %p39 = por %p37, %p38
    %p40 = scmp.ne.s32.totalorder %s29, %s30
    %p41 = scmp.eq.s32.totalorder %s21, 0
    %p42 = por %p40, %p41
    %p43 = scmp.ne.s32.totalorder %s29, %s30
    %p44 = scmp.eq.s32.totalorder %s22, 1
    %p45 = por %p43, %p44
    %p47 = scmp.ne.s32.totalorder %s30, %s46
    %p48 = scmp.eq.s32.totalorder %s22, 0
    %p49 = por %p47, %p48
    %s50 = ssub.s32 %s16, %s23
    %p51 = scmp.eq.s32.totalorder %s50, 0
    %s53 = sadd.s32 %s52, 1
    %s54 = scalar_select %p51, %s52, %s53
    %p57 = pneg %p51
    %p58 = scmp.eq.s32.totalorder %s16, 1
    %p59 = por %p57, %p58
    %p60 = scmp.ne.s32.totalorder %s52, %s55
    %p61 = scmp.eq.s32.totalorder %s16, 0
    %p62 = por %p60, %p61
    %p63 = scmp.ne.s32.totalorder %s52, %s55
    %p64 = scmp.eq.s32.totalorder %s21, 1
    %p65 = por %p63, %p64
    %p66 = scmp.ne.s32.totalorder %s55, %s56
    %p67 = scmp.eq.s32.totalorder %s21, 0
    %p68 = por %p66, %p67
    %p69 = scmp.ne.s32.totalorder %s55, %s56
    %p70 = scmp.eq.s32.totalorder %s22, 1
    %p71 = por %p69, %p70
    %p73 = scmp.ne.s32.totalorder %s56, %s72
    %p74 = scmp.eq.s32.totalorder %s22, 0
    %p75 = por %p73, %p74
    %s77 = sadd.s32 %s76, 1
    %p80 = scmp.eq.s32.totalorder %s16, 1
    %p81 = scmp.ne.s32.totalorder %s76, %s78
    %p82 = scmp.eq.s32.totalorder %s16, 0
    %p83 = por %p81, %p82
    %p84 = scmp.ne.s32.totalorder %s76, %s78
    %p85 = scmp.eq.s32.totalorder %s21, 1
    %p86 = por %p84, %p85
    %p87 = scmp.ne.s32.totalorder %s78, %s79
    %p88 = scmp.eq.s32.totalorder %s21, 0
    %p89 = por %p87, %p88
    %p90 = scmp.ne.s32.totalorder %s78, %s79
    %p91 = scmp.eq.s32.totalorder %s22, 1
    %p92 = por %p90, %p91
    %p94 = scmp.ne.s32.totalorder %s79, %s93
    %p95 = scmp.eq.s32.totalorder %s22, 0
    %p96 = por %p94, %p95
    %s98 = sadd.s32 %s97, 1
    %p101 = scmp.eq.s32.totalorder %s16, 1
    %p102 = scmp.ne.s32.totalorder %s97, %s99
    %p103 = scmp.eq.s32.totalorder %s16, 0
    %p104 = por %p102, %p103
    %p105 = scmp.ne.s32.totalorder %s97, %s99
    %p106 = scmp.eq.s32.totalorder %s21, 1
    %p107 = por %p105, %p106
    %p108 = scmp.ne.s32.totalorder %s99, %s100
    %p109 = scmp.eq.s32.totalorder %s21, 0
    %p110 = por %p108, %p109
    %p111 = scmp.ne.s32.totalorder %s99, %s100
    %p112 = scmp.eq.s32.totalorder %s22, 1
    %p113 = por %p111, %p112
    %p115 = scmp.ne.s32.totalorder %s100, %s114
    %p116 = scmp.eq.s32.totalorder %s22, 0
    %p117 = por %p115, %p116
    %s119 = sadd.s32 %s118, 1
    %p122 = scmp.eq.s32.totalorder %s16, 1
    %p123 = scmp.ne.s32.totalorder %s118, %s120
    %p124 = scmp.eq.s32.totalorder %s16, 0
    %p125 = por %p123, %p124
    %p126 = scmp.ne.s32.totalorder %s118, %s120
    %p127 = scmp.eq.s32.totalorder %s21, 1
    %p128 = por %p126, %p127
    %p129 = scmp.ne.s32.totalorder %s120, %s121
    %p130 = scmp.eq.s32.totalorder %s21, 0
    %p131 = por %p129, %p130
    %p132 = scmp.ne.s32.totalorder %s120, %s121
    %p133 = scmp.eq.s32.totalorder %s22, 1
    %p134 = por %p132, %p133
    %p136 = scmp.ne.s32.totalorder %s121, %s135
    %p137 = scmp.eq.s32.totalorder %s22, 0
    %p138 = por %p136, %p137
    %s140 = sadd.s32 %s139, 1
    %p143 = scmp.eq.s32.totalorder %s16, 1
    %p144 = scmp.ne.s32.totalorder %s139, %s141
    %p145 = scmp.eq.s32.totalorder %s16, 0
    %p146 = por %p144, %p145
    %p147 = scmp.ne.s32.totalorder %s139, %s141
    %p148 = scmp.eq.s32.totalorder %s21, 1
    %p149 = por %p147, %p148
    %p150 = scmp.ne.s32.totalorder %s141, %s142
    %p151 = scmp.eq.s32.totalorder %s21, 0
    %p152 = por %p150, %p151
    %p153 = scmp.ne.s32.totalorder %s141, %s142
    %p154 = scmp.eq.s32.totalorder %s22, 1
    %p155 = por %p153, %p154
    %p157 = scmp.ne.s32.totalorder %s142, %s156
    %p158 = scmp.eq.s32.totalorder %s22, 0
    %p159 = por %p157, %p158
    %s161 = sadd.s32 %s160, 1
    %p164 = scmp.eq.s32.totalorder %s16, 1
    %p165 = scmp.ne.s32.totalorder %s160, %s162
    %p166 = scmp.eq.s32.totalorder %s16, 0
    %p167 = por %p165, %p166
    %p168 = scmp.ne.s32.totalorder %s160, %s162
    %p169 = scmp.eq.s32.totalorder %s21, 1
    %p170 = por %p168, %p169
    %p171 = scmp.ne.s32.totalorder %s162, %s163
    %p172 = scmp.eq.s32.totalorder %s21, 0
    %p173 = por %p171, %p172
    %p174 = scmp.ne.s32.totalorder %s162, %s163
    %p175 = scmp.eq.s32.totalorder %s22, 1
    %p176 = por %p174, %p175
    %p178 = scmp.ne.s32.totalorder %s163, %s177
    %p179 = scmp.eq.s32.totalorder %s22, 0
    %p180 = por %p178, %p179
    %s182 = sadd.s32 %s181, 1
    %p185 = scmp.eq.s32.totalorder %s16, 1
    %p186 = scmp.ne.s32.totalorder %s181, %s183
    %p187 = scmp.eq.s32.totalorder %s16, 0
    %p188 = por %p186, %p187
    %p189 = scmp.ne.s32.totalorder %s181, %s183
    %p190 = scmp.eq.s32.totalorder %s21, 1
    %p191 = por %p189, %p190
    %p192 = scmp.ne.s32.totalorder %s183, %s184
    %p193 = scmp.eq.s32.totalorder %s21, 0
    %p194 = por %p192, %p193
    %p195 = scmp.ne.s32.totalorder %s183, %s184
    %p196 = scmp.eq.s32.totalorder %s22, 1
    %p197 = por %p195, %p196
    %p199 = scmp.ne.s32.totalorder %s184, %s198
    %p200 = scmp.eq.s32.totalorder %s22, 0
    %p201 = por %p199, %p200
    %s203 = sadd.s32 %s202, 1
    %p206 = scmp.eq.s32.totalorder %s16, 1
    %p207 = scmp.ne.s32.totalorder %s202, %s204
    %p208 = scmp.eq.s32.totalorder %s16, 0
    %p209 = por %p207, %p208
    %p210 = scmp.ne.s32.totalorder %s202, %s204
    %p211 = scmp.eq.s32.totalorder %s21, 1
    %p212 = por %p210, %p211
    %p213 = scmp.ne.s32.totalorder %s204, %s205
    %p214 = scmp.eq.s32.totalorder %s21, 0
    %p215 = por %p213, %p214
    %p216 = scmp.ne.s32.totalorder %s204, %s205
    %p217 = scmp.eq.s32.totalorder %s22, 1
    %p218 = por %p216, %p217
    %p220 = scmp.ne.s32.totalorder %s205, %s219
    %p221 = scmp.eq.s32.totalorder %s22, 0
    %p222 = por %p220, %p221
    %s224 = sadd.s32 %s223, 1
    %p227 = scmp.eq.s32.totalorder %s16, 1
    %p228 = scmp.ne.s32.totalorder %s223, %s225
    %p229 = scmp.eq.s32.totalorder %s16, 0
    %p230 = por %p228, %p229
    %p231 = scmp.ne.s32.totalorder %s223, %s225
    %p232 = scmp.eq.s32.totalorder %s21, 1
    %p233 = por %p231, %p232
    %p234 = scmp.ne.s32.totalorder %s225, %s226
    %p235 = scmp.eq.s32.totalorder %s21, 0
    %p236 = por %p234, %p235
    %p237 = scmp.ne.s32.totalorder %s225, %s226
    %p238 = scmp.eq.s32.totalorder %s22, 1
    %p239 = por %p237, %p238
    %p241 = scmp.ne.s32.totalorder %s226, %s240
    %p242 = scmp.eq.s32.totalorder %s22, 0
    %p243 = por %p241, %p242
    %s244 = ssub.s32 %s16, %s23
    %p245 = scmp.eq.s32.totalorder %s244, 0
    %s247 = sadd.s32 %s246, 1
    %s248 = scalar_select %p245, %s246, %s247
    %p251 = pneg %p245
    %p252 = scmp.eq.s32.totalorder %s16, 1
    %p253 = por %p251, %p252
    %p254 = scmp.ne.s32.totalorder %s246, %s249
    %p255 = scmp.eq.s32.totalorder %s16, 0
    %p256 = por %p254, %p255
    %p257 = scmp.ne.s32.totalorder %s246, %s249
    %p258 = scmp.eq.s32.totalorder %s21, 1
    %p259 = por %p257, %p258
    %p260 = scmp.ne.s32.totalorder %s249, %s250
    %p261 = scmp.eq.s32.totalorder %s21, 0
    %p262 = por %p260, %p261
    %p263 = scmp.ne.s32.totalorder %s249, %s250
    %p264 = scmp.eq.s32.totalorder %s22, 1
    %p265 = por %p263, %p264
    %p267 = scmp.ne.s32.totalorder %s250, %s266
    %p268 = scmp.eq.s32.totalorder %s22, 0
    %p269 = por %p267, %p268
    %p270 = scmp.le.s32.totalorder 1, %s16
    %p271 = scmp.lt.s32.totalorder %s16, 3
    %p272 = pnand %p270, %p271
    %p273 = pneg %p272
    // Predicated region
    $region9: #{siam_uav_forward.1} parent=5 // pred_check
      _
    $region10: #{siam_uav_forward.1} parent=5 // pred_check_branch
      %275 = sbr.rel (%p272) target = $region12
    $region11: #{siam_uav_forward.1} parent=5 // pred_region
      %s276 = ssub.s32 %s16, 1
      // Predicated region
      $region13: #{siam_uav_forward.1} parent=11 // pred_check
        %p277 = pneg %p89
      $region14: #{siam_uav_forward.1} parent=11 // pred_check_branch
        %279 = sbr.rel (%p277) target = $region16
      $region15: #{siam_uav_forward.1} parent=11 // pred_region
        _
      $region16: #{siam_uav_forward.1} parent=11 // pred_fallthru
        _
      // Predicated region
      $region17: #{siam_uav_forward.1} parent=11 // pred_check
        %p280 = pneg %p110
      $region18: #{siam_uav_forward.1} parent=11 // pred_check_branch
        %282 = sbr.rel (%p280) target = $region20
      $region19: #{siam_uav_forward.1} parent=11 // pred_region
        _
      $region20: #{siam_uav_forward.1} parent=11 // pred_fallthru
        _
      // Predicated region
      $region21: #{siam_uav_forward.1} parent=11 // pred_check
        %p283 = pneg %p131
      $region22: #{siam_uav_forward.1} parent=11 // pred_check_branch
        %285 = sbr.rel (%p283) target = $region24
      $region23: #{siam_uav_forward.1} parent=11 // pred_region
        _
      $region24: #{siam_uav_forward.1} parent=11 // pred_fallthru
        _
      // Predicated region
      $region25: #{siam_uav_forward.1} parent=11 // pred_check
        %p286 = pneg %p152
      $region26: #{siam_uav_forward.1} parent=11 // pred_check_branch
        %288 = sbr.rel (%p286) target = $region28
      $region27: #{siam_uav_forward.1} parent=11 // pred_region
        _
      $region28: #{siam_uav_forward.1} parent=11 // pred_fallthru
        _
      // Predicated region
      $region29: #{siam_uav_forward.1} parent=11 // pred_check
        %p289 = pneg %p173
      $region30: #{siam_uav_forward.1} parent=11 // pred_check_branch
        %291 = sbr.rel (%p289) target = $region32
      $region31: #{siam_uav_forward.1} parent=11 // pred_region
        _
      $region32: #{siam_uav_forward.1} parent=11 // pred_fallthru
        _
      // Predicated region
      $region33: #{siam_uav_forward.1} parent=11 // pred_check
        %p292 = pneg %p194
      $region34: #{siam_uav_forward.1} parent=11 // pred_check_branch
        %294 = sbr.rel (%p292) target = $region36
      $region35: #{siam_uav_forward.1} parent=11 // pred_region
        _
      $region36: #{siam_uav_forward.1} parent=11 // pred_fallthru
        _
      // Predicated region
      $region37: #{siam_uav_forward.1} parent=11 // pred_check
        %p295 = pneg %p215
      $region38: #{siam_uav_forward.1} parent=11 // pred_check_branch
        %297 = sbr.rel (%p295) target = $region40
      $region39: #{siam_uav_forward.1} parent=11 // pred_region
        _
      $region40: #{siam_uav_forward.1} parent=11 // pred_fallthru
        _
      // Predicated region
      $region41: #{siam_uav_forward.1} parent=11 // pred_check
        %p298 = pneg %p236
      $region42: #{siam_uav_forward.1} parent=11 // pred_check_branch
        %300 = sbr.rel (%p298) target = $region44
      $region43: #{siam_uav_forward.1} parent=11 // pred_region
        _
      $region44: #{siam_uav_forward.1} parent=11 // pred_fallthru
        _
    $region12: #{siam_uav_forward.1} parent=5 // pred_fallthru
      _
    %p301 = scmp.lt.s32.totalorder %s16, 2
    // Predicated region
    $region45: #{siam_uav_forward.1} parent=5 // pred_check
      %p302 = pneg %p301
    $region46: #{siam_uav_forward.1} parent=5 // pred_check_branch
      %304 = sbr.rel (%p302) target = $region48
    $region47: #{siam_uav_forward.1} parent=5 // pred_region
      // Predicated region
      $region49: #{siam_uav_forward.1} parent=47 // pred_check
        %p305 = pneg %p36
      $region50: #{siam_uav_forward.1} parent=47 // pred_check_branch
        %307 = sbr.rel (%p305) target = $region52
      $region51: #{siam_uav_forward.1} parent=47 // pred_region
        %p308 = scmp.lt.s32.totalorder %s16, 1
        %s309 = scalar_select %p308, %s16, 1
        %s310 = smul.addr %s309, 8
        %s311 = scalar_lea.vmem %s0, %s310
      $region52: #{siam_uav_forward.1} parent=47 // pred_fallthru
        _
      // Predicated region
      $region53: #{siam_uav_forward.1} parent=47 // pred_check
        %p312 = pneg %p62
      $region54: #{siam_uav_forward.1} parent=47 // pred_check_branch
        %314 = sbr.rel (%p312) target = $region56
      $region55: #{siam_uav_forward.1} parent=47 // pred_region
        %p315 = scmp.lt.s32.totalorder %s16, 1
        %s316 = scalar_select %p315, %s16, 1
        %s317 = smul.addr %s316, 4
        %s318 = smul.addr %s317, 8
        %s319 = scalar_lea.vmem %s1, %s318
      $region56: #{siam_uav_forward.1} parent=47 // pred_fallthru
        _
    $region48: #{siam_uav_forward.1} parent=5 // pred_fallthru
      _
    %p320 = scmp.le.s32.totalorder 1, %s16
    %p321 = scmp.lt.s32.totalorder %s16, 3
    %p322 = pnand %p320, %p321
    %p323 = pneg %p322
    // Predicated region
    $region57: #{siam_uav_forward.1} parent=5 // pred_check
      _
    $region58: #{siam_uav_forward.1} parent=5 // pred_check_branch
      %325 = sbr.rel (%p322) target = $region60
    $region59: #{siam_uav_forward.1} parent=5 // pred_region
      %s326 = ssub.s32 %s16, 1
      %p327 = scmp.lt.s32.totalorder %s21, 1
      %s328 = scalar_select %p327, %s21, 1
      %s329 = smul.addr %s328, 8
      %s330 = scalar_lea.vmem %s0, %s329
      %p331 = pneg %p42
      %p332 = pneg %p39
      %p333 = scmp.lt.s32.totalorder %s21, 1
      %s334 = scalar_select %p333, %s21, 1
      %s335 = smul.addr %s334, 4
      %s336 = smul.addr %s335, 8
      %s337 = scalar_lea.vmem %s1, %s336
      %p338 = pneg %p68
      %p339 = pneg %p65
      %p340 = pneg %p89
      %p341 = pneg %p86
      %p342 = pneg %p110
      %p343 = pneg %p107
      %p344 = pneg %p131
      %p345 = pneg %p128
      %p346 = pneg %p152
      %p347 = pneg %p149
      %p348 = pneg %p173
      %p349 = pneg %p170
      %p350 = pneg %p194
      %p351 = pneg %p191
      %p352 = pneg %p215
      %p353 = pneg %p212
      %p354 = pneg %p236
      %p355 = pneg %p233
      %p356 = pneg %p262
      %p357 = pneg %p259
      %p358 = scmp.lt.s32.totalorder %s21, 1
      %s359 = scalar_select %p358, %s21, 1
      %s360 = smul.addr %s359, 8
      %s361 = scalar_lea.vmem %s10, %s360
      %p362 = scmp.lt.s32.totalorder %s21, 1
      %s363 = scalar_select %p362, %s21, 1
      %s364 = smul.addr %s363, 8
      %s365 = scalar_lea.vmem %s0, %s364
      %p366 = scmp.lt.s32.totalorder %s21, 1
      %s367 = scalar_select %p366, %s21, 1
      %s368 = smul.addr %s367, 4
      %s369 = smul.addr %s368, 8
      %s370 = scalar_lea.vmem %s1, %s369
      %p371 = scmp.lt.s32.totalorder %s21, 1
      %s372 = scalar_select %p371, %s21, 1
      %s373 = smul.addr %s372, 8
      %s374 = scalar_lea.vmem %s10, %s373
      %v376 = vld [vmem:[%s365] sm:$0x7f]
      %v377 = vpack.c.bf16 %v376, %v376
      %v378 = vld [vmem:[%s2] sm:$0xf]
      %v379 = vld [vmem:[%s2 + $0x4] sm:$0xf]
      %v380 = vld [vmem:[%s2 + $0x8] sm:$0xf]
      %v381 = vld [vmem:[%s2 + $0xc] sm:$0xf]
      %v382 = vld [vmem:[%s2 + $0x10] sm:$0xf]
      %v383 = vld [vmem:[%s2 + $0x14] sm:$0x1]
      %s384 = scalar_lea.vmem %s2, 24
      %v385 = vld [vmem:[%s384] sm:$0xf]
      %v386 = vld [vmem:[%s384 + $0x4] sm:$0xf]
      %v387 = vld [vmem:[%s384 + $0x8] sm:$0xf]
      %v388 = vld [vmem:[%s384 + $0xc] sm:$0xf]
      %v389 = vld [vmem:[%s384 + $0x10] sm:$0xf]
      %v390 = vld [vmem:[%s384 + $0x14] sm:$0x1]
      %392 = vrot.lane.b32.xlu0 %v377, 122
      %v393 = vpop.permute.xlu0 %392
      %v400 = vunpack.c.l.b16 %v385
      %v401 = vunpack.c.l.b16 %v386
      %v402 = vunpack.c.l.b16 %v387
      %v403 = vunpack.c.l.b16 %v388
      %v404 = vunpack.c.l.b16 %v389
      %v405 = vunpack.c.l.b16 %v390
      %v406 = vpack.c.b16 %v401, %v400
      %v407 = vpack.c.b16 %v403, %v402
      %v408 = vpack.c.b16 %v405, %v404
      %vm411 = vcmask 343040
      %v413 = vsel %vm411, %v393, 0
      %vm415 = vcmask 1044480
      %v417 = vsel %vm415, %v408, 0
      %419 = vmatprep.subr.bf16.mxu0 0
      %420 = vmatpush1.bf16.msra.mxu0 0
      %421 = vmatprep.subr.bf16.mxu0 0
      %422 = vmatpush1.bf16.msra.mxu0 0
      %423 = vmatprep.subr.bf16.mxu0 0
      %424 = vmatpush1.bf16.msra.mxu0 0
      %425 = vmatprep.subr.bf16.mxu0 0
      %426 = vmatpush1.bf16.msra.mxu0 0
      %427 = vmatprep.subr.bf16.mxu0 0
      %428 = vmatpush1.bf16.msra.mxu0 0
      %429 = vmatprep.subr.bf16.mxu0 0
      %430 = vmatpush1.bf16.msra.mxu0 %v417
      %431 = vmatprep.subr.bf16.mxu0 0
      %432 = vmatpush1.bf16.msra.mxu0 %v407
      %433 = vmatprep.subr.bf16.mxu0 0
      %434 = vmatpush1.bf16.msra.mxu0 %v406
      %435 = vmatprep.subr.bf16.mxu0 0
      %436 = vmatpush2.bf16.msra.mxu0 0
      %437 = vmatprep.subr.bf16.mxu0 0
      %438 = vmatpush2.bf16.msra.mxu0 0
      %439 = vmatprep.subr.bf16.mxu0 0
      %440 = vmatpush2.bf16.msra.mxu0 0
      %441 = vmatprep.subr.bf16.mxu0 0
      %442 = vmatpush2.bf16.msra.mxu0 0
      %443 = vmatprep.subr.bf16.mxu0 0
      %444 = vmatpush2.bf16.msra.mxu0 0
      %445 = vmatprep.subr.bf16.mxu0 0
      %446 = vmatpush2.bf16.msra.mxu0 0
      %447 = vmatprep.subr.bf16.mxu0 0
      %448 = vmatpush2.bf16.msra.mxu0 0
      %449 = vmatprep.subr.bf16.mxu0 0
      %450 = vmatpush2.bf16.msra.mxu0 0
      %451 = vmatprep.mubr.bf16.mxu0 0
      %452 = vmatmul.mubr.bf16.gmra.mxu0 %v413
      %v453 = vpop.f32.mrf.mxu0
      %v454 = vadd.f32 0.0, %v453
      %v455 = vpop.f32.mrf.mxu0
      %v456 = vpop.f32.mrf.mxu0
      %v457 = vpop.f32.mrf.mxu0
      %458 = vdwg.mxu0
      %v465 = vunpack.c.l.b16 %v378
      %v466 = vunpack.c.l.b16 %v379
      %v467 = vunpack.c.l.b16 %v380
      %v468 = vunpack.c.l.b16 %v381
      %v469 = vunpack.c.l.b16 %v382
      %v470 = vunpack.c.l.b16 %v383
      %v471 = vpack.c.b16 %v466, %v465
      %v472 = vpack.c.b16 %v468, %v467
      %v473 = vpack.c.b16 %v470, %v469
      %v477 = vsel %vm411, %v377, 0
      %v480 = vsel %vm415, %v473, 0
      %482 = vmatprep.subr.bf16.mxu0 0
      %483 = vmatpush1.bf16.msra.mxu0 0
      %484 = vmatprep.subr.bf16.mxu0 0
      %485 = vmatpush1.bf16.msra.mxu0 0
      %486 = vmatprep.subr.bf16.mxu0 0
      %487 = vmatpush1.bf16.msra.mxu0 0
      %488 = vmatprep.subr.bf16.mxu0 0
      %489 = vmatpush1.bf16.msra.mxu0 0
      %490 = vmatprep.subr.bf16.mxu0 0
      %491 = vmatpush1.bf16.msra.mxu0 0
      %492 = vmatprep.subr.bf16.mxu0 0
      %493 = vmatpush1.bf16.msra.mxu0 %v480
      %494 = vmatprep.subr.bf16.mxu0 0
      %495 = vmatpush1.bf16.msra.mxu0 %v472
      %496 = vmatprep.subr.bf16.mxu0 0
      %497 = vmatpush1.bf16.msra.mxu0 %v471
      %498 = vmatprep.subr.bf16.mxu0 0
      %499 = vmatpush2.bf16.msra.mxu0 0
      %500 = vmatprep.subr.bf16.mxu0 0
      %501 = vmatpush2.bf16.msra.mxu0 0
      %502 = vmatprep.subr.bf16.mxu0 0
      %503 = vmatpush2.bf16.msra.mxu0 0
      %504 = vmatprep.subr.bf16.mxu0 0
      %505 = vmatpush2.bf16.msra.mxu0 0
      %506 = vmatprep.subr.bf16.mxu0 0
      %507 = vmatpush2.bf16.msra.mxu0 0
      %508 = vmatprep.subr.bf16.mxu0 0
      %509 = vmatpush2.bf16.msra.mxu0 0
      %510 = vmatprep.subr.bf16.mxu0 0
      %511 = vmatpush2.bf16.msra.mxu0 0
      %512 = vmatprep.subr.bf16.mxu0 0
      %513 = vmatpush2.bf16.msra.mxu0 0
      %514 = vmatprep.mubr.bf16.mxu0 0
      %515 = vmatmul.mubr.bf16.gmra.mxu0 %v477
      %v516 = vpop.f32.mrf.mxu0
      %v517 = vadd.f32 %v454, %v516
      %v518 = vpop.f32.mrf.mxu0
      %v519 = vpop.f32.mrf.mxu0
      %v520 = vpop.f32.mrf.mxu0
      %521 = vdwg.mxu0
      %s522 = scalar_lea.vmem %s2, 48
      %v523 = vld [vmem:[%s522] sm:$0xf]
      %v524 = vld [vmem:[%s522 + $0x4] sm:$0xf]
      %v525 = vld [vmem:[%s522 + $0x8] sm:$0xf]
      %v526 = vld [vmem:[%s522 + $0xc] sm:$0xf]
      %v527 = vld [vmem:[%s522 + $0x10] sm:$0xf]
      %v528 = vld [vmem:[%s522 + $0x14] sm:$0x1]
      %529 = vrot.lane.b32.xlu0 %v377, 80
      %v530 = vpop.permute.xlu0 %529
      %v537 = vunpack.c.l.b16 %v523
      %v538 = vunpack.c.l.b16 %v524
      %v539 = vunpack.c.l.b16 %v525
      %v540 = vunpack.c.l.b16 %v526
      %v541 = vunpack.c.l.b16 %v527
      %v542 = vunpack.c.l.b16 %v528
      %v543 = vpack.c.b16 %v538, %v537
      %v544 = vpack.c.b16 %v540, %v539
      %v545 = vpack.c.b16 %v542, %v541
      %v549 = vsel %vm411, %v530, 0
      %v552 = vsel %vm415, %v545, 0
      %554 = vmatprep.subr.bf16.mxu0 0
      %555 = vmatpush1.bf16.msra.mxu0 0
      %556 = vmatprep.subr.bf16.mxu0 0
      %557 = vmatpush1.bf16.msra.mxu0 0
      %558 = vmatprep.subr.bf16.mxu0 0
      %559 = vmatpush1.bf16.msra.mxu0 0
      %560 = vmatprep.subr.bf16.mxu0 0
      %561 = vmatpush1.bf16.msra.mxu0 0
      %562 = vmatprep.subr.bf16.mxu0 0
      %563 = vmatpush1.bf16.msra.mxu0 0
      %564 = vmatprep.subr.bf16.mxu0 0
      %565 = vmatpush1.bf16.msra.mxu0 %v552
      %566 = vmatprep.subr.bf16.mxu0 0
      %567 = vmatpush1.bf16.msra.mxu0 %v544
      %568 = vmatprep.subr.bf16.mxu0 0
      %569 = vmatpush1.bf16.msra.mxu0 %v543
      %570 = vmatprep.subr.bf16.mxu0 0
      %571 = vmatpush2.bf16.msra.mxu0 0
      %572 = vmatprep.subr.bf16.mxu0 0
      %573 = vmatpush2.bf16.msra.mxu0 0
      %574 = vmatprep.subr.bf16.mxu0 0
      %575 = vmatpush2.bf16.msra.mxu0 0
      %576 = vmatprep.subr.bf16.mxu0 0
      %577 = vmatpush2.bf16.msra.mxu0 0
      %578 = vmatprep.subr.bf16.mxu0 0
      %579 = vmatpush2.bf16.msra.mxu0 0
      %580 = vmatprep.subr.bf16.mxu0 0
      %581 = vmatpush2.bf16.msra.mxu0 0
      %582 = vmatprep.subr.bf16.mxu0 0
      %583 = vmatpush2.bf16.msra.mxu0 0
      %584 = vmatprep.subr.bf16.mxu0 0
      %585 = vmatpush2.bf16.msra.mxu0 0
      %586 = vmatprep.mubr.bf16.mxu0 0
      %587 = vmatmul.mubr.bf16.gmra.mxu0 %v549
      %v588 = vpop.f32.mrf.mxu0
      %v589 = vadd.f32 0.0, %v588
      %v590 = vpop.f32.mrf.mxu0
      %v591 = vpop.f32.mrf.mxu0
      %v592 = vpop.f32.mrf.mxu0
      %593 = vdwg.mxu0
      %v594 = vadd.f32 %v517, %v589
      %s595 = scalar_lea.vmem %s2, 72
      %v596 = vld [vmem:[%s595] sm:$0xf]
      %v597 = vld [vmem:[%s595 + $0x4] sm:$0xf]
      %v598 = vld [vmem:[%s595 + $0x8] sm:$0xf]
      %v599 = vld [vmem:[%s595 + $0xc] sm:$0xf]
      %v600 = vld [vmem:[%s595 + $0x10] sm:$0xf]
      %v601 = vld [vmem:[%s595 + $0x14] sm:$0x1]
      %602 = vrot.lane.b32.xlu0 %v377, 74
      %v603 = vpop.permute.xlu0 %602
      %v610 = vunpack.c.l.b16 %v596
      %v611 = vunpack.c.l.b16 %v597
      %v612 = vunpack.c.l.b16 %v598
      %v613 = vunpack.c.l.b16 %v599
      %v614 = vunpack.c.l.b16 %v600
      %v615 = vunpack.c.l.b16 %v601
      %v616 = vpack.c.b16 %v611, %v610
      %v617 = vpack.c.b16 %v613, %v612
      %v618 = vpack.c.b16 %v615, %v614
      %v622 = vsel %vm411, %v603, 0
      %v625 = vsel %vm415, %v618, 0
      %627 = vmatprep.subr.bf16.mxu0 0
      %628 = vmatpush1.bf16.msra.mxu0 0
      %629 = vmatprep.subr.bf16.mxu0 0
      %630 = vmatpush1.bf16.msra.mxu0 0
      %631 = vmatprep.subr.bf16.mxu0 0
      %632 = vmatpush1.bf16.msra.mxu0 0
      %633 = vmatprep.subr.bf16.mxu0 0
      %634 = vmatpush1.bf16.msra.mxu0 0
      %635 = vmatprep.subr.bf16.mxu0 0
      %636 = vmatpush1.bf16.msra.mxu0 0
      %637 = vmatprep.subr.bf16.mxu0 0
      %638 = vmatpush1.bf16.msra.mxu0 %v625
      %639 = vmatprep.subr.bf16.mxu0 0
      %640 = vmatpush1.bf16.msra.mxu0 %v617
      %641 = vmatprep.subr.bf16.mxu0 0
      %642 = vmatpush1.bf16.msra.mxu0 %v616
      %643 = vmatprep.subr.bf16.mxu0 0
      %644 = vmatpush2.bf16.msra.mxu0 0
      %645 = vmatprep.subr.bf16.mxu0 0
      %646 = vmatpush2.bf16.msra.mxu0 0
      %647 = vmatprep.subr.bf16.mxu0 0
      %648 = vmatpush2.bf16.msra.mxu0 0
      %649 = vmatprep.subr.bf16.mxu0 0
      %650 = vmatpush2.bf16.msra.mxu0 0
      %651 = vmatprep.subr.bf16.mxu0 0
      %652 = vmatpush2.bf16.msra.mxu0 0
      %653 = vmatprep.subr.bf16.mxu0 0
      %654 = vmatpush2.bf16.msra.mxu0 0
      %655 = vmatprep.subr.bf16.mxu0 0
      %656 = vmatpush2.bf16.msra.mxu0 0
      %657 = vmatprep.subr.bf16.mxu0 0
      %658 = vmatpush2.bf16.msra.mxu0 0
      %659 = vmatprep.mubr.bf16.mxu0 0
      %660 = vmatmul.mubr.bf16.gmra.mxu0 %v622
      %v661 = vpop.f32.mrf.mxu0
      %v662 = vadd.f32 0.0, %v661
      %v663 = vpop.f32.mrf.mxu0
      %v664 = vpop.f32.mrf.mxu0
      %v665 = vpop.f32.mrf.mxu0
      %666 = vdwg.mxu0
      %v667 = vadd.f32 %v594, %v662
      %v668 = vld [vmem:[%s365 + $0x1] sm:$0x7f]
      %v669 = vpack.c.bf16 %v668, %v668
      %s670 = scalar_lea.vmem %s2, 96
      %v671 = vld [vmem:[%s670] sm:$0xf]
      %v672 = vld [vmem:[%s670 + $0x4] sm:$0xf]
      %v673 = vld [vmem:[%s670 + $0x8] sm:$0xf]
      %v674 = vld [vmem:[%s670 + $0xc] sm:$0xf]
      %v675 = vld [vmem:[%s670 + $0x10] sm:$0xf]
      %v676 = vld [vmem:[%s670 + $0x14] sm:$0x1]
      %v683 = vunpack.c.l.b16 %v671
      %v684 = vunpack.c.l.b16 %v672
      %v685 = vunpack.c.l.b16 %v673
      %v686 = vunpack.c.l.b16 %v674
      %v687 = vunpack.c.l.b16 %v675
      %v688 = vunpack.c.l.b16 %v676
      %v689 = vpack.c.b16 %v684, %v683
      %v690 = vpack.c.b16 %v686, %v685
      %v691 = vpack.c.b16 %v688, %v687
      %v695 = vsel %vm411, %v669, 0
      %v698 = vsel %vm415, %v691, 0
      %700 = vmatprep.subr.bf16.mxu0 0
      %701 = vmatpush1.bf16.msra.mxu0 0
      %702 = vmatprep.subr.bf16.mxu0 0
      %703 = vmatpush1.bf16.msra.mxu0 0
      %704 = vmatprep.subr.bf16.mxu0 0
      %705 = vmatpush1.bf16.msra.mxu0 0
      %706 = vmatprep.subr.bf16.mxu0 0
      %707 = vmatpush1.bf16.msra.mxu0 0
      %708 = vmatprep.subr.bf16.mxu0 0
      %709 = vmatpush1.bf16.msra.mxu0 0
      %710 = vmatprep.subr.bf16.mxu0 0
      %711 = vmatpush1.bf16.msra.mxu0 %v698
      %712 = vmatprep.subr.bf16.mxu0 0
      %713 = vmatpush1.bf16.msra.mxu0 %v690
      %714 = vmatprep.subr.bf16.mxu0 0
      %715 = vmatpush1.bf16.msra.mxu0 %v689
      %716 = vmatprep.subr.bf16.mxu0 0
      %717 = vmatpush2.bf16.msra.mxu0 0
      %718 = vmatprep.subr.bf16.mxu0 0
      %719 = vmatpush2.bf16.msra.mxu0 0
      %720 = vmatprep.subr.bf16.mxu0 0
      %721 = vmatpush2.bf16.msra.mxu0 0
      %722 = vmatprep.subr.bf16.mxu0 0
      %723 = vmatpush2.bf16.msra.mxu0 0
      %724 = vmatprep.subr.bf16.mxu0 0
      %725 = vmatpush2.bf16.msra.mxu0 0
      %726 = vmatprep.subr.bf16.mxu0 0
      %727 = vmatpush2.bf16.msra.mxu0 0
      %728 = vmatprep.subr.bf16.mxu0 0
      %729 = vmatpush2.bf16.msra.mxu0 0
      %730 = vmatprep.subr.bf16.mxu0 0
      %731 = vmatpush2.bf16.msra.mxu0 0
      %732 = vmatprep.mubr.bf16.mxu0 0
      %733 = vmatmul.mubr.bf16.gmra.mxu0 %v695
      %v734 = vpop.f32.mrf.mxu0
      %v735 = vadd.f32 0.0, %v734
      %v736 = vpop.f32.mrf.mxu0
      %v737 = vpop.f32.mrf.mxu0
      %v738 = vpop.f32.mrf.mxu0
      %739 = vdwg.mxu0
      %v740 = vadd.f32 %v667, %v735
      %s741 = scalar_lea.vmem %s2, 120
      %v742 = vld [vmem:[%s741] sm:$0xf]
      %v743 = vld [vmem:[%s741 + $0x4] sm:$0xf]
      %v744 = vld [vmem:[%s741 + $0x8] sm:$0xf]
      %v745 = vld [vmem:[%s741 + $0xc] sm:$0xf]
      %v746 = vld [vmem:[%s741 + $0x10] sm:$0xf]
      %v747 = vld [vmem:[%s741 + $0x14] sm:$0x1]
      %749 = vrot.lane.b32.xlu0 %v669, 122
      %v750 = vpop.permute.xlu0 %749
      %v757 = vunpack.c.l.b16 %v742
      %v758 = vunpack.c.l.b16 %v743
      %v759 = vunpack.c.l.b16 %v744
      %v760 = vunpack.c.l.b16 %v745
      %v761 = vunpack.c.l.b16 %v746
      %v762 = vunpack.c.l.b16 %v747
      %v763 = vpack.c.b16 %v758, %v757
      %v764 = vpack.c.b16 %v760, %v759
      %v765 = vpack.c.b16 %v762, %v761
      %v769 = vsel %vm411, %v750, 0
      %v772 = vsel %vm415, %v765, 0
      %774 = vmatprep.subr.bf16.mxu0 0
      %775 = vmatpush1.bf16.msra.mxu0 0
      %776 = vmatprep.subr.bf16.mxu0 0
      %777 = vmatpush1.bf16.msra.mxu0 0
      %778 = vmatprep.subr.bf16.mxu0 0
      %779 = vmatpush1.bf16.msra.mxu0 0
      %780 = vmatprep.subr.bf16.mxu0 0
      %781 = vmatpush1.bf16.msra.mxu0 0
      %782 = vmatprep.subr.bf16.mxu0 0
      %783 = vmatpush1.bf16.msra.mxu0 0
      %784 = vmatprep.subr.bf16.mxu0 0
      %785 = vmatpush1.bf16.msra.mxu0 %v772
      %786 = vmatprep.subr.bf16.mxu0 0
      %787 = vmatpush1.bf16.msra.mxu0 %v764
      %788 = vmatprep.subr.bf16.mxu0 0
      %789 = vmatpush1.bf16.msra.mxu0 %v763
      %790 = vmatprep.subr.bf16.mxu0 0
      %791 = vmatpush2.bf16.msra.mxu0 0
      %792 = vmatprep.subr.bf16.mxu0 0
      %793 = vmatpush2.bf16.msra.mxu0 0
      %794 = vmatprep.subr.bf16.mxu0 0
      %795 = vmatpush2.bf16.msra.mxu0 0
      %796 = vmatprep.subr.bf16.mxu0 0
      %797 = vmatpush2.bf16.msra.mxu0 0
      %798 = vmatprep.subr.bf16.mxu0 0
      %799 = vmatpush2.bf16.msra.mxu0 0
      %800 = vmatprep.subr.bf16.mxu0 0
      %801 = vmatpush2.bf16.msra.mxu0 0
      %802 = vmatprep.subr.bf16.mxu0 0
      %803 = vmatpush2.bf16.msra.mxu0 0
      %804 = vmatprep.subr.bf16.mxu0 0
      %805 = vmatpush2.bf16.msra.mxu0 0
      %806 = vmatprep.mubr.bf16.mxu0 0
      %807 = vmatmul.mubr.bf16.gmra.mxu0 %v769
      %v808 = vpop.f32.mrf.mxu0
      %v809 = vadd.f32 0.0, %v808
      %v810 = vpop.f32.mrf.mxu0
      %v811 = vpop.f32.mrf.mxu0
      %v812 = vpop.f32.mrf.mxu0
      %813 = vdwg.mxu0
      %v814 = vadd.f32 %v740, %v809
      %v815 = vld [vmem:[%s3] sm:$0x1]
      %v817 = vlaneseq
      %v818 = vshrl.u32 %v817, 7
      %v819 = vsub.s32 0, %v818
      %v820 = vrot.slane %v815, %v819
      %v822 = vadd.f32 %v814, %v820
      %v823 = vmax.f32 %v822, 0.0
      %vm824 = vcmask 456704
      %825 = vst.msk [vmem:[#allocation2] sm:$0x7f] %vm824, %v823
      %v826 = vld [vmem:[#allocation2] sm:$0x1f]
      %v827 = vpack.c.bf16 %v826, %v826
      %v828 = vld [vmem:[%s4] sm:$0xf]
      %v829 = vld [vmem:[%s4 + $0x4] sm:$0xf]
      %v830 = vld [vmem:[%s4 + $0x8] sm:$0xf]
      %v831 = vld [vmem:[%s4 + $0xc] sm:$0xf]
      %v832 = vld [vmem:[%s4 + $0x10] sm:$0xf]
      %s833 = scalar_lea.vmem %s4, 20
      %v834 = vld [vmem:[%s833] sm:$0xf]
      %v835 = vld [vmem:[%s833 + $0x4] sm:$0xf]
      %v836 = vld [vmem:[%s833 + $0x8] sm:$0xf]
      %v837 = vld [vmem:[%s833 + $0xc] sm:$0xf]
      %v838 = vld [vmem:[%s833 + $0x10] sm:$0xf]
      %840 = vrot.lane.b32.xlu0 %v827, 120
      %v841 = vpop.permute.xlu0 %840
      %v847 = vunpack.c.l.b16 %v834
      %v848 = vunpack.c.l.b16 %v835
      %v849 = vunpack.c.l.b16 %v836
      %v850 = vunpack.c.l.b16 %v837
      %v851 = vunpack.c.l.b16 %v838
      %v852 = vpack.c.b16 %v848, %v847
      %v853 = vpack.c.b16 %v850, %v849
      %v854 = vpack.c.b16 %v851, %v851
      %vm857 = vcmask 326656
      %v859 = vsel %vm857, %v841, 0
      %vm861 = vcmask 1043456
      %v863 = vsel %vm861, %v854, 0
      %865 = vmatprep.subr.bf16.mxu0 0
      %866 = vmatpush1.bf16.msra.mxu0 0
      %867 = vmatprep.subr.bf16.mxu0 0
      %868 = vmatpush1.bf16.msra.mxu0 0
      %869 = vmatprep.subr.bf16.mxu0 0
      %870 = vmatpush1.bf16.msra.mxu0 0
      %871 = vmatprep.subr.bf16.mxu0 0
      %872 = vmatpush1.bf16.msra.mxu0 0
      %873 = vmatprep.subr.bf16.mxu0 0
      %874 = vmatpush1.bf16.msra.mxu0 0
      %875 = vmatprep.subr.bf16.mxu0 0
      %876 = vmatpush1.bf16.msra.mxu0 %v863
      %877 = vmatprep.subr.bf16.mxu0 0
      %878 = vmatpush1.bf16.msra.mxu0 %v853
      %879 = vmatprep.subr.bf16.mxu0 0
      %880 = vmatpush1.bf16.msra.mxu0 %v852
      %881 = vmatprep.subr.bf16.mxu0 0
      %882 = vmatpush2.bf16.msra.mxu0 0
      %883 = vmatprep.subr.bf16.mxu0 0
      %884 = vmatpush2.bf16.msra.mxu0 0
      %885 = vmatprep.subr.bf16.mxu0 0
      %886 = vmatpush2.bf16.msra.mxu0 0
      %887 = vmatprep.subr.bf16.mxu0 0
      %888 = vmatpush2.bf16.msra.mxu0 0
      %889 = vmatprep.subr.bf16.mxu0 0
      %890 = vmatpush2.bf16.msra.mxu0 0
      %891 = vmatprep.subr.bf16.mxu0 0
      %892 = vmatpush2.bf16.msra.mxu0 0
      %893 = vmatprep.subr.bf16.mxu0 0
      %894 = vmatpush2.bf16.msra.mxu0 0
      %895 = vmatprep.subr.bf16.mxu0 0
      %896 = vmatpush2.bf16.msra.mxu0 0
      %897 = vmatprep.mubr.bf16.mxu0 0
      %898 = vmatmul.mubr.bf16.gmra.mxu0 %v859
      %v899 = vpop.f32.mrf.mxu0
      %v900 = vadd.f32 0.0, %v899
      %v901 = vpop.f32.mrf.mxu0
      %v902 = vpop.f32.mrf.mxu0
      %v903 = vpop.f32.mrf.mxu0
      %904 = vdwg.mxu0
      %v910 = vunpack.c.l.b16 %v828
      %v911 = vunpack.c.l.b16 %v829
      %v912 = vunpack.c.l.b16 %v830
      %v913 = vunpack.c.l.b16 %v831
      %v914 = vunpack.c.l.b16 %v832
      %v915 = vpack.c.b16 %v911, %v910
      %v916 = vpack.c.b16 %v913, %v912
      %v917 = vpack.c.b16 %v914, %v914
      %v921 = vsel %vm857, %v827, 0
      %v924 = vsel %vm861, %v917, 0
      %926 = vmatprep.subr.bf16.mxu0 0
      %927 = vmatpush1.bf16.msra.mxu0 0
      %928 = vmatprep.subr.bf16.mxu0 0
      %929 = vmatpush1.bf16.msra.mxu0 0
      %930 = vmatprep.subr.bf16.mxu0 0
      %931 = vmatpush1.bf16.msra.mxu0 0
      %932 = vmatprep.subr.bf16.mxu0 0
      %933 = vmatpush1.bf16.msra.mxu0 0
      %934 = vmatprep.subr.bf16.mxu0 0
      %935 = vmatpush1.bf16.msra.mxu0 0
      %936 = vmatprep.subr.bf16.mxu0 0
      %937 = vmatpush1.bf16.msra.mxu0 %v924
      %938 = vmatprep.subr.bf16.mxu0 0
      %939 = vmatpush1.bf16.msra.mxu0 %v916
      %940 = vmatprep.subr.bf16.mxu0 0
      %941 = vmatpush1.bf16.msra.mxu0 %v915
      %942 = vmatprep.subr.bf16.mxu0 0
      %943 = vmatpush2.bf16.msra.mxu0 0
      %944 = vmatprep.subr.bf16.mxu0 0
      %945 = vmatpush2.bf16.msra.mxu0 0
      %946 = vmatprep.subr.bf16.mxu0 0
      %947 = vmatpush2.bf16.msra.mxu0 0
      %948 = vmatprep.subr.bf16.mxu0 0
      %949 = vmatpush2.bf16.msra.mxu0 0
      %950 = vmatprep.subr.bf16.mxu0 0
      %951 = vmatpush2.bf16.msra.mxu0 0
      %952 = vmatprep.subr.bf16.mxu0 0
      %953 = vmatpush2.bf16.msra.mxu0 0
      %954 = vmatprep.subr.bf16.mxu0 0
      %955 = vmatpush2.bf16.msra.mxu0 0
      %956 = vmatprep.subr.bf16.mxu0 0
      %957 = vmatpush2.bf16.msra.mxu0 0
      %958 = vmatprep.mubr.bf16.mxu0 0
      %959 = vmatmul.mubr.bf16.gmra.mxu0 %v921
      %v960 = vpop.f32.mrf.mxu0
      %v961 = vadd.f32 %v900, %v960
      %v962 = vpop.f32.mrf.mxu0
      %v963 = vpop.f32.mrf.mxu0
      %v964 = vpop.f32.mrf.mxu0
      %965 = vdwg.mxu0
      %s966 = scalar_lea.vmem %s4, 40
      %v967 = vld [vmem:[%s966] sm:$0xf]
      %v968 = vld [vmem:[%s966 + $0x4] sm:$0xf]
      %v969 = vld [vmem:[%s966 + $0x8] sm:$0xf]
      %v970 = vld [vmem:[%s966 + $0xc] sm:$0xf]
      %v971 = vld [vmem:[%s966 + $0x10] sm:$0xf]
      %972 = vrot.lane.b32.xlu0 %v827, 112
      %v973 = vpop.permute.xlu0 %972
      %v979 = vunpack.c.l.b16 %v967
      %v980 = vunpack.c.l.b16 %v968
      %v981 = vunpack.c.l.b16 %v969
      %v982 = vunpack.c.l.b16 %v970
      %v983 = vunpack.c.l.b16 %v971
      %v984 = vpack.c.b16 %v980, %v979
      %v985 = vpack.c.b16 %v982, %v981
      %v986 = vpack.c.b16 %v983, %v983
      %v990 = vsel %vm857, %v973, 0
      %v993 = vsel %vm861, %v986, 0
      %995 = vmatprep.subr.bf16.mxu0 0
      %996 = vmatpush1.bf16.msra.mxu0 0
      %997 = vmatprep.subr.bf16.mxu0 0
      %998 = vmatpush1.bf16.msra.mxu0 0
      %999 = vmatprep.subr.bf16.mxu0 0
      %1000 = vmatpush1.bf16.msra.mxu0 0
      %1001 = vmatprep.subr.bf16.mxu0 0
      %1002 = vmatpush1.bf16.msra.mxu0 0
      %1003 = vmatprep.subr.bf16.mxu0 0
      %1004 = vmatpush1.bf16.msra.mxu0 0
      %1005 = vmatprep.subr.bf16.mxu0 0
      %1006 = vmatpush1.bf16.msra.mxu0 %v993
      %1007 = vmatprep.subr.bf16.mxu0 0
      %1008 = vmatpush1.bf16.msra.mxu0 %v985
      %1009 = vmatprep.subr.bf16.mxu0 0
      %1010 = vmatpush1.bf16.msra.mxu0 %v984
      %1011 = vmatprep.subr.bf16.mxu0 0
      %1012 = vmatpush2.bf16.msra.mxu0 0
      %1013 = vmatprep.subr.bf16.mxu0 0
      %1014 = vmatpush2.bf16.msra.mxu0 0
      %1015 = vmatprep.subr.bf16.mxu0 0
      %1016 = vmatpush2.bf16.msra.mxu0 0
      %1017 = vmatprep.subr.bf16.mxu0 0
      %1018 = vmatpush2.bf16.msra.mxu0 0
      %1019 = vmatprep.subr.bf16.mxu0 0
      %1020 = vmatpush2.bf16.msra.mxu0 0
      %1021 = vmatprep.subr.bf16.mxu0 0
      %1022 = vmatpush2.bf16.msra.mxu0 0
      %1023 = vmatprep.subr.bf16.mxu0 0
      %1024 = vmatpush2.bf16.msra.mxu0 0
      %1025 = vmatprep.subr.bf16.mxu0 0
      %1026 = vmatpush2.bf16.msra.mxu0 0
      %1027 = vmatprep.mubr.bf16.mxu0 0
      %1028 = vmatmul.mubr.bf16.gmra.mxu0 %v990
      %v1029 = vpop.f32.mrf.mxu0
      %v1030 = vadd.f32 0.0, %v1029
      %v1031 = vpop.f32.mrf.mxu0
      %v1032 = vpop.f32.mrf.mxu0
      %v1033 = vpop.f32.mrf.mxu0
      %1034 = vdwg.mxu0
      %v1035 = vadd.f32 %v961, %v1030
      %v1036 = vld [vmem:[#allocation2 + $0x1] sm:$0x1f]
      %v1037 = vpack.c.bf16 %v1036, %v1036
      %s1038 = scalar_lea.vmem %s4, 60
      %v1039 = vld [vmem:[%s1038] sm:$0xf]
      %v1040 = vld [vmem:[%s1038 + $0x4] sm:$0xf]
      %v1041 = vld [vmem:[%s1038 + $0x8] sm:$0xf]
      %v1042 = vld [vmem:[%s1038 + $0xc] sm:$0xf]
      %v1043 = vld [vmem:[%s1038 + $0x10] sm:$0xf]
      %v1049 = vunpack.c.l.b16 %v1039
      %v1050 = vunpack.c.l.b16 %v1040
      %v1051 = vunpack.c.l.b16 %v1041
      %v1052 = vunpack.c.l.b16 %v1042
      %v1053 = vunpack.c.l.b16 %v1043
      %v1054 = vpack.c.b16 %v1050, %v1049
      %v1055 = vpack.c.b16 %v1052, %v1051
      %v1056 = vpack.c.b16 %v1053, %v1053
      %v1060 = vsel %vm857, %v1037, 0
      %v1063 = vsel %vm861, %v1056, 0
      %1065 = vmatprep.subr.bf16.mxu0 0
      %1066 = vmatpush1.bf16.msra.mxu0 0
      %1067 = vmatprep.subr.bf16.mxu0 0
      %1068 = vmatpush1.bf16.msra.mxu0 0
      %1069 = vmatprep.subr.bf16.mxu0 0
      %1070 = vmatpush1.bf16.msra.mxu0 0
      %1071 = vmatprep.subr.bf16.mxu0 0
      %1072 = vmatpush1.bf16.msra.mxu0 0
      %1073 = vmatprep.subr.bf16.mxu0 0
      %1074 = vmatpush1.bf16.msra.mxu0 0
      %1075 = vmatprep.subr.bf16.mxu0 0
      %1076 = vmatpush1.bf16.msra.mxu0 %v1063
      %1077 = vmatprep.subr.bf16.mxu0 0
      %1078 = vmatpush1.bf16.msra.mxu0 %v1055
      %1079 = vmatprep.subr.bf16.mxu0 0
      %1080 = vmatpush1.bf16.msra.mxu0 %v1054
      %1081 = vmatprep.subr.bf16.mxu0 0
      %1082 = vmatpush2.bf16.msra.mxu0 0
      %1083 = vmatprep.subr.bf16.mxu0 0
      %1084 = vmatpush2.bf16.msra.mxu0 0
      %1085 = vmatprep.subr.bf16.mxu0 0
      %1086 = vmatpush2.bf16.msra.mxu0 0
      %1087 = vmatprep.subr.bf16.mxu0 0
      %1088 = vmatpush2.bf16.msra.mxu0 0
      %1089 = vmatprep.subr.bf16.mxu0 0
      %1090 = vmatpush2.bf16.msra.mxu0 0
      %1091 = vmatprep.subr.bf16.mxu0 0
      %1092 = vmatpush2.bf16.msra.mxu0 0
      %1093 = vmatprep.subr.bf16.mxu0 0
      %1094 = vmatpush2.bf16.msra.mxu0 0
      %1095 = vmatprep.subr.bf16.mxu0 0
      %1096 = vmatpush2.bf16.msra.mxu0 0
      %1097 = vmatprep.mubr.bf16.mxu0 0
      %1098 = vmatmul.mubr.bf16.gmra.mxu0 %v1060
      %v1099 = vpop.f32.mrf.mxu0
      %v1100 = vadd.f32 0.0, %v1099
      %v1101 = vpop.f32.mrf.mxu0
      %v1102 = vpop.f32.mrf.mxu0
      %v1103 = vpop.f32.mrf.mxu0
      %1104 = vdwg.mxu0
      %v1105 = vadd.f32 %v1035, %v1100
      %s1106 = scalar_lea.vmem %s4, 80
      %v1107 = vld [vmem:[%s1106] sm:$0xf]
      %v1108 = vld [vmem:[%s1106 + $0x4] sm:$0xf]
      %v1109 = vld [vmem:[%s1106 + $0x8] sm:$0xf]
      %v1110 = vld [vmem:[%s1106 + $0xc] sm:$0xf]
      %v1111 = vld [vmem:[%s1106 + $0x10] sm:$0xf]
      %1113 = vrot.lane.b32.xlu0 %v1037, 120
      %v1114 = vpop.permute.xlu0 %1113
      %v1120 = vunpack.c.l.b16 %v1107
      %v1121 = vunpack.c.l.b16 %v1108
      %v1122 = vunpack.c.l.b16 %v1109
      %v1123 = vunpack.c.l.b16 %v1110
      %v1124 = vunpack.c.l.b16 %v1111
      %v1125 = vpack.c.b16 %v1121, %v1120
      %v1126 = vpack.c.b16 %v1123, %v1122
      %v1127 = vpack.c.b16 %v1124, %v1124
      %v1131 = vsel %vm857, %v1114, 0
      %v1134 = vsel %vm861, %v1127, 0
      %1136 = vmatprep.subr.bf16.mxu0 0
      %1137 = vmatpush1.bf16.msra.mxu0 0
      %1138 = vmatprep.subr.bf16.mxu0 0
      %1139 = vmatpush1.bf16.msra.mxu0 0
      %1140 = vmatprep.subr.bf16.mxu0 0
      %1141 = vmatpush1.bf16.msra.mxu0 0
      %1142 = vmatprep.subr.bf16.mxu0 0
      %1143 = vmatpush1.bf16.msra.mxu0 0
      %1144 = vmatprep.subr.bf16.mxu0 0
      %1145 = vmatpush1.bf16.msra.mxu0 0
      %1146 = vmatprep.subr.bf16.mxu0 0
      %1147 = vmatpush1.bf16.msra.mxu0 %v1134
      %1148 = vmatprep.subr.bf16.mxu0 0
      %1149 = vmatpush1.bf16.msra.mxu0 %v1126
      %1150 = vmatprep.subr.bf16.mxu0 0
      %1151 = vmatpush1.bf16.msra.mxu0 %v1125
      %1152 = vmatprep.subr.bf16.mxu0 0
      %1153 = vmatpush2.bf16.msra.mxu0 0
      %1154 = vmatprep.subr.bf16.mxu0 0
      %1155 = vmatpush2.bf16.msra.mxu0 0
      %1156 = vmatprep.subr.bf16.mxu0 0
      %1157 = vmatpush2.bf16.msra.mxu0 0
      %1158 = vmatprep.subr.bf16.mxu0 0
      %1159 = vmatpush2.bf16.msra.mxu0 0
      %1160 = vmatprep.subr.bf16.mxu0 0
      %1161 = vmatpush2.bf16.msra.mxu0 0
      %1162 = vmatprep.subr.bf16.mxu0 0
      %1163 = vmatpush2.bf16.msra.mxu0 0
      %1164 = vmatprep.subr.bf16.mxu0 0
      %1165 = vmatpush2.bf16.msra.mxu0 0
      %1166 = vmatprep.subr.bf16.mxu0 0
      %1167 = vmatpush2.bf16.msra.mxu0 0
      %1168 = vmatprep.mubr.bf16.mxu0 0
      %1169 = vmatmul.mubr.bf16.gmra.mxu0 %v1131
      %v1170 = vpop.f32.mrf.mxu0
      %v1171 = vadd.f32 0.0, %v1170
      %v1172 = vpop.f32.mrf.mxu0
      %v1173 = vpop.f32.mrf.mxu0
      %v1174 = vpop.f32.mrf.mxu0
      %1175 = vdwg.mxu0
      %v1176 = vadd.f32 %v1105, %v1171
      %s1177 = scalar_lea.vmem %s4, 100
      %v1178 = vld [vmem:[%s1177] sm:$0xf]
      %v1179 = vld [vmem:[%s1177 + $0x4] sm:$0xf]
      %v1180 = vld [vmem:[%s1177 + $0x8] sm:$0xf]
      %v1181 = vld [vmem:[%s1177 + $0xc] sm:$0xf]
      %v1182 = vld [vmem:[%s1177 + $0x10] sm:$0xf]
      %1183 = vrot.lane.b32.xlu0 %v1037, 112
      %v1184 = vpop.permute.xlu0 %1183
      %v1190 = vunpack.c.l.b16 %v1178
      %v1191 = vunpack.c.l.b16 %v1179
      %v1192 = vunpack.c.l.b16 %v1180
      %v1193 = vunpack.c.l.b16 %v1181
      %v1194 = vunpack.c.l.b16 %v1182
      %v1195 = vpack.c.b16 %v1191, %v1190
      %v1196 = vpack.c.b16 %v1193, %v1192
      %v1197 = vpack.c.b16 %v1194, %v1194
      %v1201 = vsel %vm857, %v1184, 0
      %v1204 = vsel %vm861, %v1197, 0
      %1206 = vmatprep.subr.bf16.mxu0 0
      %1207 = vmatpush1.bf16.msra.mxu0 0
      %1208 = vmatprep.subr.bf16.mxu0 0
      %1209 = vmatpush1.bf16.msra.mxu0 0
      %1210 = vmatprep.subr.bf16.mxu0 0
      %1211 = vmatpush1.bf16.msra.mxu0 0
      %1212 = vmatprep.subr.bf16.mxu0 0
      %1213 = vmatpush1.bf16.msra.mxu0 0
      %1214 = vmatprep.subr.bf16.mxu0 0
      %1215 = vmatpush1.bf16.msra.mxu0 0
      %1216 = vmatprep.subr.bf16.mxu0 0
      %1217 = vmatpush1.bf16.msra.mxu0 %v1204
      %1218 = vmatprep.subr.bf16.mxu0 0
      %1219 = vmatpush1.bf16.msra.mxu0 %v1196
      %1220 = vmatprep.subr.bf16.mxu0 0
      %1221 = vmatpush1.bf16.msra.mxu0 %v1195
      %1222 = vmatprep.subr.bf16.mxu0 0
      %1223 = vmatpush2.bf16.msra.mxu0 0
      %1224 = vmatprep.subr.bf16.mxu0 0
      %1225 = vmatpush2.bf16.msra.mxu0 0
      %1226 = vmatprep.subr.bf16.mxu0 0
      %1227 = vmatpush2.bf16.msra.mxu0 0
      %1228 = vmatprep.subr.bf16.mxu0 0
      %1229 = vmatpush2.bf16.msra.mxu0 0
      %1230 = vmatprep.subr.bf16.mxu0 0
      %1231 = vmatpush2.bf16.msra.mxu0 0
      %1232 = vmatprep.subr.bf16.mxu0 0
      %1233 = vmatpush2.bf16.msra.mxu0 0
      %1234 = vmatprep.subr.bf16.mxu0 0
      %1235 = vmatpush2.bf16.msra.mxu0 0
      %1236 = vmatprep.subr.bf16.mxu0 0
      %1237 = vmatpush2.bf16.msra.mxu0 0
      %1238 = vmatprep.mubr.bf16.mxu0 0
      %1239 = vmatmul.mubr.bf16.gmra.mxu0 %v1201
      %v1240 = vpop.f32.mrf.mxu0
      %v1241 = vadd.f32 0.0, %v1240
      %v1242 = vpop.f32.mrf.mxu0
      %v1243 = vpop.f32.mrf.mxu0
      %v1244 = vpop.f32.mrf.mxu0
      %1245 = vdwg.mxu0
      %v1246 = vadd.f32 %v1176, %v1241
      %v1247 = vld [vmem:[#allocation2 + $0x2] sm:$0x1f]
      %v1248 = vpack.c.bf16 %v1247, %v1247
      %s1249 = scalar_lea.vmem %s4, 120
      %v1250 = vld [vmem:[%s1249] sm:$0xf]
      %v1251 = vld [vmem:[%s1249 + $0x4] sm:$0xf]
      %v1252 = vld [vmem:[%s1249 + $0x8] sm:$0xf]
      %v1253 = vld [vmem:[%s1249 + $0xc] sm:$0xf]
      %v1254 = vld [vmem:[%s1249 + $0x10] sm:$0xf]
      %v1260 = vunpack.c.l.b16 %v1250
      %v1261 = vunpack.c.l.b16 %v1251
      %v1262 = vunpack.c.l.b16 %v1252
      %v1263 = vunpack.c.l.b16 %v1253
      %v1264 = vunpack.c.l.b16 %v1254
      %v1265 = vpack.c.b16 %v1261, %v1260
      %v1266 = vpack.c.b16 %v1263, %v1262
      %v1267 = vpack.c.b16 %v1264, %v1264
      %v1271 = vsel %vm857, %v1248, 0
      %v1274 = vsel %vm861, %v1267, 0
      %1276 = vmatprep.subr.bf16.mxu0 0
      %1277 = vmatpush1.bf16.msra.mxu0 0
      %1278 = vmatprep.subr.bf16.mxu0 0
      %1279 = vmatpush1.bf16.msra.mxu0 0
      %1280 = vmatprep.subr.bf16.mxu0 0
      %1281 = vmatpush1.bf16.msra.mxu0 0
      %1282 = vmatprep.subr.bf16.mxu0 0
      %1283 = vmatpush1.bf16.msra.mxu0 0
      %1284 = vmatprep.subr.bf16.mxu0 0
      %1285 = vmatpush1.bf16.msra.mxu0 0
      %1286 = vmatprep.subr.bf16.mxu0 0
      %1287 = vmatpush1.bf16.msra.mxu0 %v1274
      %1288 = vmatprep.subr.bf16.mxu0 0
      %1289 = vmatpush1.bf16.msra.mxu0 %v1266
      %1290 = vmatprep.subr.bf16.mxu0 0
      %1291 = vmatpush1.bf16.msra.mxu0 %v1265
      %1292 = vmatprep.subr.bf16.mxu0 0
      %1293 = vmatpush2.bf16.msra.mxu0 0
      %1294 = vmatprep.subr.bf16.mxu0 0
      %1295 = vmatpush2.bf16.msra.mxu0 0
      %1296 = vmatprep.subr.bf16.mxu0 0
      %1297 = vmatpush2.bf16.msra.mxu0 0
      %1298 = vmatprep.subr.bf16.mxu0 0
      %1299 = vmatpush2.bf16.msra.mxu0 0
      %1300 = vmatprep.subr.bf16.mxu0 0
      %1301 = vmatpush2.bf16.msra.mxu0 0
      %1302 = vmatprep.subr.bf16.mxu0 0
      %1303 = vmatpush2.bf16.msra.mxu0 0
      %1304 = vmatprep.subr.bf16.mxu0 0
      %1305 = vmatpush2.bf16.msra.mxu0 0
      %1306 = vmatprep.subr.bf16.mxu0 0
      %1307 = vmatpush2.bf16.msra.mxu0 0
      %1308 = vmatprep.mubr.bf16.mxu0 0
      %1309 = vmatmul.mubr.bf16.gmra.mxu0 %v1271
      %v1310 = vpop.f32.mrf.mxu0
      %v1311 = vadd.f32 0.0, %v1310
      %v1312 = vpop.f32.mrf.mxu0
      %v1313 = vpop.f32.mrf.mxu0
      %v1314 = vpop.f32.mrf.mxu0
      %1315 = vdwg.mxu0
      %v1316 = vadd.f32 %v1246, %v1311
      %s1317 = scalar_lea.vmem %s4, 140
      %v1318 = vld [vmem:[%s1317] sm:$0xf]
      %v1319 = vld [vmem:[%s1317 + $0x4] sm:$0xf]
      %v1320 = vld [vmem:[%s1317 + $0x8] sm:$0xf]
      %v1321 = vld [vmem:[%s1317 + $0xc] sm:$0xf]
      %v1322 = vld [vmem:[%s1317 + $0x10] sm:$0xf]
      %1324 = vrot.lane.b32.xlu0 %v1248, 120
      %v1325 = vpop.permute.xlu0 %1324
      %v1331 = vunpack.c.l.b16 %v1318
      %v1332 = vunpack.c.l.b16 %v1319
      %v1333 = vunpack.c.l.b16 %v1320
      %v1334 = vunpack.c.l.b16 %v1321
      %v1335 = vunpack.c.l.b16 %v1322
      %v1336 = vpack.c.b16 %v1332, %v1331
      %v1337 = vpack.c.b16 %v1334, %v1333
      %v1338 = vpack.c.b16 %v1335, %v1335
      %v1342 = vsel %vm857, %v1325, 0
      %v1345 = vsel %vm861, %v1338, 0
      %1347 = vmatprep.subr.bf16.mxu0 0
      %1348 = vmatpush1.bf16.msra.mxu0 0
      %1349 = vmatprep.subr.bf16.mxu0 0
      %1350 = vmatpush1.bf16.msra.mxu0 0
      %1351 = vmatprep.subr.bf16.mxu0 0
      %1352 = vmatpush1.bf16.msra.mxu0 0
      %1353 = vmatprep.subr.bf16.mxu0 0
      %1354 = vmatpush1.bf16.msra.mxu0 0
      %1355 = vmatprep.subr.bf16.mxu0 0
      %1356 = vmatpush1.bf16.msra.mxu0 0
      %1357 = vmatprep.subr.bf16.mxu0 0
      %1358 = vmatpush1.bf16.msra.mxu0 %v1345
      %1359 = vmatprep.subr.bf16.mxu0 0
      %1360 = vmatpush1.bf16.msra.mxu0 %v1337
      %1361 = vmatprep.subr.bf16.mxu0 0
      %1362 = vmatpush1.bf16.msra.mxu0 %v1336
      %1363 = vmatprep.subr.bf16.mxu0 0
      %1364 = vmatpush2.bf16.msra.mxu0 0
      %1365 = vmatprep.subr.bf16.mxu0 0
      %1366 = vmatpush2.bf16.msra.mxu0 0
      %1367 = vmatprep.subr.bf16.mxu0 0
      %1368 = vmatpush2.bf16.msra.mxu0 0
      %1369 = vmatprep.subr.bf16.mxu0 0
      %1370 = vmatpush2.bf16.msra.mxu0 0
      %1371 = vmatprep.subr.bf16.mxu0 0
      %1372 = vmatpush2.bf16.msra.mxu0 0
      %1373 = vmatprep.subr.bf16.mxu0 0
      %1374 = vmatpush2.bf16.msra.mxu0 0
      %1375 = vmatprep.subr.bf16.mxu0 0
      %1376 = vmatpush2.bf16.msra.mxu0 0
      %1377 = vmatprep.subr.bf16.mxu0 0
      %1378 = vmatpush2.bf16.msra.mxu0 0
      %1379 = vmatprep.mubr.bf16.mxu0 0
      %1380 = vmatmul.mubr.bf16.gmra.mxu0 %v1342
      %v1381 = vpop.f32.mrf.mxu0
      %v1382 = vadd.f32 0.0, %v1381
      %v1383 = vpop.f32.mrf.mxu0
      %v1384 = vpop.f32.mrf.mxu0
      %v1385 = vpop.f32.mrf.mxu0
      %1386 = vdwg.mxu0
      %v1387 = vadd.f32 %v1316, %v1382
      %s1388 = scalar_lea.vmem %s4, 160
      %v1389 = vld [vmem:[%s1388] sm:$0xf]
      %v1390 = vld [vmem:[%s1388 + $0x4] sm:$0xf]
      %v1391 = vld [vmem:[%s1388 + $0x8] sm:$0xf]
      %v1392 = vld [vmem:[%s1388 + $0xc] sm:$0xf]
      %v1393 = vld [vmem:[%s1388 + $0x10] sm:$0xf]
      %1394 = vrot.lane.b32.xlu0 %v1248, 112
      %v1395 = vpop.permute.xlu0 %1394
      %v1401 = vunpack.c.l.b16 %v1389
      %v1402 = vunpack.c.l.b16 %v1390
      %v1403 = vunpack.c.l.b16 %v1391
      %v1404 = vunpack.c.l.b16 %v1392
      %v1405 = vunpack.c.l.b16 %v1393
      %v1406 = vpack.c.b16 %v1402, %v1401
      %v1407 = vpack.c.b16 %v1404, %v1403
      %v1408 = vpack.c.b16 %v1405, %v1405
      %v1412 = vsel %vm857, %v1395, 0
      %v1415 = vsel %vm861, %v1408, 0
      %1417 = vmatprep.subr.bf16.mxu0 0
      %1418 = vmatpush1.bf16.msra.mxu0 0
      %1419 = vmatprep.subr.bf16.mxu0 0
      %1420 = vmatpush1.bf16.msra.mxu0 0
      %1421 = vmatprep.subr.bf16.mxu0 0
      %1422 = vmatpush1.bf16.msra.mxu0 0
      %1423 = vmatprep.subr.bf16.mxu0 0
      %1424 = vmatpush1.bf16.msra.mxu0 0
      %1425 = vmatprep.subr.bf16.mxu0 0
      %1426 = vmatpush1.bf16.msra.mxu0 0
      %1427 = vmatprep.subr.bf16.mxu0 0
      %1428 = vmatpush1.bf16.msra.mxu0 %v1415
      %1429 = vmatprep.subr.bf16.mxu0 0
      %1430 = vmatpush1.bf16.msra.mxu0 %v1407
      %1431 = vmatprep.subr.bf16.mxu0 0
      %1432 = vmatpush1.bf16.msra.mxu0 %v1406
      %1433 = vmatprep.subr.bf16.mxu0 0
      %1434 = vmatpush2.bf16.msra.mxu0 0
      %1435 = vmatprep.subr.bf16.mxu0 0
      %1436 = vmatpush2.bf16.msra.mxu0 0
      %1437 = vmatprep.subr.bf16.mxu0 0
      %1438 = vmatpush2.bf16.msra.mxu0 0
      %1439 = vmatprep.subr.bf16.mxu0 0
      %1440 = vmatpush2.bf16.msra.mxu0 0
      %1441 = vmatprep.subr.bf16.mxu0 0
      %1442 = vmatpush2.bf16.msra.mxu0 0
      %1443 = vmatprep.subr.bf16.mxu0 0
      %1444 = vmatpush2.bf16.msra.mxu0 0
      %1445 = vmatprep.subr.bf16.mxu0 0
      %1446 = vmatpush2.bf16.msra.mxu0 0
      %1447 = vmatprep.subr.bf16.mxu0 0
      %1448 = vmatpush2.bf16.msra.mxu0 0
      %1449 = vmatprep.mubr.bf16.mxu0 0
      %1450 = vmatmul.mubr.bf16.gmra.mxu0 %v1412
      %v1451 = vpop.f32.mrf.mxu0
      %v1452 = vadd.f32 0.0, %v1451
      %v1453 = vpop.f32.mrf.mxu0
      %v1454 = vpop.f32.mrf.mxu0
      %v1455 = vpop.f32.mrf.mxu0
      %1456 = vdwg.mxu0
      %v1457 = vadd.f32 %v1387, %v1452
      %v1458 = vld [vmem:[%s5] sm:$0x1]
      %v1460 = vlaneseq
      %v1461 = vshrl.u32 %v1460, 7
      %v1462 = vsub.s32 0, %v1461
      %v1463 = vrot.slane %v1458, %v1462
      %v1465 = vadd.f32 %v1457, %v1463
      %v1466 = vmax.f32 %v1465, 0.0
      %vm1467 = vcmask 651264
      %1468 = vst.msk [vmem:[#allocation4] sm:$0x1f] %vm1467, %v1466
      %v1469 = vld [vmem:[%s370] sm:$0xff]
      %v1470 = vld [vmem:[%s370 + $0x10] sm:$0x7]
      %v1471 = vpack.c.bf16 %v1470, %v1469
      %v1472 = vld [vmem:[%s6] sm:$0xf]
      %v1473 = vld [vmem:[%s6 + $0x4] sm:$0xf]
      %v1474 = vld [vmem:[%s6 + $0x8] sm:$0xf]
      %v1475 = vld [vmem:[%s6 + $0xc] sm:$0xf]
      %v1476 = vld [vmem:[%s6 + $0x10] sm:$0xf]
      %v1477 = vld [vmem:[%s6 + $0x14] sm:$0xf]
      %v1478 = vld [vmem:[%s6 + $0x18] sm:$0xf]
      %v1479 = vld [vmem:[%s6 + $0x1c] sm:$0xf]
      %v1480 = vld [vmem:[%s6 + $0x20] sm:$0x1]
      %s1481 = scalar_lea.vmem %s6, 36
      %v1482 = vld [vmem:[%s1481] sm:$0xf]
      %v1483 = vld [vmem:[%s1481 + $0x4] sm:$0xf]
      %v1484 = vld [vmem:[%s1481 + $0x8] sm:$0xf]
      %v1485 = vld [vmem:[%s1481 + $0xc] sm:$0xf]
      %v1486 = vld [vmem:[%s1481 + $0x10] sm:$0xf]
      %v1487 = vld [vmem:[%s1481 + $0x14] sm:$0xf]
      %v1488 = vld [vmem:[%s1481 + $0x18] sm:$0xf]
      %v1489 = vld [vmem:[%s1481 + $0x1c] sm:$0xf]
      %v1490 = vld [vmem:[%s1481 + $0x20] sm:$0x1]
      %1492 = vrot.lane.b32.xlu0 %v1471, 122
      %v1493 = vpop.permute.xlu0 %1492
      %v1503 = vunpack.c.l.b16 %v1482
      %v1504 = vunpack.c.l.b16 %v1483
      %v1505 = vunpack.c.l.b16 %v1484
      %v1506 = vunpack.c.l.b16 %v1485
      %v1507 = vunpack.c.l.b16 %v1486
      %v1508 = vunpack.c.l.b16 %v1487
      %v1509 = vunpack.c.l.b16 %v1488
      %v1510 = vunpack.c.l.b16 %v1489
      %v1511 = vunpack.c.l.b16 %v1490
      %v1512 = vpack.c.b16 %v1504, %v1503
      %v1513 = vpack.c.b16 %v1506, %v1505
      %v1514 = vpack.c.b16 %v1508, %v1507
      %v1515 = vpack.c.b16 %v1510, %v1509
      %v1516 = vpack.c.b16 %v1511, %v1511
      %vm1521 = vcmask 539648
      %v1523 = vsel %vm1521, %v1493, 0
      %vm1525 = vcmask 1040384
      %v1527 = vsel %vm1525, %v1516, 0
      %1529 = vmatprep.subr.bf16.mxu0 0
      %1530 = vmatpush1.bf16.msra.mxu0 0
      %1531 = vmatprep.subr.bf16.mxu0 0
      %1532 = vmatpush1.bf16.msra.mxu0 0
      %1533 = vmatprep.subr.bf16.mxu0 0
      %1534 = vmatpush1.bf16.msra.mxu0 0
      %1535 = vmatprep.subr.bf16.mxu0 0
      %1536 = vmatpush1.bf16.msra.mxu0 %v1527
      %1537 = vmatprep.subr.bf16.mxu0 0
      %1538 = vmatpush1.bf16.msra.mxu0 %v1515
      %1539 = vmatprep.subr.bf16.mxu0 0
      %1540 = vmatpush1.bf16.msra.mxu0 %v1514
      %1541 = vmatprep.subr.bf16.mxu0 0
      %1542 = vmatpush1.bf16.msra.mxu0 %v1513
      %1543 = vmatprep.subr.bf16.mxu0 0
      %1544 = vmatpush1.bf16.msra.mxu0 %v1512
      %1545 = vmatprep.subr.bf16.mxu0 0
      %1546 = vmatpush2.bf16.msra.mxu0 0
      %1547 = vmatprep.subr.bf16.mxu0 0
      %1548 = vmatpush2.bf16.msra.mxu0 0
      %1549 = vmatprep.subr.bf16.mxu0 0
      %1550 = vmatpush2.bf16.msra.mxu0 0
      %1551 = vmatprep.subr.bf16.mxu0 0
      %1552 = vmatpush2.bf16.msra.mxu0 0
      %1553 = vmatprep.subr.bf16.mxu0 0
      %1554 = vmatpush2.bf16.msra.mxu0 0
      %1555 = vmatprep.subr.bf16.mxu0 0
      %1556 = vmatpush2.bf16.msra.mxu0 0
      %1557 = vmatprep.subr.bf16.mxu0 0
      %1558 = vmatpush2.bf16.msra.mxu0 0
      %1559 = vmatprep.subr.bf16.mxu0 0
      %1560 = vmatpush2.bf16.msra.mxu0 0
      %1561 = vmatprep.mubr.bf16.mxu0 0
      %1562 = vmatmul.mubr.bf16.gmra.mxu0 %v1523
      %v1563 = vpop.f32.mrf.mxu0
      %v1564 = vadd.f32 0.0, %v1563
      %v1565 = vpop.f32.mrf.mxu0
      %v1566 = vpop.f32.mrf.mxu0
      %v1567 = vadd.f32 0.0, %v1566
      %v1568 = vpop.f32.mrf.mxu0
      %1569 = vdwg.mxu0
      %v1579 = vunpack.c.l.b16 %v1472
      %v1580 = vunpack.c.l.b16 %v1473
      %v1581 = vunpack.c.l.b16 %v1474
      %v1582 = vunpack.c.l.b16 %v1475
      %v1583 = vunpack.c.l.b16 %v1476
      %v1584 = vunpack.c.l.b16 %v1477
      %v1585 = vunpack.c.l.b16 %v1478
      %v1586 = vunpack.c.l.b16 %v1479
      %v1587 = vunpack.c.l.b16 %v1480
      %v1588 = vpack.c.b16 %v1580, %v1579
      %v1589 = vpack.c.b16 %v1582, %v1581
      %v1590 = vpack.c.b16 %v1584, %v1583
      %v1591 = vpack.c.b16 %v1586, %v1585
      %v1592 = vpack.c.b16 %v1587, %v1587
      %v1598 = vsel %vm1521, %v1471, 0
      %v1601 = vsel %vm1525, %v1592, 0
      %1603 = vmatprep.subr.bf16.mxu0 0
      %1604 = vmatpush1.bf16.msra.mxu0 0
      %1605 = vmatprep.subr.bf16.mxu0 0
      %1606 = vmatpush1.bf16.msra.mxu0 0
      %1607 = vmatprep.subr.bf16.mxu0 0
      %1608 = vmatpush1.bf16.msra.mxu0 0
      %1609 = vmatprep.subr.bf16.mxu0 0
      %1610 = vmatpush1.bf16.msra.mxu0 %v1601
      %1611 = vmatprep.subr.bf16.mxu0 0
      %1612 = vmatpush1.bf16.msra.mxu0 %v1591
      %1613 = vmatprep.subr.bf16.mxu0 0
      %1614 = vmatpush1.bf16.msra.mxu0 %v1590
      %1615 = vmatprep.subr.bf16.mxu0 0
      %1616 = vmatpush1.bf16.msra.mxu0 %v1589
      %1617 = vmatprep.subr.bf16.mxu0 0
      %1618 = vmatpush1.bf16.msra.mxu0 %v1588
      %1619 = vmatprep.subr.bf16.mxu0 0
      %1620 = vmatpush2.bf16.msra.mxu0 0
      %1621 = vmatprep.subr.bf16.mxu0 0
      %1622 = vmatpush2.bf16.msra.mxu0 0
      %1623 = vmatprep.subr.bf16.mxu0 0
      %1624 = vmatpush2.bf16.msra.mxu0 0
      %1625 = vmatprep.subr.bf16.mxu0 0
      %1626 = vmatpush2.bf16.msra.mxu0 0
      %1627 = vmatprep.subr.bf16.mxu0 0
      %1628 = vmatpush2.bf16.msra.mxu0 0
      %1629 = vmatprep.subr.bf16.mxu0 0
      %1630 = vmatpush2.bf16.msra.mxu0 0
      %1631 = vmatprep.subr.bf16.mxu0 0
      %1632 = vmatpush2.bf16.msra.mxu0 0
      %1633 = vmatprep.subr.bf16.mxu0 0
      %1634 = vmatpush2.bf16.msra.mxu0 0
      %1635 = vmatprep.mubr.bf16.mxu0 0
      %1636 = vmatmul.mubr.bf16.gmra.mxu0 %v1598
      %v1637 = vpop.f32.mrf.mxu0
      %v1638 = vadd.f32 %v1564, %v1637
      %v1639 = vpop.f32.mrf.mxu0
      %v1640 = vpop.f32.mrf.mxu0
      %v1641 = vadd.f32 %v1567, %v1640
      %v1642 = vpop.f32.mrf.mxu0
      %1643 = vdwg.mxu0
      %v1644 = vld [vmem:[%s370] sm:$0xff]
      %v1645 = vld [vmem:[%s370 + $0x8] sm:$0xff]
      %v1646 = vld [vmem:[%s370 + $0x10] sm:$0x7]
      %v1647 = vld [vmem:[%s370 + $0x18] sm:$0x7]
      %v1648 = vpack.c.bf16 %v1646, %v1644
      %v1649 = vpack.c.bf16 %v1647, %v1645
      %s1650 = scalar_lea.vmem %s6, 72
      %v1651 = vld [vmem:[%s1650] sm:$0xf]
      %v1652 = vld [vmem:[%s1650 + $0x4] sm:$0xf]
      %v1653 = vld [vmem:[%s1650 + $0x8] sm:$0xf]
      %v1654 = vld [vmem:[%s1650 + $0xc] sm:$0xf]
      %v1655 = vld [vmem:[%s1650 + $0x10] sm:$0xf]
      %v1656 = vld [vmem:[%s1650 + $0x14] sm:$0xf]
      %v1657 = vld [vmem:[%s1650 + $0x18] sm:$0xf]
      %v1658 = vld [vmem:[%s1650 + $0x1c] sm:$0xf]
      %v1659 = vld [vmem:[%s1650 + $0x20] sm:$0x1]
      %1662 = vrot.lane.b32.xlu0 %v1648, 56
      %v1663 = vpop.permute.xlu0 %1662
      %1664 = vrot.lane.b32.xlu0 %v1649, 56
      %v1665 = vpop.permute.xlu0 %1664
      %vm1666 = vcmask 457728
      %v1667 = vsel %vm1666, %v1663, %v1665
      %v1677 = vunpack.c.l.b16 %v1651
      %v1678 = vunpack.c.l.b16 %v1652
      %v1679 = vunpack.c.l.b16 %v1653
      %v1680 = vunpack.c.l.b16 %v1654
      %v1681 = vunpack.c.l.b16 %v1655
      %v1682 = vunpack.c.l.b16 %v1656
      %v1683 = vunpack.c.l.b16 %v1657
      %v1684 = vunpack.c.l.b16 %v1658
      %v1685 = vunpack.c.l.b16 %v1659
      %v1686 = vpack.c.b16 %v1678, %v1677
      %v1687 = vpack.c.b16 %v1680, %v1679
      %v1688 = vpack.c.b16 %v1682, %v1681
      %v1689 = vpack.c.b16 %v1684, %v1683
      %v1690 = vpack.c.b16 %v1685, %v1685
      %v1696 = vsel %vm1521, %v1667, 0
      %v1699 = vsel %vm1525, %v1690, 0
      %1701 = vmatprep.subr.bf16.mxu0 0
      %1702 = vmatpush1.bf16.msra.mxu0 0
      %1703 = vmatprep.subr.bf16.mxu0 0
      %1704 = vmatpush1.bf16.msra.mxu0 0
      %1705 = vmatprep.subr.bf16.mxu0 0
      %1706 = vmatpush1.bf16.msra.mxu0 0
      %1707 = vmatprep.subr.bf16.mxu0 0
      %1708 = vmatpush1.bf16.msra.mxu0 %v1699
      %1709 = vmatprep.subr.bf16.mxu0 0
      %1710 = vmatpush1.bf16.msra.mxu0 %v1689
      %1711 = vmatprep.subr.bf16.mxu0 0
      %1712 = vmatpush1.bf16.msra.mxu0 %v1688
      %1713 = vmatprep.subr.bf16.mxu0 0
      %1714 = vmatpush1.bf16.msra.mxu0 %v1687
      %1715 = vmatprep.subr.bf16.mxu0 0
      %1716 = vmatpush1.bf16.msra.mxu0 %v1686
      %1717 = vmatprep.subr.bf16.mxu0 0
      %1718 = vmatpush2.bf16.msra.mxu0 0
      %1719 = vmatprep.subr.bf16.mxu0 0
      %1720 = vmatpush2.bf16.msra.mxu0 0
      %1721 = vmatprep.subr.bf16.mxu0 0
      %1722 = vmatpush2.bf16.msra.mxu0 0
      %1723 = vmatprep.subr.bf16.mxu0 0
      %1724 = vmatpush2.bf16.msra.mxu0 0
      %1725 = vmatprep.subr.bf16.mxu0 0
      %1726 = vmatpush2.bf16.msra.mxu0 0
      %1727 = vmatprep.subr.bf16.mxu0 0
      %1728 = vmatpush2.bf16.msra.mxu0 0
      %1729 = vmatprep.subr.bf16.mxu0 0
      %1730 = vmatpush2.bf16.msra.mxu0 0
      %1731 = vmatprep.subr.bf16.mxu0 0
      %1732 = vmatpush2.bf16.msra.mxu0 0
      %1733 = vmatprep.mubr.bf16.mxu0 0
      %1734 = vmatmul.mubr.bf16.gmra.mxu0 %v1696
      %v1735 = vpop.f32.mrf.mxu0
      %v1736 = vadd.f32 0.0, %v1735
      %v1737 = vpop.f32.mrf.mxu0
      %v1738 = vpop.f32.mrf.mxu0
      %v1739 = vadd.f32 0.0, %v1738
      %v1740 = vpop.f32.mrf.mxu0
      %1741 = vdwg.mxu0
      %v1742 = vadd.f32 %v1638, %v1736
      %v1743 = vadd.f32 %v1641, %v1739
      %s1744 = scalar_lea.vmem %s6, 108
      %v1745 = vld [vmem:[%s1744] sm:$0xf]
      %v1746 = vld [vmem:[%s1744 + $0x4] sm:$0xf]
      %v1747 = vld [vmem:[%s1744 + $0x8] sm:$0xf]
      %v1748 = vld [vmem:[%s1744 + $0xc] sm:$0xf]
      %v1749 = vld [vmem:[%s1744 + $0x10] sm:$0xf]
      %v1750 = vld [vmem:[%s1744 + $0x14] sm:$0xf]
      %v1751 = vld [vmem:[%s1744 + $0x18] sm:$0xf]
      %v1752 = vld [vmem:[%s1744 + $0x1c] sm:$0xf]
      %v1753 = vld [vmem:[%s1744 + $0x20] sm:$0x1]
      %1754 = vrot.lane.b32.xlu0 %v1648, 50
      %v1755 = vpop.permute.xlu0 %1754
      %1756 = vrot.lane.b32.xlu0 %v1649, 50
      %v1757 = vpop.permute.xlu0 %1756
      %vm1758 = vcmask 408576
      %v1759 = vsel %vm1758, %v1755, %v1757
      %v1769 = vunpack.c.l.b16 %v1745
      %v1770 = vunpack.c.l.b16 %v1746
      %v1771 = vunpack.c.l.b16 %v1747
      %v1772 = vunpack.c.l.b16 %v1748
      %v1773 = vunpack.c.l.b16 %v1749
      %v1774 = vunpack.c.l.b16 %v1750
      %v1775 = vunpack.c.l.b16 %v1751
      %v1776 = vunpack.c.l.b16 %v1752
      %v1777 = vunpack.c.l.b16 %v1753
      %v1778 = vpack.c.b16 %v1770, %v1769
      %v1779 = vpack.c.b16 %v1772, %v1771
      %v1780 = vpack.c.b16 %v1774, %v1773
      %v1781 = vpack.c.b16 %v1776, %v1775
      %v1782 = vpack.c.b16 %v1777, %v1777
      %v1788 = vsel %vm1521, %v1759, 0
      %v1791 = vsel %vm1525, %v1782, 0
      %1793 = vmatprep.subr.bf16.mxu0 0
      %1794 = vmatpush1.bf16.msra.mxu0 0
      %1795 = vmatprep.subr.bf16.mxu0 0
      %1796 = vmatpush1.bf16.msra.mxu0 0
      %1797 = vmatprep.subr.bf16.mxu0 0
      %1798 = vmatpush1.bf16.msra.mxu0 0
      %1799 = vmatprep.subr.bf16.mxu0 0
      %1800 = vmatpush1.bf16.msra.mxu0 %v1791
      %1801 = vmatprep.subr.bf16.mxu0 0
      %1802 = vmatpush1.bf16.msra.mxu0 %v1781
      %1803 = vmatprep.subr.bf16.mxu0 0
      %1804 = vmatpush1.bf16.msra.mxu0 %v1780
      %1805 = vmatprep.subr.bf16.mxu0 0
      %1806 = vmatpush1.bf16.msra.mxu0 %v1779
      %1807 = vmatprep.subr.bf16.mxu0 0
      %1808 = vmatpush1.bf16.msra.mxu0 %v1778
      %1809 = vmatprep.subr.bf16.mxu0 0
      %1810 = vmatpush2.bf16.msra.mxu0 0
      %1811 = vmatprep.subr.bf16.mxu0 0
      %1812 = vmatpush2.bf16.msra.mxu0 0
      %1813 = vmatprep.subr.bf16.mxu0 0
      %1814 = vmatpush2.bf16.msra.mxu0 0
      %1815 = vmatprep.subr.bf16.mxu0 0
      %1816 = vmatpush2.bf16.msra.mxu0 0
      %1817 = vmatprep.subr.bf16.mxu0 0
      %1818 = vmatpush2.bf16.msra.mxu0 0
      %1819 = vmatprep.subr.bf16.mxu0 0
      %1820 = vmatpush2.bf16.msra.mxu0 0
      %1821 = vmatprep.subr.bf16.mxu0 0
      %1822 = vmatpush2.bf16.msra.mxu0 0
      %1823 = vmatprep.subr.bf16.mxu0 0
      %1824 = vmatpush2.bf16.msra.mxu0 0
      %1825 = vmatprep.mubr.bf16.mxu0 0
      %1826 = vmatmul.mubr.bf16.gmra.mxu0 %v1788
      %v1827 = vpop.f32.mrf.mxu0
      %v1828 = vadd.f32 0.0, %v1827
      %v1829 = vpop.f32.mrf.mxu0
      %v1830 = vpop.f32.mrf.mxu0
      %v1831 = vadd.f32 0.0, %v1830
      %v1832 = vpop.f32.mrf.mxu0
      %1833 = vdwg.mxu0
      %v1834 = vadd.f32 %v1742, %v1828
      %v1835 = vadd.f32 %v1743, %v1831
      %v1836 = vld [vmem:[%s370] sm:$0xfe]
      %v1837 = vld [vmem:[%s370 + $0x10] sm:$0xf]
      %v1838 = vpack.c.bf16 %v1837, %v1836
      %s1839 = scalar_lea.vmem %s6, 144
      %v1840 = vld [vmem:[%s1839] sm:$0xf]
      %v1841 = vld [vmem:[%s1839 + $0x4] sm:$0xf]
      %v1842 = vld [vmem:[%s1839 + $0x8] sm:$0xf]
      %v1843 = vld [vmem:[%s1839 + $0xc] sm:$0xf]
      %v1844 = vld [vmem:[%s1839 + $0x10] sm:$0xf]
      %v1845 = vld [vmem:[%s1839 + $0x14] sm:$0xf]
      %v1846 = vld [vmem:[%s1839 + $0x18] sm:$0xf]
      %v1847 = vld [vmem:[%s1839 + $0x1c] sm:$0xf]
      %v1848 = vld [vmem:[%s1839 + $0x20] sm:$0x1]
      %v1850 = vshrl.u32 %v1838, 16
      %v1852 = vshll.u32 %v1838, 16
      %v1854 = vrot.slane %v1852, 1
      %v1855 = vor.u32 %v1850, %v1854
      %v1865 = vunpack.c.l.b16 %v1840
      %v1866 = vunpack.c.l.b16 %v1841
      %v1867 = vunpack.c.l.b16 %v1842
      %v1868 = vunpack.c.l.b16 %v1843
      %v1869 = vunpack.c.l.b16 %v1844
      %v1870 = vunpack.c.l.b16 %v1845
      %v1871 = vunpack.c.l.b16 %v1846
      %v1872 = vunpack.c.l.b16 %v1847
      %v1873 = vunpack.c.l.b16 %v1848
      %v1874 = vpack.c.b16 %v1866, %v1865
      %v1875 = vpack.c.b16 %v1868, %v1867
      %v1876 = vpack.c.b16 %v1870, %v1869
      %v1877 = vpack.c.b16 %v1872, %v1871
      %v1878 = vpack.c.b16 %v1873, %v1873
      %v1884 = vsel %vm1521, %v1855, 0
      %v1887 = vsel %vm1525, %v1878, 0
      %1889 = vmatprep.subr.bf16.mxu0 0
      %1890 = vmatpush1.bf16.msra.mxu0 0
      %1891 = vmatprep.subr.bf16.mxu0 0
      %1892 = vmatpush1.bf16.msra.mxu0 0
      %1893 = vmatprep.subr.bf16.mxu0 0
      %1894 = vmatpush1.bf16.msra.mxu0 0
      %1895 = vmatprep.subr.bf16.mxu0 0
      %1896 = vmatpush1.bf16.msra.mxu0 %v1887
      %1897 = vmatprep.subr.bf16.mxu0 0
      %1898 = vmatpush1.bf16.msra.mxu0 %v1877
      %1899 = vmatprep.subr.bf16.mxu0 0
      %1900 = vmatpush1.bf16.msra.mxu0 %v1876
      %1901 = vmatprep.subr.bf16.mxu0 0
      %1902 = vmatpush1.bf16.msra.mxu0 %v1875
      %1903 = vmatprep.subr.bf16.mxu0 0
      %1904 = vmatpush1.bf16.msra.mxu0 %v1874
      %1905 = vmatprep.subr.bf16.mxu0 0
      %1906 = vmatpush2.bf16.msra.mxu0 0
      %1907 = vmatprep.subr.bf16.mxu0 0
      %1908 = vmatpush2.bf16.msra.mxu0 0
      %1909 = vmatprep.subr.bf16.mxu0 0
      %1910 = vmatpush2.bf16.msra.mxu0 0
      %1911 = vmatprep.subr.bf16.mxu0 0
      %1912 = vmatpush2.bf16.msra.mxu0 0
      %1913 = vmatprep.subr.bf16.mxu0 0
      %1914 = vmatpush2.bf16.msra.mxu0 0
      %1915 = vmatprep.subr.bf16.mxu0 0
      %1916 = vmatpush2.bf16.msra.mxu0 0
      %1917 = vmatprep.subr.bf16.mxu0 0
      %1918 = vmatpush2.bf16.msra.mxu0 0
      %1919 = vmatprep.subr.bf16.mxu0 0
      %1920 = vmatpush2.bf16.msra.mxu0 0
      %1921 = vmatprep.mubr.bf16.mxu0 0
      %1922 = vmatmul.mubr.bf16.gmra.mxu0 %v1884
      %v1923 = vpop.f32.mrf.mxu0
      %v1924 = vadd.f32 0.0, %v1923
      %v1925 = vpop.f32.mrf.mxu0
      %v1926 = vpop.f32.mrf.mxu0
      %v1927 = vadd.f32 0.0, %v1926
      %v1928 = vpop.f32.mrf.mxu0
      %1929 = vdwg.mxu0
      %v1930 = vadd.f32 %v1834, %v1924
      %v1931 = vadd.f32 %v1835, %v1927
      %s1932 = scalar_lea.vmem %s6, 180
      %v1933 = vld [vmem:[%s1932] sm:$0xf]
      %v1934 = vld [vmem:[%s1932 + $0x4] sm:$0xf]
      %v1935 = vld [vmem:[%s1932 + $0x8] sm:$0xf]
      %v1936 = vld [vmem:[%s1932 + $0xc] sm:$0xf]
      %v1937 = vld [vmem:[%s1932 + $0x10] sm:$0xf]
      %v1938 = vld [vmem:[%s1932 + $0x14] sm:$0xf]
      %v1939 = vld [vmem:[%s1932 + $0x18] sm:$0xf]
      %v1940 = vld [vmem:[%s1932 + $0x1c] sm:$0xf]
      %v1941 = vld [vmem:[%s1932 + $0x20] sm:$0x1]
      %1942 = vrot.lane.b32.xlu0 %v1855, 122
      %v1943 = vpop.permute.xlu0 %1942
      %v1953 = vunpack.c.l.b16 %v1933
      %v1954 = vunpack.c.l.b16 %v1934
      %v1955 = vunpack.c.l.b16 %v1935
      %v1956 = vunpack.c.l.b16 %v1936
      %v1957 = vunpack.c.l.b16 %v1937
      %v1958 = vunpack.c.l.b16 %v1938
      %v1959 = vunpack.c.l.b16 %v1939
      %v1960 = vunpack.c.l.b16 %v1940
      %v1961 = vunpack.c.l.b16 %v1941
      %v1962 = vpack.c.b16 %v1954, %v1953
      %v1963 = vpack.c.b16 %v1956, %v1955
      %v1964 = vpack.c.b16 %v1958, %v1957
      %v1965 = vpack.c.b16 %v1960, %v1959
      %v1966 = vpack.c.b16 %v1961, %v1961
      %v1972 = vsel %vm1521, %v1943, 0
      %v1975 = vsel %vm1525, %v1966, 0
      %1977 = vmatprep.subr.bf16.mxu0 0
      %1978 = vmatpush1.bf16.msra.mxu0 0
      %1979 = vmatprep.subr.bf16.mxu0 0
      %1980 = vmatpush1.bf16.msra.mxu0 0
      %1981 = vmatprep.subr.bf16.mxu0 0
      %1982 = vmatpush1.bf16.msra.mxu0 0
      %1983 = vmatprep.subr.bf16.mxu0 0
      %1984 = vmatpush1.bf16.msra.mxu0 %v1975
      %1985 = vmatprep.subr.bf16.mxu0 0
      %1986 = vmatpush1.bf16.msra.mxu0 %v1965
      %1987 = vmatprep.subr.bf16.mxu0 0
      %1988 = vmatpush1.bf16.msra.mxu0 %v1964
      %1989 = vmatprep.subr.bf16.mxu0 0
      %1990 = vmatpush1.bf16.msra.mxu0 %v1963
      %1991 = vmatprep.subr.bf16.mxu0 0
      %1992 = vmatpush1.bf16.msra.mxu0 %v1962
      %1993 = vmatprep.subr.bf16.mxu0 0
      %1994 = vmatpush2.bf16.msra.mxu0 0
      %1995 = vmatprep.subr.bf16.mxu0 0
      %1996 = vmatpush2.bf16.msra.mxu0 0
      %1997 = vmatprep.subr.bf16.mxu0 0
      %1998 = vmatpush2.bf16.msra.mxu0 0
      %1999 = vmatprep.subr.bf16.mxu0 0
      %2000 = vmatpush2.bf16.msra.mxu0 0
      %2001 = vmatprep.subr.bf16.mxu0 0
      %2002 = vmatpush2.bf16.msra.mxu0 0
      %2003 = vmatprep.subr.bf16.mxu0 0
      %2004 = vmatpush2.bf16.msra.mxu0 0
      %2005 = vmatprep.subr.bf16.mxu0 0
      %2006 = vmatpush2.bf16.msra.mxu0 0
      %2007 = vmatprep.subr.bf16.mxu0 0
      %2008 = vmatpush2.bf16.msra.mxu0 0
      %2009 = vmatprep.mubr.bf16.mxu0 0
      %2010 = vmatmul.mubr.bf16.gmra.mxu0 %v1972
      %v2011 = vpop.f32.mrf.mxu0
      %v2012 = vadd.f32 0.0, %v2011
      %v2013 = vpop.f32.mrf.mxu0
      %v2014 = vpop.f32.mrf.mxu0
      %v2015 = vadd.f32 0.0, %v2014
      %v2016 = vpop.f32.mrf.mxu0
      %2017 = vdwg.mxu0
      %v2018 = vadd.f32 %v1930, %v2012
      %v2019 = vadd.f32 %v1931, %v2015
      %v2020 = vld [vmem:[%s7] sm:$0x1]
      %v2022 = vlaneseq
      %v2023 = vshrl.u32 %v2022, 7
      %v2024 = vsub.s32 0, %v2023
      %v2025 = vrot.slane %v2020, %v2024
      %v2027 = vadd.f32 %v2018, %v2025
      %v2028 = vadd.f32 %v2019, %v2025
      %v2029 = vmax.f32 %v2027, 0.0
      %v2030 = vmax.f32 %v2028, 0.0
      %vm2031 = vcmask 719872
      %2032 = vst.msk [vmem:[#allocation3] sm:$0xff] %vm2031, %v2029
      %vm2033 = vcmask 714752
      %2034 = vst.msk [vmem:[#allocation3 + $0x8] sm:$0x7] %vm2033, %v2030
      %v2035 = vld [vmem:[#allocation3] sm:$0xff]
      %v2036 = vld [vmem:[#allocation3 + $0x8] sm:$0x1]
      %v2037 = vpack.c.bf16 %v2036, %v2035
      %v2038 = vld [vmem:[%s8] sm:$0xff]
      %v2039 = vld [vmem:[%s8 + $0x8] sm:$0xff]
      %v2040 = vld [vmem:[%s8 + $0x10] sm:$0xff]
      %v2041 = vld [vmem:[%s8 + $0x18] sm:$0xff]
      %v2042 = vld [vmem:[%s8 + $0x20] sm:$0xff]
      %v2043 = vld [vmem:[%s8 + $0x28] sm:$0xff]
      %v2044 = vld [vmem:[%s8 + $0x30] sm:$0xff]
      %v2045 = vld [vmem:[%s8 + $0x38] sm:$0xff]
      %v2046 = vld [vmem:[%s8 + $0x40] sm:$0xff]
      %s2047 = scalar_lea.vmem %s8, 72
      %v2048 = vld [vmem:[%s2047] sm:$0xff]
      %v2049 = vld [vmem:[%s2047 + $0x8] sm:$0xff]
      %v2050 = vld [vmem:[%s2047 + $0x10] sm:$0xff]
      %v2051 = vld [vmem:[%s2047 + $0x18] sm:$0xff]
      %v2052 = vld [vmem:[%s2047 + $0x20] sm:$0xff]
      %v2053 = vld [vmem:[%s2047 + $0x28] sm:$0xff]
      %v2054 = vld [vmem:[%s2047 + $0x30] sm:$0xff]
      %v2055 = vld [vmem:[%s2047 + $0x38] sm:$0xff]
      %v2056 = vld [vmem:[%s2047 + $0x40] sm:$0xff]
      %2058 = vrot.lane.b32.xlu0 %v2037, 120
      %v2059 = vpop.permute.xlu0 %2058
      %v2069 = vunpack.c.l.b16 %v2048
      %v2070 = vunpack.c.h.b16 %v2048
      %v2071 = vunpack.c.l.b16 %v2049
      %v2072 = vunpack.c.h.b16 %v2049
      %v2073 = vunpack.c.l.b16 %v2050
      %v2074 = vunpack.c.h.b16 %v2050
      %v2075 = vunpack.c.l.b16 %v2051
      %v2076 = vunpack.c.h.b16 %v2051
      %v2077 = vunpack.c.l.b16 %v2052
      %v2078 = vunpack.c.h.b16 %v2052
      %v2079 = vunpack.c.l.b16 %v2053
      %v2080 = vunpack.c.h.b16 %v2053
      %v2081 = vunpack.c.l.b16 %v2054
      %v2082 = vunpack.c.h.b16 %v2054
      %v2083 = vunpack.c.l.b16 %v2055
      %v2084 = vunpack.c.h.b16 %v2055
      %v2085 = vunpack.c.l.b16 %v2056
      %v2086 = vunpack.c.h.b16 %v2056
      %v2087 = vpack.c.b16 %v2071, %v2069
      %v2088 = vpack.c.b16 %v2072, %v2070
      %v2089 = vpack.c.b16 %v2075, %v2073
      %v2090 = vpack.c.b16 %v2076, %v2074
      %v2091 = vpack.c.b16 %v2079, %v2077
      %v2092 = vpack.c.b16 %v2080, %v2078
      %v2093 = vpack.c.b16 %v2083, %v2081
      %v2094 = vpack.c.b16 %v2084, %v2082
      %v2095 = vpack.c.b16 %v2085, %v2085
      %v2096 = vpack.c.b16 %v2086, %v2086
      %vm2105 = vcmask 588800
      %v2107 = vsel %vm2105, %v2059, 0
      %v2110 = vsel %vm861, %v2095, 0
      %v2113 = vsel %vm861, %v2096, 0
      %2115 = vmatprep.subr.bf16.mxu0 0
      %2116 = vmatpush1.bf16.msra.mxu0 0
      %2117 = vmatprep.subr.bf16.mxu0 0
      %2118 = vmatpush1.bf16.msra.mxu0 0
      %2119 = vmatprep.subr.bf16.mxu0 0
      %2120 = vmatpush1.bf16.msra.mxu0 0
      %2121 = vmatprep.subr.bf16.mxu0 %v2113
      %2122 = vmatpush1.bf16.msra.mxu0 %v2110
      %2123 = vmatprep.subr.bf16.mxu0 %v2094
      %2124 = vmatpush1.bf16.msra.mxu0 %v2093
      %2125 = vmatprep.subr.bf16.mxu0 %v2092
      %2126 = vmatpush1.bf16.msra.mxu0 %v2091
      %2127 = vmatprep.subr.bf16.mxu0 %v2090
      %2128 = vmatpush1.bf16.msra.mxu0 %v2089
      %2129 = vmatprep.subr.bf16.mxu0 %v2088
      %2130 = vmatpush1.bf16.msra.mxu0 %v2087
      %2131 = vmatprep.subr.bf16.mxu0 0
      %2132 = vmatpush2.bf16.msra.mxu0 0
      %2133 = vmatprep.subr.bf16.mxu0 0
      %2134 = vmatpush2.bf16.msra.mxu0 0
      %2135 = vmatprep.subr.bf16.mxu0 0
      %2136 = vmatpush2.bf16.msra.mxu0 0
      %2137 = vmatprep.subr.bf16.mxu0 0
      %2138 = vmatpush2.bf16.msra.mxu0 0
      %2139 = vmatprep.subr.bf16.mxu0 0
      %2140 = vmatpush2.bf16.msra.mxu0 0
      %2141 = vmatprep.subr.bf16.mxu0 0
      %2142 = vmatpush2.bf16.msra.mxu0 0
      %2143 = vmatprep.subr.bf16.mxu0 0
      %2144 = vmatpush2.bf16.msra.mxu0 0
      %2145 = vmatprep.subr.bf16.mxu0 0
      %2146 = vmatpush2.bf16.msra.mxu0 0
      %2147 = vmatprep.mubr.bf16.mxu0 0
      %2148 = vmatmul.mubr.bf16.gmra.mxu0 %v2107
      %v2149 = vpop.f32.mrf.mxu0
      %v2150 = vadd.f32 0.0, %v2149
      %v2151 = vpop.f32.mrf.mxu0
      %v2152 = vadd.f32 0.0, %v2151
      %v2153 = vpop.f32.mrf.mxu0
      %v2154 = vadd.f32 0.0, %v2153
      %v2155 = vpop.f32.mrf.mxu0
      %v2156 = vadd.f32 0.0, %v2155
      %2157 = vdwg.mxu0
      %v2167 = vunpack.c.l.b16 %v2038
      %v2168 = vunpack.c.h.b16 %v2038
      %v2169 = vunpack.c.l.b16 %v2039
      %v2170 = vunpack.c.h.b16 %v2039
      %v2171 = vunpack.c.l.b16 %v2040
      %v2172 = vunpack.c.h.b16 %v2040
      %v2173 = vunpack.c.l.b16 %v2041
      %v2174 = vunpack.c.h.b16 %v2041
      %v2175 = vunpack.c.l.b16 %v2042
      %v2176 = vunpack.c.h.b16 %v2042
      %v2177 = vunpack.c.l.b16 %v2043
      %v2178 = vunpack.c.h.b16 %v2043
      %v2179 = vunpack.c.l.b16 %v2044
      %v2180 = vunpack.c.h.b16 %v2044
      %v2181 = vunpack.c.l.b16 %v2045
      %v2182 = vunpack.c.h.b16 %v2045
      %v2183 = vunpack.c.l.b16 %v2046
      %v2184 = vunpack.c.h.b16 %v2046
      %v2185 = vpack.c.b16 %v2169, %v2167
      %v2186 = vpack.c.b16 %v2170, %v2168
      %v2187 = vpack.c.b16 %v2173, %v2171
      %v2188 = vpack.c.b16 %v2174, %v2172
      %v2189 = vpack.c.b16 %v2177, %v2175
      %v2190 = vpack.c.b16 %v2178, %v2176
      %v2191 = vpack.c.b16 %v2181, %v2179
      %v2192 = vpack.c.b16 %v2182, %v2180
      %v2193 = vpack.c.b16 %v2183, %v2183
      %v2194 = vpack.c.b16 %v2184, %v2184
      %v2204 = vsel %vm2105, %v2037, 0
      %v2207 = vsel %vm861, %v2193, 0
      %v2210 = vsel %vm861, %v2194, 0
      %2212 = vmatprep.subr.bf16.mxu0 0
      %2213 = vmatpush1.bf16.msra.mxu0 0
      %2214 = vmatprep.subr.bf16.mxu0 0
      %2215 = vmatpush1.bf16.msra.mxu0 0
      %2216 = vmatprep.subr.bf16.mxu0 0
      %2217 = vmatpush1.bf16.msra.mxu0 0
      %2218 = vmatprep.subr.bf16.mxu0 %v2210
      %2219 = vmatpush1.bf16.msra.mxu0 %v2207
      %2220 = vmatprep.subr.bf16.mxu0 %v2192
      %2221 = vmatpush1.bf16.msra.mxu0 %v2191
      %2222 = vmatprep.subr.bf16.mxu0 %v2190
      %2223 = vmatpush1.bf16.msra.mxu0 %v2189
      %2224 = vmatprep.subr.bf16.mxu0 %v2188
      %2225 = vmatpush1.bf16.msra.mxu0 %v2187
      %2226 = vmatprep.subr.bf16.mxu0 %v2186
      %2227 = vmatpush1.bf16.msra.mxu0 %v2185
      %2228 = vmatprep.subr.bf16.mxu0 0
      %2229 = vmatpush2.bf16.msra.mxu0 0
      %2230 = vmatprep.subr.bf16.mxu0 0
      %2231 = vmatpush2.bf16.msra.mxu0 0
      %2232 = vmatprep.subr.bf16.mxu0 0
      %2233 = vmatpush2.bf16.msra.mxu0 0
      %2234 = vmatprep.subr.bf16.mxu0 0
      %2235 = vmatpush2.bf16.msra.mxu0 0
      %2236 = vmatprep.subr.bf16.mxu0 0
      %2237 = vmatpush2.bf16.msra.mxu0 0
      %2238 = vmatprep.subr.bf16.mxu0 0
      %2239 = vmatpush2.bf16.msra.mxu0 0
      %2240 = vmatprep.subr.bf16.mxu0 0
      %2241 = vmatpush2.bf16.msra.mxu0 0
      %2242 = vmatprep.subr.bf16.mxu0 0
      %2243 = vmatpush2.bf16.msra.mxu0 0
      %2244 = vmatprep.mubr.bf16.mxu0 0
      %2245 = vmatmul.mubr.bf16.gmra.mxu0 %v2204
      %v2246 = vpop.f32.mrf.mxu0
      %v2247 = vadd.f32 %v2150, %v2246
      %v2248 = vpop.f32.mrf.mxu0
      %v2249 = vadd.f32 %v2152, %v2248
      %v2250 = vpop.f32.mrf.mxu0
      %v2251 = vadd.f32 %v2154, %v2250
      %v2252 = vpop.f32.mrf.mxu0
      %v2253 = vadd.f32 %v2156, %v2252
      %2254 = vdwg.mxu0
      %s2255 = scalar_lea.vmem %s8, 144
      %v2256 = vld [vmem:[%s2255] sm:$0xff]
      %v2257 = vld [vmem:[%s2255 + $0x8] sm:$0xff]
      %v2258 = vld [vmem:[%s2255 + $0x10] sm:$0xff]
      %v2259 = vld [vmem:[%s2255 + $0x18] sm:$0xff]
      %v2260 = vld [vmem:[%s2255 + $0x20] sm:$0xff]
      %v2261 = vld [vmem:[%s2255 + $0x28] sm:$0xff]
      %v2262 = vld [vmem:[%s2255 + $0x30] sm:$0xff]
      %v2263 = vld [vmem:[%s2255 + $0x38] sm:$0xff]
      %v2264 = vld [vmem:[%s2255 + $0x40] sm:$0xff]
      %2265 = vrot.lane.b32.xlu0 %v2037, 112
      %v2266 = vpop.permute.xlu0 %2265
      %v2276 = vunpack.c.l.b16 %v2256
      %v2277 = vunpack.c.h.b16 %v2256
      %v2278 = vunpack.c.l.b16 %v2257
      %v2279 = vunpack.c.h.b16 %v2257
      %v2280 = vunpack.c.l.b16 %v2258
      %v2281 = vunpack.c.h.b16 %v2258
      %v2282 = vunpack.c.l.b16 %v2259
      %v2283 = vunpack.c.h.b16 %v2259
      %v2284 = vunpack.c.l.b16 %v2260
      %v2285 = vunpack.c.h.b16 %v2260
      %v2286 = vunpack.c.l.b16 %v2261
      %v2287 = vunpack.c.h.b16 %v2261
      %v2288 = vunpack.c.l.b16 %v2262
      %v2289 = vunpack.c.h.b16 %v2262
      %v2290 = vunpack.c.l.b16 %v2263
      %v2291 = vunpack.c.h.b16 %v2263
      %v2292 = vunpack.c.l.b16 %v2264
      %v2293 = vunpack.c.h.b16 %v2264
      %v2294 = vpack.c.b16 %v2278, %v2276
      %v2295 = vpack.c.b16 %v2279, %v2277
      %v2296 = vpack.c.b16 %v2282, %v2280
      %v2297 = vpack.c.b16 %v2283, %v2281
      %v2298 = vpack.c.b16 %v2286, %v2284
      %v2299 = vpack.c.b16 %v2287, %v2285
      %v2300 = vpack.c.b16 %v2290, %v2288
      %v2301 = vpack.c.b16 %v2291, %v2289
      %v2302 = vpack.c.b16 %v2292, %v2292
      %v2303 = vpack.c.b16 %v2293, %v2293
      %v2313 = vsel %vm2105, %v2266, 0
      %v2316 = vsel %vm861, %v2302, 0
      %v2319 = vsel %vm861, %v2303, 0
      %2321 = vmatprep.subr.bf16.mxu0 0
      %2322 = vmatpush1.bf16.msra.mxu0 0
      %2323 = vmatprep.subr.bf16.mxu0 0
      %2324 = vmatpush1.bf16.msra.mxu0 0
      %2325 = vmatprep.subr.bf16.mxu0 0
      %2326 = vmatpush1.bf16.msra.mxu0 0
      %2327 = vmatprep.subr.bf16.mxu0 %v2319
      %2328 = vmatpush1.bf16.msra.mxu0 %v2316
      %2329 = vmatprep.subr.bf16.mxu0 %v2301
      %2330 = vmatpush1.bf16.msra.mxu0 %v2300
      %2331 = vmatprep.subr.bf16.mxu0 %v2299
      %2332 = vmatpush1.bf16.msra.mxu0 %v2298
      %2333 = vmatprep.subr.bf16.mxu0 %v2297
      %2334 = vmatpush1.bf16.msra.mxu0 %v2296
      %2335 = vmatprep.subr.bf16.mxu0 %v2295
      %2336 = vmatpush1.bf16.msra.mxu0 %v2294
      %2337 = vmatprep.subr.bf16.mxu0 0
      %2338 = vmatpush2.bf16.msra.mxu0 0
      %2339 = vmatprep.subr.bf16.mxu0 0
      %2340 = vmatpush2.bf16.msra.mxu0 0
      %2341 = vmatprep.subr.bf16.mxu0 0
      %2342 = vmatpush2.bf16.msra.mxu0 0
      %2343 = vmatprep.subr.bf16.mxu0 0
      %2344 = vmatpush2.bf16.msra.mxu0 0
      %2345 = vmatprep.subr.bf16.mxu0 0
      %2346 = vmatpush2.bf16.msra.mxu0 0
      %2347 = vmatprep.subr.bf16.mxu0 0
      %2348 = vmatpush2.bf16.msra.mxu0 0
      %2349 = vmatprep.subr.bf16.mxu0 0
      %2350 = vmatpush2.bf16.msra.mxu0 0
      %2351 = vmatprep.subr.bf16.mxu0 0
      %2352 = vmatpush2.bf16.msra.mxu0 0
      %2353 = vmatprep.mubr.bf16.mxu0 0
      %2354 = vmatmul.mubr.bf16.gmra.mxu0 %v2313
      %v2355 = vpop.f32.mrf.mxu0
      %v2356 = vadd.f32 0.0, %v2355
      %v2357 = vpop.f32.mrf.mxu0
      %v2358 = vadd.f32 0.0, %v2357
      %v2359 = vpop.f32.mrf.mxu0
      %v2360 = vadd.f32 0.0, %v2359
      %v2361 = vpop.f32.mrf.mxu0
      %v2362 = vadd.f32 0.0, %v2361
      %2363 = vdwg.mxu0
      %v2364 = vadd.f32 %v2247, %v2356
      %v2365 = vadd.f32 %v2249, %v2358
      %v2366 = vadd.f32 %v2251, %v2360
      %v2367 = vadd.f32 %v2253, %v2362
      %v2368 = vld [vmem:[#allocation3 + $0x1] sm:$0xff]
      %v2369 = vld [vmem:[#allocation3 + $0x9] sm:$0x1]
      %v2370 = vpack.c.bf16 %v2369, %v2368
      %s2371 = scalar_lea.vmem %s8, 216
      %v2372 = vld [vmem:[%s2371] sm:$0xff]
      %v2373 = vld [vmem:[%s2371 + $0x8] sm:$0xff]
      %v2374 = vld [vmem:[%s2371 + $0x10] sm:$0xff]
      %v2375 = vld [vmem:[%s2371 + $0x18] sm:$0xff]
      %v2376 = vld [vmem:[%s2371 + $0x20] sm:$0xff]
      %v2377 = vld [vmem:[%s2371 + $0x28] sm:$0xff]
      %v2378 = vld [vmem:[%s2371 + $0x30] sm:$0xff]
      %v2379 = vld [vmem:[%s2371 + $0x38] sm:$0xff]
      %v2380 = vld [vmem:[%s2371 + $0x40] sm:$0xff]
      %v2390 = vunpack.c.l.b16 %v2372
      %v2391 = vunpack.c.h.b16 %v2372
      %v2392 = vunpack.c.l.b16 %v2373
      %v2393 = vunpack.c.h.b16 %v2373
      %v2394 = vunpack.c.l.b16 %v2374
      %v2395 = vunpack.c.h.b16 %v2374
      %v2396 = vunpack.c.l.b16 %v2375
      %v2397 = vunpack.c.h.b16 %v2375
      %v2398 = vunpack.c.l.b16 %v2376
      %v2399 = vunpack.c.h.b16 %v2376
      %v2400 = vunpack.c.l.b16 %v2377
      %v2401 = vunpack.c.h.b16 %v2377
      %v2402 = vunpack.c.l.b16 %v2378
      %v2403 = vunpack.c.h.b16 %v2378
      %v2404 = vunpack.c.l.b16 %v2379
      %v2405 = vunpack.c.h.b16 %v2379
      %v2406 = vunpack.c.l.b16 %v2380
      %v2407 = vunpack.c.h.b16 %v2380
      %v2408 = vpack.c.b16 %v2392, %v2390
      %v2409 = vpack.c.b16 %v2393, %v2391
      %v2410 = vpack.c.b16 %v2396, %v2394
      %v2411 = vpack.c.b16 %v2397, %v2395
      %v2412 = vpack.c.b16 %v2400, %v2398
      %v2413 = vpack.c.b16 %v2401, %v2399
      %v2414 = vpack.c.b16 %v2404, %v2402
      %v2415 = vpack.c.b16 %v2405, %v2403
      %v2416 = vpack.c.b16 %v2406, %v2406
      %v2417 = vpack.c.b16 %v2407, %v2407
      %v2427 = vsel %vm2105, %v2370, 0
      %v2430 = vsel %vm861, %v2416, 0
      %v2433 = vsel %vm861, %v2417, 0
      %2435 = vmatprep.subr.bf16.mxu0 0
      %2436 = vmatpush1.bf16.msra.mxu0 0
      %2437 = vmatprep.subr.bf16.mxu0 0
      %2438 = vmatpush1.bf16.msra.mxu0 0
      %2439 = vmatprep.subr.bf16.mxu0 0
      %2440 = vmatpush1.bf16.msra.mxu0 0
      %2441 = vmatprep.subr.bf16.mxu0 %v2433
      %2442 = vmatpush1.bf16.msra.mxu0 %v2430
      %2443 = vmatprep.subr.bf16.mxu0 %v2415
      %2444 = vmatpush1.bf16.msra.mxu0 %v2414
      %2445 = vmatprep.subr.bf16.mxu0 %v2413
      %2446 = vmatpush1.bf16.msra.mxu0 %v2412
      %2447 = vmatprep.subr.bf16.mxu0 %v2411
      %2448 = vmatpush1.bf16.msra.mxu0 %v2410
      %2449 = vmatprep.subr.bf16.mxu0 %v2409
      %2450 = vmatpush1.bf16.msra.mxu0 %v2408
      %2451 = vmatprep.subr.bf16.mxu0 0
      %2452 = vmatpush2.bf16.msra.mxu0 0
      %2453 = vmatprep.subr.bf16.mxu0 0
      %2454 = vmatpush2.bf16.msra.mxu0 0
      %2455 = vmatprep.subr.bf16.mxu0 0
      %2456 = vmatpush2.bf16.msra.mxu0 0
      %2457 = vmatprep.subr.bf16.mxu0 0
      %2458 = vmatpush2.bf16.msra.mxu0 0
      %2459 = vmatprep.subr.bf16.mxu0 0
      %2460 = vmatpush2.bf16.msra.mxu0 0
      %2461 = vmatprep.subr.bf16.mxu0 0
      %2462 = vmatpush2.bf16.msra.mxu0 0
      %2463 = vmatprep.subr.bf16.mxu0 0
      %2464 = vmatpush2.bf16.msra.mxu0 0
      %2465 = vmatprep.subr.bf16.mxu0 0
      %2466 = vmatpush2.bf16.msra.mxu0 0
      %2467 = vmatprep.mubr.bf16.mxu0 0
      %2468 = vmatmul.mubr.bf16.gmra.mxu0 %v2427
      %v2469 = vpop.f32.mrf.mxu0
      %v2470 = vadd.f32 0.0, %v2469
      %v2471 = vpop.f32.mrf.mxu0
      %v2472 = vadd.f32 0.0, %v2471
      %v2473 = vpop.f32.mrf.mxu0
      %v2474 = vadd.f32 0.0, %v2473
      %v2475 = vpop.f32.mrf.mxu0
      %v2476 = vadd.f32 0.0, %v2475
      %2477 = vdwg.mxu0
      %v2478 = vadd.f32 %v2364, %v2470
      %v2479 = vadd.f32 %v2365, %v2472
      %v2480 = vadd.f32 %v2366, %v2474
      %v2481 = vadd.f32 %v2367, %v2476
      %s2482 = scalar_lea.vmem %s8, 288
      %v2483 = vld [vmem:[%s2482] sm:$0xff]
      %v2484 = vld [vmem:[%s2482 + $0x8] sm:$0xff]
      %v2485 = vld [vmem:[%s2482 + $0x10] sm:$0xff]
      %v2486 = vld [vmem:[%s2482 + $0x18] sm:$0xff]
      %v2487 = vld [vmem:[%s2482 + $0x20] sm:$0xff]
      %v2488 = vld [vmem:[%s2482 + $0x28] sm:$0xff]
      %v2489 = vld [vmem:[%s2482 + $0x30] sm:$0xff]
      %v2490 = vld [vmem:[%s2482 + $0x38] sm:$0xff]
      %v2491 = vld [vmem:[%s2482 + $0x40] sm:$0xff]
      %2493 = vrot.lane.b32.xlu0 %v2370, 120
      %v2494 = vpop.permute.xlu0 %2493
      %v2504 = vunpack.c.l.b16 %v2483
      %v2505 = vunpack.c.h.b16 %v2483
      %v2506 = vunpack.c.l.b16 %v2484
      %v2507 = vunpack.c.h.b16 %v2484
      %v2508 = vunpack.c.l.b16 %v2485
      %v2509 = vunpack.c.h.b16 %v2485
      %v2510 = vunpack.c.l.b16 %v2486
      %v2511 = vunpack.c.h.b16 %v2486
      %v2512 = vunpack.c.l.b16 %v2487
      %v2513 = vunpack.c.h.b16 %v2487
      %v2514 = vunpack.c.l.b16 %v2488
      %v2515 = vunpack.c.h.b16 %v2488
      %v2516 = vunpack.c.l.b16 %v2489
      %v2517 = vunpack.c.h.b16 %v2489
      %v2518 = vunpack.c.l.b16 %v2490
      %v2519 = vunpack.c.h.b16 %v2490
      %v2520 = vunpack.c.l.b16 %v2491
      %v2521 = vunpack.c.h.b16 %v2491
      %v2522 = vpack.c.b16 %v2506, %v2504
      %v2523 = vpack.c.b16 %v2507, %v2505
      %v2524 = vpack.c.b16 %v2510, %v2508
      %v2525 = vpack.c.b16 %v2511, %v2509
      %v2526 = vpack.c.b16 %v2514, %v2512
      %v2527 = vpack.c.b16 %v2515, %v2513
      %v2528 = vpack.c.b16 %v2518, %v2516
      %v2529 = vpack.c.b16 %v2519, %v2517
      %v2530 = vpack.c.b16 %v2520, %v2520
      %v2531 = vpack.c.b16 %v2521, %v2521
      %v2541 = vsel %vm2105, %v2494, 0
      %v2544 = vsel %vm861, %v2530, 0
      %v2547 = vsel %vm861, %v2531, 0
      %2549 = vmatprep.subr.bf16.mxu0 0
      %2550 = vmatpush1.bf16.msra.mxu0 0
      %2551 = vmatprep.subr.bf16.mxu0 0
      %2552 = vmatpush1.bf16.msra.mxu0 0
      %2553 = vmatprep.subr.bf16.mxu0 0
      %2554 = vmatpush1.bf16.msra.mxu0 0
      %2555 = vmatprep.subr.bf16.mxu0 %v2547
      %2556 = vmatpush1.bf16.msra.mxu0 %v2544
      %2557 = vmatprep.subr.bf16.mxu0 %v2529
      %2558 = vmatpush1.bf16.msra.mxu0 %v2528
      %2559 = vmatprep.subr.bf16.mxu0 %v2527
      %2560 = vmatpush1.bf16.msra.mxu0 %v2526
      %2561 = vmatprep.subr.bf16.mxu0 %v2525
      %2562 = vmatpush1.bf16.msra.mxu0 %v2524
      %2563 = vmatprep.subr.bf16.mxu0 %v2523
      %2564 = vmatpush1.bf16.msra.mxu0 %v2522
      %2565 = vmatprep.subr.bf16.mxu0 0
      %2566 = vmatpush2.bf16.msra.mxu0 0
      %2567 = vmatprep.subr.bf16.mxu0 0
      %2568 = vmatpush2.bf16.msra.mxu0 0
      %2569 = vmatprep.subr.bf16.mxu0 0
      %2570 = vmatpush2.bf16.msra.mxu0 0
      %2571 = vmatprep.subr.bf16.mxu0 0
      %2572 = vmatpush2.bf16.msra.mxu0 0
      %2573 = vmatprep.subr.bf16.mxu0 0
      %2574 = vmatpush2.bf16.msra.mxu0 0
      %2575 = vmatprep.subr.bf16.mxu0 0
      %2576 = vmatpush2.bf16.msra.mxu0 0
      %2577 = vmatprep.subr.bf16.mxu0 0
      %2578 = vmatpush2.bf16.msra.mxu0 0
      %2579 = vmatprep.subr.bf16.mxu0 0
      %2580 = vmatpush2.bf16.msra.mxu0 0
      %2581 = vmatprep.mubr.bf16.mxu0 0
      %2582 = vmatmul.mubr.bf16.gmra.mxu0 %v2541
      %v2583 = vpop.f32.mrf.mxu0
      %v2584 = vadd.f32 0.0, %v2583
      %v2585 = vpop.f32.mrf.mxu0
      %v2586 = vadd.f32 0.0, %v2585
      %v2587 = vpop.f32.mrf.mxu0
      %v2588 = vadd.f32 0.0, %v2587
      %v2589 = vpop.f32.mrf.mxu0
      %v2590 = vadd.f32 0.0, %v2589
      %2591 = vdwg.mxu0
      %v2592 = vadd.f32 %v2478, %v2584
      %v2593 = vadd.f32 %v2479, %v2586
      %v2594 = vadd.f32 %v2480, %v2588
      %v2595 = vadd.f32 %v2481, %v2590
      %s2596 = scalar_lea.vmem %s8, 360
      %v2597 = vld [vmem:[%s2596] sm:$0xff]
      %v2598 = vld [vmem:[%s2596 + $0x8] sm:$0xff]
      %v2599 = vld [vmem:[%s2596 + $0x10] sm:$0xff]
      %v2600 = vld [vmem:[%s2596 + $0x18] sm:$0xff]
      %v2601 = vld [vmem:[%s2596 + $0x20] sm:$0xff]
      %v2602 = vld [vmem:[%s2596 + $0x28] sm:$0xff]
      %v2603 = vld [vmem:[%s2596 + $0x30] sm:$0xff]
      %v2604 = vld [vmem:[%s2596 + $0x38] sm:$0xff]
      %v2605 = vld [vmem:[%s2596 + $0x40] sm:$0xff]
      %2606 = vrot.lane.b32.xlu0 %v2370, 112
      %v2607 = vpop.permute.xlu0 %2606
      %v2617 = vunpack.c.l.b16 %v2597
      %v2618 = vunpack.c.h.b16 %v2597
      %v2619 = vunpack.c.l.b16 %v2598
      %v2620 = vunpack.c.h.b16 %v2598
      %v2621 = vunpack.c.l.b16 %v2599
      %v2622 = vunpack.c.h.b16 %v2599
      %v2623 = vunpack.c.l.b16 %v2600
      %v2624 = vunpack.c.h.b16 %v2600
      %v2625 = vunpack.c.l.b16 %v2601
      %v2626 = vunpack.c.h.b16 %v2601
      %v2627 = vunpack.c.l.b16 %v2602
      %v2628 = vunpack.c.h.b16 %v2602
      %v2629 = vunpack.c.l.b16 %v2603
      %v2630 = vunpack.c.h.b16 %v2603
      %v2631 = vunpack.c.l.b16 %v2604
      %v2632 = vunpack.c.h.b16 %v2604
      %v2633 = vunpack.c.l.b16 %v2605
      %v2634 = vunpack.c.h.b16 %v2605
      %v2635 = vpack.c.b16 %v2619, %v2617
      %v2636 = vpack.c.b16 %v2620, %v2618
      %v2637 = vpack.c.b16 %v2623, %v2621
      %v2638 = vpack.c.b16 %v2624, %v2622
      %v2639 = vpack.c.b16 %v2627, %v2625
      %v2640 = vpack.c.b16 %v2628, %v2626
      %v2641 = vpack.c.b16 %v2631, %v2629
      %v2642 = vpack.c.b16 %v2632, %v2630
      %v2643 = vpack.c.b16 %v2633, %v2633
      %v2644 = vpack.c.b16 %v2634, %v2634
      %v2654 = vsel %vm2105, %v2607, 0
      %v2657 = vsel %vm861, %v2643, 0
      %v2660 = vsel %vm861, %v2644, 0
      %2662 = vmatprep.subr.bf16.mxu0 0
      %2663 = vmatpush1.bf16.msra.mxu0 0
      %2664 = vmatprep.subr.bf16.mxu0 0
      %2665 = vmatpush1.bf16.msra.mxu0 0
      %2666 = vmatprep.subr.bf16.mxu0 0
      %2667 = vmatpush1.bf16.msra.mxu0 0
      %2668 = vmatprep.subr.bf16.mxu0 %v2660
      %2669 = vmatpush1.bf16.msra.mxu0 %v2657
      %2670 = vmatprep.subr.bf16.mxu0 %v2642
      %2671 = vmatpush1.bf16.msra.mxu0 %v2641
      %2672 = vmatprep.subr.bf16.mxu0 %v2640
      %2673 = vmatpush1.bf16.msra.mxu0 %v2639
      %2674 = vmatprep.subr.bf16.mxu0 %v2638
      %2675 = vmatpush1.bf16.msra.mxu0 %v2637
      %2676 = vmatprep.subr.bf16.mxu0 %v2636
      %2677 = vmatpush1.bf16.msra.mxu0 %v2635
      %2678 = vmatprep.subr.bf16.mxu0 0
      %2679 = vmatpush2.bf16.msra.mxu0 0
      %2680 = vmatprep.subr.bf16.mxu0 0
      %2681 = vmatpush2.bf16.msra.mxu0 0
      %2682 = vmatprep.subr.bf16.mxu0 0
      %2683 = vmatpush2.bf16.msra.mxu0 0
      %2684 = vmatprep.subr.bf16.mxu0 0
      %2685 = vmatpush2.bf16.msra.mxu0 0
      %2686 = vmatprep.subr.bf16.mxu0 0
      %2687 = vmatpush2.bf16.msra.mxu0 0
      %2688 = vmatprep.subr.bf16.mxu0 0
      %2689 = vmatpush2.bf16.msra.mxu0 0
      %2690 = vmatprep.subr.bf16.mxu0 0
      %2691 = vmatpush2.bf16.msra.mxu0 0
      %2692 = vmatprep.subr.bf16.mxu0 0
      %2693 = vmatpush2.bf16.msra.mxu0 0
      %2694 = vmatprep.mubr.bf16.mxu0 0
      %2695 = vmatmul.mubr.bf16.gmra.mxu0 %v2654
      %v2696 = vpop.f32.mrf.mxu0
      %v2697 = vadd.f32 0.0, %v2696
      %v2698 = vpop.f32.mrf.mxu0
      %v2699 = vadd.f32 0.0, %v2698
      %v2700 = vpop.f32.mrf.mxu0
      %v2701 = vadd.f32 0.0, %v2700
      %v2702 = vpop.f32.mrf.mxu0
      %v2703 = vadd.f32 0.0, %v2702
      %2704 = vdwg.mxu0
      %v2705 = vadd.f32 %v2592, %v2697
      %v2706 = vadd.f32 %v2593, %v2699
      %v2707 = vadd.f32 %v2594, %v2701
      %v2708 = vadd.f32 %v2595, %v2703
      %v2709 = vld [vmem:[#allocation3 + $0x2] sm:$0xff]
      %v2710 = vld [vmem:[#allocation3 + $0xa] sm:$0x1]
      %v2711 = vpack.c.bf16 %v2710, %v2709
      %s2712 = scalar_lea.vmem %s8, 432
      %v2713 = vld [vmem:[%s2712] sm:$0xff]
      %v2714 = vld [vmem:[%s2712 + $0x8] sm:$0xff]
      %v2715 = vld [vmem:[%s2712 + $0x10] sm:$0xff]
      %v2716 = vld [vmem:[%s2712 + $0x18] sm:$0xff]
      %v2717 = vld [vmem:[%s2712 + $0x20] sm:$0xff]
      %v2718 = vld [vmem:[%s2712 + $0x28] sm:$0xff]
      %v2719 = vld [vmem:[%s2712 + $0x30] sm:$0xff]
      %v2720 = vld [vmem:[%s2712 + $0x38] sm:$0xff]
      %v2721 = vld [vmem:[%s2712 + $0x40] sm:$0xff]
      %v2731 = vunpack.c.l.b16 %v2713
      %v2732 = vunpack.c.h.b16 %v2713
      %v2733 = vunpack.c.l.b16 %v2714
      %v2734 = vunpack.c.h.b16 %v2714
      %v2735 = vunpack.c.l.b16 %v2715
      %v2736 = vunpack.c.h.b16 %v2715
      %v2737 = vunpack.c.l.b16 %v2716
      %v2738 = vunpack.c.h.b16 %v2716
      %v2739 = vunpack.c.l.b16 %v2717
      %v2740 = vunpack.c.h.b16 %v2717
      %v2741 = vunpack.c.l.b16 %v2718
      %v2742 = vunpack.c.h.b16 %v2718
      %v2743 = vunpack.c.l.b16 %v2719
      %v2744 = vunpack.c.h.b16 %v2719
      %v2745 = vunpack.c.l.b16 %v2720
      %v2746 = vunpack.c.h.b16 %v2720
      %v2747 = vunpack.c.l.b16 %v2721
      %v2748 = vunpack.c.h.b16 %v2721
      %v2749 = vpack.c.b16 %v2733, %v2731
      %v2750 = vpack.c.b16 %v2734, %v2732
      %v2751 = vpack.c.b16 %v2737, %v2735
      %v2752 = vpack.c.b16 %v2738, %v2736
      %v2753 = vpack.c.b16 %v2741, %v2739
      %v2754 = vpack.c.b16 %v2742, %v2740
      %v2755 = vpack.c.b16 %v2745, %v2743
      %v2756 = vpack.c.b16 %v2746, %v2744
      %v2757 = vpack.c.b16 %v2747, %v2747
      %v2758 = vpack.c.b16 %v2748, %v2748
      %v2768 = vsel %vm2105, %v2711, 0
      %v2771 = vsel %vm861, %v2757, 0
      %v2774 = vsel %vm861, %v2758, 0
      %2776 = vmatprep.subr.bf16.mxu0 0
      %2777 = vmatpush1.bf16.msra.mxu0 0
      %2778 = vmatprep.subr.bf16.mxu0 0
      %2779 = vmatpush1.bf16.msra.mxu0 0
      %2780 = vmatprep.subr.bf16.mxu0 0
      %2781 = vmatpush1.bf16.msra.mxu0 0
      %2782 = vmatprep.subr.bf16.mxu0 %v2774
      %2783 = vmatpush1.bf16.msra.mxu0 %v2771
      %2784 = vmatprep.subr.bf16.mxu0 %v2756
      %2785 = vmatpush1.bf16.msra.mxu0 %v2755
      %2786 = vmatprep.subr.bf16.mxu0 %v2754
      %2787 = vmatpush1.bf16.msra.mxu0 %v2753
      %2788 = vmatprep.subr.bf16.mxu0 %v2752
      %2789 = vmatpush1.bf16.msra.mxu0 %v2751
      %2790 = vmatprep.subr.bf16.mxu0 %v2750
      %2791 = vmatpush1.bf16.msra.mxu0 %v2749
      %2792 = vmatprep.subr.bf16.mxu0 0
      %2793 = vmatpush2.bf16.msra.mxu0 0
      %2794 = vmatprep.subr.bf16.mxu0 0
      %2795 = vmatpush2.bf16.msra.mxu0 0
      %2796 = vmatprep.subr.bf16.mxu0 0
      %2797 = vmatpush2.bf16.msra.mxu0 0
      %2798 = vmatprep.subr.bf16.mxu0 0
      %2799 = vmatpush2.bf16.msra.mxu0 0
      %2800 = vmatprep.subr.bf16.mxu0 0
      %2801 = vmatpush2.bf16.msra.mxu0 0
      %2802 = vmatprep.subr.bf16.mxu0 0
      %2803 = vmatpush2.bf16.msra.mxu0 0
      %2804 = vmatprep.subr.bf16.mxu0 0
      %2805 = vmatpush2.bf16.msra.mxu0 0
      %2806 = vmatprep.subr.bf16.mxu0 0
      %2807 = vmatpush2.bf16.msra.mxu0 0
      %2808 = vmatprep.mubr.bf16.mxu0 0
      %2809 = vmatmul.mubr.bf16.gmra.mxu0 %v2768
      %v2810 = vpop.f32.mrf.mxu0
      %v2811 = vadd.f32 0.0, %v2810
      %v2812 = vpop.f32.mrf.mxu0
      %v2813 = vadd.f32 0.0, %v2812
      %v2814 = vpop.f32.mrf.mxu0
      %v2815 = vadd.f32 0.0, %v2814
      %v2816 = vpop.f32.mrf.mxu0
      %v2817 = vadd.f32 0.0, %v2816
      %2818 = vdwg.mxu0
      %v2819 = vadd.f32 %v2705, %v2811
      %v2820 = vadd.f32 %v2706, %v2813
      %v2821 = vadd.f32 %v2707, %v2815
      %v2822 = vadd.f32 %v2708, %v2817
      %s2823 = scalar_lea.vmem %s8, 504
      %v2824 = vld [vmem:[%s2823] sm:$0xff]
      %v2825 = vld [vmem:[%s2823 + $0x8] sm:$0xff]
      %v2826 = vld [vmem:[%s2823 + $0x10] sm:$0xff]
      %v2827 = vld [vmem:[%s2823 + $0x18] sm:$0xff]
      %v2828 = vld [vmem:[%s2823 + $0x20] sm:$0xff]
      %v2829 = vld [vmem:[%s2823 + $0x28] sm:$0xff]
      %v2830 = vld [vmem:[%s2823 + $0x30] sm:$0xff]
      %v2831 = vld [vmem:[%s2823 + $0x38] sm:$0xff]
      %v2832 = vld [vmem:[%s2823 + $0x40] sm:$0xff]
      %2834 = vrot.lane.b32.xlu0 %v2711, 120
      %v2835 = vpop.permute.xlu0 %2834
      %v2845 = vunpack.c.l.b16 %v2824
      %v2846 = vunpack.c.h.b16 %v2824
      %v2847 = vunpack.c.l.b16 %v2825
      %v2848 = vunpack.c.h.b16 %v2825
      %v2849 = vunpack.c.l.b16 %v2826
      %v2850 = vunpack.c.h.b16 %v2826
      %v2851 = vunpack.c.l.b16 %v2827
      %v2852 = vunpack.c.h.b16 %v2827
      %v2853 = vunpack.c.l.b16 %v2828
      %v2854 = vunpack.c.h.b16 %v2828
      %v2855 = vunpack.c.l.b16 %v2829
      %v2856 = vunpack.c.h.b16 %v2829
      %v2857 = vunpack.c.l.b16 %v2830
      %v2858 = vunpack.c.h.b16 %v2830
      %v2859 = vunpack.c.l.b16 %v2831
      %v2860 = vunpack.c.h.b16 %v2831
      %v2861 = vunpack.c.l.b16 %v2832
      %v2862 = vunpack.c.h.b16 %v2832
      %v2863 = vpack.c.b16 %v2847, %v2845
      %v2864 = vpack.c.b16 %v2848, %v2846
      %v2865 = vpack.c.b16 %v2851, %v2849
      %v2866 = vpack.c.b16 %v2852, %v2850
      %v2867 = vpack.c.b16 %v2855, %v2853
      %v2868 = vpack.c.b16 %v2856, %v2854
      %v2869 = vpack.c.b16 %v2859, %v2857
      %v2870 = vpack.c.b16 %v2860, %v2858
      %v2871 = vpack.c.b16 %v2861, %v2861
      %v2872 = vpack.c.b16 %v2862, %v2862
      %v2882 = vsel %vm2105, %v2835, 0
      %v2885 = vsel %vm861, %v2871, 0
      %v2888 = vsel %vm861, %v2872, 0
      %2890 = vmatprep.subr.bf16.mxu0 0
      %2891 = vmatpush1.bf16.msra.mxu0 0
      %2892 = vmatprep.subr.bf16.mxu0 0
      %2893 = vmatpush1.bf16.msra.mxu0 0
      %2894 = vmatprep.subr.bf16.mxu0 0
      %2895 = vmatpush1.bf16.msra.mxu0 0
      %2896 = vmatprep.subr.bf16.mxu0 %v2888
      %2897 = vmatpush1.bf16.msra.mxu0 %v2885
      %2898 = vmatprep.subr.bf16.mxu0 %v2870
      %2899 = vmatpush1.bf16.msra.mxu0 %v2869
      %2900 = vmatprep.subr.bf16.mxu0 %v2868
      %2901 = vmatpush1.bf16.msra.mxu0 %v2867
      %2902 = vmatprep.subr.bf16.mxu0 %v2866
      %2903 = vmatpush1.bf16.msra.mxu0 %v2865
      %2904 = vmatprep.subr.bf16.mxu0 %v2864
      %2905 = vmatpush1.bf16.msra.mxu0 %v2863
      %2906 = vmatprep.subr.bf16.mxu0 0
      %2907 = vmatpush2.bf16.msra.mxu0 0
      %2908 = vmatprep.subr.bf16.mxu0 0
      %2909 = vmatpush2.bf16.msra.mxu0 0
      %2910 = vmatprep.subr.bf16.mxu0 0
      %2911 = vmatpush2.bf16.msra.mxu0 0
      %2912 = vmatprep.subr.bf16.mxu0 0
      %2913 = vmatpush2.bf16.msra.mxu0 0
      %2914 = vmatprep.subr.bf16.mxu0 0
      %2915 = vmatpush2.bf16.msra.mxu0 0
      %2916 = vmatprep.subr.bf16.mxu0 0
      %2917 = vmatpush2.bf16.msra.mxu0 0
      %2918 = vmatprep.subr.bf16.mxu0 0
      %2919 = vmatpush2.bf16.msra.mxu0 0
      %2920 = vmatprep.subr.bf16.mxu0 0
      %2921 = vmatpush2.bf16.msra.mxu0 0
      %2922 = vmatprep.mubr.bf16.mxu0 0
      %2923 = vmatmul.mubr.bf16.gmra.mxu0 %v2882
      %v2924 = vpop.f32.mrf.mxu0
      %v2925 = vadd.f32 0.0, %v2924
      %v2926 = vpop.f32.mrf.mxu0
      %v2927 = vadd.f32 0.0, %v2926
      %v2928 = vpop.f32.mrf.mxu0
      %v2929 = vadd.f32 0.0, %v2928
      %v2930 = vpop.f32.mrf.mxu0
      %v2931 = vadd.f32 0.0, %v2930
      %2932 = vdwg.mxu0
      %v2933 = vadd.f32 %v2819, %v2925
      %v2934 = vadd.f32 %v2820, %v2927
      %v2935 = vadd.f32 %v2821, %v2929
      %v2936 = vadd.f32 %v2822, %v2931
      %s2937 = scalar_lea.vmem %s8, 576
      %v2938 = vld [vmem:[%s2937] sm:$0xff]
      %v2939 = vld [vmem:[%s2937 + $0x8] sm:$0xff]
      %v2940 = vld [vmem:[%s2937 + $0x10] sm:$0xff]
      %v2941 = vld [vmem:[%s2937 + $0x18] sm:$0xff]
      %v2942 = vld [vmem:[%s2937 + $0x20] sm:$0xff]
      %v2943 = vld [vmem:[%s2937 + $0x28] sm:$0xff]
      %v2944 = vld [vmem:[%s2937 + $0x30] sm:$0xff]
      %v2945 = vld [vmem:[%s2937 + $0x38] sm:$0xff]
      %v2946 = vld [vmem:[%s2937 + $0x40] sm:$0xff]
      %2947 = vrot.lane.b32.xlu0 %v2711, 112
      %v2948 = vpop.permute.xlu0 %2947
      %v2958 = vunpack.c.l.b16 %v2938
      %v2959 = vunpack.c.h.b16 %v2938
      %v2960 = vunpack.c.l.b16 %v2939
      %v2961 = vunpack.c.h.b16 %v2939
      %v2962 = vunpack.c.l.b16 %v2940
      %v2963 = vunpack.c.h.b16 %v2940
      %v2964 = vunpack.c.l.b16 %v2941
      %v2965 = vunpack.c.h.b16 %v2941
      %v2966 = vunpack.c.l.b16 %v2942
      %v2967 = vunpack.c.h.b16 %v2942
      %v2968 = vunpack.c.l.b16 %v2943
      %v2969 = vunpack.c.h.b16 %v2943
      %v2970 = vunpack.c.l.b16 %v2944
      %v2971 = vunpack.c.h.b16 %v2944
      %v2972 = vunpack.c.l.b16 %v2945
      %v2973 = vunpack.c.h.b16 %v2945
      %v2974 = vunpack.c.l.b16 %v2946
      %v2975 = vunpack.c.h.b16 %v2946
      %v2976 = vpack.c.b16 %v2960, %v2958
      %v2977 = vpack.c.b16 %v2961, %v2959
      %v2978 = vpack.c.b16 %v2964, %v2962
      %v2979 = vpack.c.b16 %v2965, %v2963
      %v2980 = vpack.c.b16 %v2968, %v2966
      %v2981 = vpack.c.b16 %v2969, %v2967
      %v2982 = vpack.c.b16 %v2972, %v2970
      %v2983 = vpack.c.b16 %v2973, %v2971
      %v2984 = vpack.c.b16 %v2974, %v2974
      %v2985 = vpack.c.b16 %v2975, %v2975
      %v2995 = vsel %vm2105, %v2948, 0
      %v2998 = vsel %vm861, %v2984, 0
      %v3001 = vsel %vm861, %v2985, 0
      %3003 = vmatprep.subr.bf16.mxu0 0
      %3004 = vmatpush1.bf16.msra.mxu0 0
      %3005 = vmatprep.subr.bf16.mxu0 0
      %3006 = vmatpush1.bf16.msra.mxu0 0
      %3007 = vmatprep.subr.bf16.mxu0 0
      %3008 = vmatpush1.bf16.msra.mxu0 0
      %3009 = vmatprep.subr.bf16.mxu0 %v3001
      %3010 = vmatpush1.bf16.msra.mxu0 %v2998
      %3011 = vmatprep.subr.bf16.mxu0 %v2983
      %3012 = vmatpush1.bf16.msra.mxu0 %v2982
      %3013 = vmatprep.subr.bf16.mxu0 %v2981
      %3014 = vmatpush1.bf16.msra.mxu0 %v2980
      %3015 = vmatprep.subr.bf16.mxu0 %v2979
      %3016 = vmatpush1.bf16.msra.mxu0 %v2978
      %3017 = vmatprep.subr.bf16.mxu0 %v2977
      %3018 = vmatpush1.bf16.msra.mxu0 %v2976
      %3019 = vmatprep.subr.bf16.mxu0 0
      %3020 = vmatpush2.bf16.msra.mxu0 0
      %3021 = vmatprep.subr.bf16.mxu0 0
      %3022 = vmatpush2.bf16.msra.mxu0 0
      %3023 = vmatprep.subr.bf16.mxu0 0
      %3024 = vmatpush2.bf16.msra.mxu0 0
      %3025 = vmatprep.subr.bf16.mxu0 0
      %3026 = vmatpush2.bf16.msra.mxu0 0
      %3027 = vmatprep.subr.bf16.mxu0 0
      %3028 = vmatpush2.bf16.msra.mxu0 0
      %3029 = vmatprep.subr.bf16.mxu0 0
      %3030 = vmatpush2.bf16.msra.mxu0 0
      %3031 = vmatprep.subr.bf16.mxu0 0
      %3032 = vmatpush2.bf16.msra.mxu0 0
      %3033 = vmatprep.subr.bf16.mxu0 0
      %3034 = vmatpush2.bf16.msra.mxu0 0
      %3035 = vmatprep.mubr.bf16.mxu0 0
      %3036 = vmatmul.mubr.bf16.gmra.mxu0 %v2995
      %v3037 = vpop.f32.mrf.mxu0
      %v3038 = vadd.f32 0.0, %v3037
      %v3039 = vpop.f32.mrf.mxu0
      %v3040 = vadd.f32 0.0, %v3039
      %v3041 = vpop.f32.mrf.mxu0
      %v3042 = vadd.f32 0.0, %v3041
      %v3043 = vpop.f32.mrf.mxu0
      %v3044 = vadd.f32 0.0, %v3043
      %3045 = vdwg.mxu0
      %v3046 = vadd.f32 %v2933, %v3038
      %v3047 = vadd.f32 %v2934, %v3040
      %v3048 = vadd.f32 %v2935, %v3042
      %v3049 = vadd.f32 %v2936, %v3044
      %v3050 = vld [vmem:[%s9] sm:$0x3]
      %v3052 = vlaneseq
      %v3053 = vshrl.u32 %v3052, 7
      %v3054 = vsub.s32 0, %v3053
      %v3055 = vrot.slane %v3050, %v3054
      %v3056 = vlaneseq
      %v3057 = vshrl.u32 %v3056, 7
      %v3058 = vsub.s32 1, %v3057
      %v3059 = vrot.slane %v3050, %v3058
      %v3062 = vadd.f32 %v3046, %v3055
      %v3063 = vadd.f32 %v3047, %v3059
      %v3064 = vadd.f32 %v3048, %v3055
      %v3065 = vadd.f32 %v3049, %v3059
      %v3066 = vmax.f32 %v3062, 0.0
      %v3067 = vmax.f32 %v3063, 0.0
      %v3068 = vmax.f32 %v3064, 0.0
      %v3069 = vmax.f32 %v3065, 0.0
      %3070 = vst [vmem:[#allocation5] sm:$0xff] %v3066
      %vm3071 = vcmask 130048
      %3072 = vst.msk [vmem:[#allocation5 + $0x8] sm:$0xff] %vm3071, %v3067
      %3073 = vst [vmem:[#allocation5 + $0x10] sm:$0x1] %v3068
      %vm3074 = vcmask 122880
      %3075 = vst.msk [vmem:[#allocation5 + $0x18] sm:$0x1] %vm3074, %v3069
      %v3076 = vld [vmem:[#allocation4] sm:$0x1f]
      %v3077 = vlaneseq
      %v3078 = vshrl.u32 %v3077, 7
      %v3079 = vlaneseq
      %v3080 = vand.u32 %v3079, 127
      %v3081 = vld [vmem:[#allocation5] sm:$0x1f]
      %v3082 = vmul.f32 %v3081, %v3076
      %v3083 = vsel %vm1467, %v3082, 0.0
      %3084 = vadd.xlane.f32.xlu0 %v3083
      %v3085 = vpop.xlane.xlu0 %3084
      %v3086 = vsel %vm415, %v3085, 0.0
      %v3087 = vrot.slane %v3086, 4
      %v3088 = vadd.f32 %v3086, %v3087
      %v3089 = vrot.slane %v3088, 2
      %v3090 = vadd.f32 %v3088, %v3089
      %v3091 = vrot.slane %v3090, 1
      %v3092 = vadd.f32 %v3090, %v3091
      %vm3093 = vcmp.eq.s32.totalorder %v3078, 0
      %vm3094 = vcmp.eq.s32.totalorder %v3080, 0
      %vm3095 = vmand %vm3093, %vm3094
      %v3096 = vsel %vm3095, 1, 0
      %v3097 = vcvt.s32.f32 %v3096
      %v3098 = vmul.f32 %v3092, %v3097
      %v3099 = vadd.f32 %v3098, 0.0
      %3101 = vrot.lane.b32.xlu0 %v3076, 16
      %v3102 = vpop.permute.xlu0 %3101
      %v3104 = vmul.f32 %v3081, %v3102
      %3106 = vrot.lane.b32.xlu0 %v3104, 112
      %v3107 = vpop.permute.xlu0 %3106
      %v3109 = vsel %vm1467, %v3107, 0.0
      %3110 = vadd.xlane.f32.xlu0 %v3109
      %v3111 = vpop.xlane.xlu0 %3110
      %v3112 = vsel %vm415, %v3111, 0.0
      %v3113 = vrot.slane %v3112, 4
      %v3114 = vadd.f32 %v3112, %v3113
      %v3115 = vrot.slane %v3114, 2
      %v3116 = vadd.f32 %v3114, %v3115
      %v3117 = vrot.slane %v3116, 1
      %v3118 = vadd.f32 %v3116, %v3117
      %vm3119 = vcmp.eq.s32.totalorder %v3080, 1
      %vm3120 = vmand %vm3093, %vm3119
      %v3121 = vsel %vm3120, 1, 0
      %v3122 = vcvt.s32.f32 %v3121
      %v3123 = vmul.f32 %v3118, %v3122
      %v3124 = vadd.f32 %v3099, %v3123
      %3125 = vrot.lane.b32.xlu0 %v3076, 32
      %v3126 = vpop.permute.xlu0 %3125
      %v3128 = vmul.f32 %v3081, %v3126
      %3130 = vrot.lane.b32.xlu0 %v3128, 96
      %v3131 = vpop.permute.xlu0 %3130
      %v3133 = vsel %vm1467, %v3131, 0.0
      %3134 = vadd.xlane.f32.xlu0 %v3133
      %v3135 = vpop.xlane.xlu0 %3134
      %v3136 = vsel %vm415, %v3135, 0.0
      %v3137 = vrot.slane %v3136, 4
      %v3138 = vadd.f32 %v3136, %v3137
      %v3139 = vrot.slane %v3138, 2
      %v3140 = vadd.f32 %v3138, %v3139
      %v3141 = vrot.slane %v3140, 1
      %v3142 = vadd.f32 %v3140, %v3141
      %vm3143 = vcmp.eq.s32.totalorder %v3080, 2
      %vm3144 = vmand %vm3093, %vm3143
      %v3145 = vsel %vm3144, 1, 0
      %v3146 = vcvt.s32.f32 %v3145
      %v3147 = vmul.f32 %v3142, %v3146
      %v3148 = vadd.f32 %v3124, %v3147
      %3149 = vrot.lane.b32.xlu0 %v3076, 48
      %v3150 = vpop.permute.xlu0 %3149
      %v3152 = vmul.f32 %v3081, %v3150
      %3154 = vrot.lane.b32.xlu0 %v3152, 80
      %v3155 = vpop.permute.xlu0 %3154
      %v3157 = vsel %vm1467, %v3155, 0.0
      %3158 = vadd.xlane.f32.xlu0 %v3157
      %v3159 = vpop.xlane.xlu0 %3158
      %v3160 = vsel %vm415, %v3159, 0.0
      %v3161 = vrot.slane %v3160, 4
      %v3162 = vadd.f32 %v3160, %v3161
      %v3163 = vrot.slane %v3162, 2
      %v3164 = vadd.f32 %v3162, %v3163
      %v3165 = vrot.slane %v3164, 1
      %v3166 = vadd.f32 %v3164, %v3165
      %vm3167 = vcmp.eq.s32.totalorder %v3080, 3
      %vm3168 = vmand %vm3093, %vm3167
      %v3169 = vsel %vm3168, 1, 0
      %v3170 = vcvt.s32.f32 %v3169
      %v3171 = vmul.f32 %v3166, %v3170
      %v3172 = vadd.f32 %v3148, %v3171
      %v3173 = vld [vmem:[#allocation5 + $0x8] sm:$0x1f]
      %3174 = vrot.lane.b32.xlu0 %v3076, 64
      %v3175 = vpop.permute.xlu0 %3174
      %v3177 = vmul.f32 %v3081, %v3175
      %v3178 = vmul.f32 %v3173, %v3175
      %3181 = vrot.lane.b32.xlu0 %v3177, 64
      %v3182 = vpop.permute.xlu0 %3181
      %3183 = vrot.lane.b32.xlu0 %v3178, 64
      %v3184 = vpop.permute.xlu0 %3183
      %vm3185 = vcmask 523264
      %v3186 = vsel %vm3185, %v3182, %v3184
      %v3188 = vsel %vm1467, %v3186, 0.0
      %3189 = vadd.xlane.f32.xlu0 %v3188
      %v3190 = vpop.xlane.xlu0 %3189
      %v3191 = vsel %vm415, %v3190, 0.0
      %v3192 = vrot.slane %v3191, 4
      %v3193 = vadd.f32 %v3191, %v3192
      %v3194 = vrot.slane %v3193, 2
      %v3195 = vadd.f32 %v3193, %v3194
      %v3196 = vrot.slane %v3195, 1
      %v3197 = vadd.f32 %v3195, %v3196
      %vm3198 = vcmp.eq.s32.totalorder %v3080, 4
      %vm3199 = vmand %vm3093, %vm3198
      %v3200 = vsel %vm3199, 1, 0
      %v3201 = vcvt.s32.f32 %v3200
      %v3202 = vmul.f32 %v3197, %v3201
      %v3203 = vadd.f32 %v3172, %v3202
      %v3204 = vld [vmem:[#allocation5] sm:$0x3e]
      %v3205 = vrot.slane %v3076, 7
      %v3207 = vmul.f32 %v3204, %v3205
      %vm3208 = vcmask 652289
      %v3209 = vsel %vm3208, %v3207, 0.0
      %3210 = vadd.xlane.f32.xlu0 %v3209
      %v3211 = vpop.xlane.xlu0 %3210
      %v3213 = vrot.slane %v3211, 1
      %v3215 = vsel %vm415, %v3213, 0.0
      %v3216 = vrot.slane %v3215, 4
      %v3217 = vadd.f32 %v3215, %v3216
      %v3218 = vrot.slane %v3217, 2
      %v3219 = vadd.f32 %v3217, %v3218
      %v3220 = vrot.slane %v3219, 1
      %v3221 = vadd.f32 %v3219, %v3220
      %vm3222 = vcmp.eq.s32.totalorder %v3078, 1
      %vm3223 = vmand %vm3222, %vm3094
      %v3224 = vsel %vm3223, 1, 0
      %v3225 = vcvt.s32.f32 %v3224
      %v3226 = vmul.f32 %v3221, %v3225
      %v3227 = vadd.f32 %v3203, %v3226
      %3228 = vrot.lane.b32.xlu0 %v3205, 16
      %v3229 = vpop.permute.xlu0 %3228
      %v3231 = vmul.f32 %v3204, %v3229
      %3233 = vrot.lane.b32.xlu0 %v3231, 112
      %v3234 = vpop.permute.xlu0 %3233
      %v3236 = vsel %vm3208, %v3234, 0.0
      %3237 = vadd.xlane.f32.xlu0 %v3236
      %v3238 = vpop.xlane.xlu0 %3237
      %v3240 = vrot.slane %v3238, 1
      %v3242 = vsel %vm415, %v3240, 0.0
      %v3243 = vrot.slane %v3242, 4
      %v3244 = vadd.f32 %v3242, %v3243
      %v3245 = vrot.slane %v3244, 2
      %v3246 = vadd.f32 %v3244, %v3245
      %v3247 = vrot.slane %v3246, 1
      %v3248 = vadd.f32 %v3246, %v3247
      %vm3249 = vmand %vm3222, %vm3119
      %v3250 = vsel %vm3249, 1, 0
      %v3251 = vcvt.s32.f32 %v3250
      %v3252 = vmul.f32 %v3248, %v3251
      %v3253 = vadd.f32 %v3227, %v3252
      %3254 = vrot.lane.b32.xlu0 %v3205, 32
      %v3255 = vpop.permute.xlu0 %3254
      %v3257 = vmul.f32 %v3204, %v3255
      %3259 = vrot.lane.b32.xlu0 %v3257, 96
      %v3260 = vpop.permute.xlu0 %3259
      %v3262 = vsel %vm3208, %v3260, 0.0
      %3263 = vadd.xlane.f32.xlu0 %v3262
      %v3264 = vpop.xlane.xlu0 %3263
      %v3266 = vrot.slane %v3264, 1
      %v3268 = vsel %vm415, %v3266, 0.0
      %v3269 = vrot.slane %v3268, 4
      %v3270 = vadd.f32 %v3268, %v3269
      %v3271 = vrot.slane %v3270, 2
      %v3272 = vadd.f32 %v3270, %v3271
      %v3273 = vrot.slane %v3272, 1
      %v3274 = vadd.f32 %v3272, %v3273
      %vm3275 = vmand %vm3222, %vm3143
      %v3276 = vsel %vm3275, 1, 0
      %v3277 = vcvt.s32.f32 %v3276
      %v3278 = vmul.f32 %v3274, %v3277
      %v3279 = vadd.f32 %v3253, %v3278
      %3280 = vrot.lane.b32.xlu0 %v3205, 48
      %v3281 = vpop.permute.xlu0 %3280
      %v3283 = vmul.f32 %v3204, %v3281
      %3285 = vrot.lane.b32.xlu0 %v3283, 80
      %v3286 = vpop.permute.xlu0 %3285
      %v3288 = vsel %vm3208, %v3286, 0.0
      %3289 = vadd.xlane.f32.xlu0 %v3288
      %v3290 = vpop.xlane.xlu0 %3289
      %v3292 = vrot.slane %v3290, 1
      %v3294 = vsel %vm415, %v3292, 0.0
      %v3295 = vrot.slane %v3294, 4
      %v3296 = vadd.f32 %v3294, %v3295
      %v3297 = vrot.slane %v3296, 2
      %v3298 = vadd.f32 %v3296, %v3297
      %v3299 = vrot.slane %v3298, 1
      %v3300 = vadd.f32 %v3298, %v3299
      %vm3301 = vmand %vm3222, %vm3167
      %v3302 = vsel %vm3301, 1, 0
      %v3303 = vcvt.s32.f32 %v3302
      %v3304 = vmul.f32 %v3300, %v3303
      %v3305 = vadd.f32 %v3279, %v3304
      %v3306 = vld [vmem:[#allocation5 + $0x8] sm:$0x3e]
      %3307 = vrot.lane.b32.xlu0 %v3205, 64
      %v3308 = vpop.permute.xlu0 %3307
      %v3310 = vmul.f32 %v3204, %v3308
      %v3311 = vmul.f32 %v3306, %v3308
      %3314 = vrot.lane.b32.xlu0 %v3310, 64
      %v3315 = vpop.permute.xlu0 %3314
      %3316 = vrot.lane.b32.xlu0 %v3311, 64
      %v3317 = vpop.permute.xlu0 %3316
      %v3318 = vsel %vm3185, %v3315, %v3317
      %v3320 = vsel %vm3208, %v3318, 0.0
      %3321 = vadd.xlane.f32.xlu0 %v3320
      %v3322 = vpop.xlane.xlu0 %3321
      %v3324 = vrot.slane %v3322, 1
      %v3326 = vsel %vm415, %v3324, 0.0
      %v3327 = vrot.slane %v3326, 4
      %v3328 = vadd.f32 %v3326, %v3327
      %v3329 = vrot.slane %v3328, 2
      %v3330 = vadd.f32 %v3328, %v3329
      %v3331 = vrot.slane %v3330, 1
      %v3332 = vadd.f32 %v3330, %v3331
      %vm3333 = vmand %vm3222, %vm3198
      %v3334 = vsel %vm3333, 1, 0
      %v3335 = vcvt.s32.f32 %v3334
      %v3336 = vmul.f32 %v3332, %v3335
      %v3337 = vadd.f32 %v3305, %v3336
      %v3338 = vld [vmem:[#allocation5] sm:$0x7c]
      %v3339 = vrot.slane %v3076, 6
      %v3341 = vmul.f32 %v3338, %v3339
      %vm3342 = vcmask 653314
      %v3343 = vsel %vm3342, %v3341, 0.0
      %3344 = vadd.xlane.f32.xlu0 %v3343
      %v3345 = vpop.xlane.xlu0 %3344
      %v3347 = vrot.slane %v3345, 2
      %v3349 = vsel %vm415, %v3347, 0.0
      %v3350 = vrot.slane %v3349, 4
      %v3351 = vadd.f32 %v3349, %v3350
      %v3352 = vrot.slane %v3351, 2
      %v3353 = vadd.f32 %v3351, %v3352
      %v3354 = vrot.slane %v3353, 1
      %v3355 = vadd.f32 %v3353, %v3354
      %vm3356 = vcmp.eq.s32.totalorder %v3078, 2
      %vm3357 = vmand %vm3356, %vm3094
      %v3358 = vsel %vm3357, 1, 0
      %v3359 = vcvt.s32.f32 %v3358
      %v3360 = vmul.f32 %v3355, %v3359
      %v3361 = vadd.f32 %v3337, %v3360
      %3362 = vrot.lane.b32.xlu0 %v3339, 16
      %v3363 = vpop.permute.xlu0 %3362
      %v3365 = vmul.f32 %v3338, %v3363
      %3367 = vrot.lane.b32.xlu0 %v3365, 112
      %v3368 = vpop.permute.xlu0 %3367
      %v3370 = vsel %vm3342, %v3368, 0.0
      %3371 = vadd.xlane.f32.xlu0 %v3370
      %v3372 = vpop.xlane.xlu0 %3371
      %v3374 = vrot.slane %v3372, 2
      %v3376 = vsel %vm415, %v3374, 0.0
      %v3377 = vrot.slane %v3376, 4
      %v3378 = vadd.f32 %v3376, %v3377
      %v3379 = vrot.slane %v3378, 2
      %v3380 = vadd.f32 %v3378, %v3379
      %v3381 = vrot.slane %v3380, 1
      %v3382 = vadd.f32 %v3380, %v3381
      %vm3383 = vmand %vm3356, %vm3119
      %v3384 = vsel %vm3383, 1, 0
      %v3385 = vcvt.s32.f32 %v3384
      %v3386 = vmul.f32 %v3382, %v3385
      %v3387 = vadd.f32 %v3361, %v3386
      %3388 = vrot.lane.b32.xlu0 %v3339, 32
      %v3389 = vpop.permute.xlu0 %3388
      %v3391 = vmul.f32 %v3338, %v3389
      %3393 = vrot.lane.b32.xlu0 %v3391, 96
      %v3394 = vpop.permute.xlu0 %3393
      %v3396 = vsel %vm3342, %v3394, 0.0
      %3397 = vadd.xlane.f32.xlu0 %v3396
      %v3398 = vpop.xlane.xlu0 %3397
      %v3400 = vrot.slane %v3398, 2
      %v3402 = vsel %vm415, %v3400, 0.0
      %v3403 = vrot.slane %v3402, 4
      %v3404 = vadd.f32 %v3402, %v3403
      %v3405 = vrot.slane %v3404, 2
      %v3406 = vadd.f32 %v3404, %v3405
      %v3407 = vrot.slane %v3406, 1
      %v3408 = vadd.f32 %v3406, %v3407
      %vm3409 = vmand %vm3356, %vm3143
      %v3410 = vsel %vm3409, 1, 0
      %v3411 = vcvt.s32.f32 %v3410
      %v3412 = vmul.f32 %v3408, %v3411
      %v3413 = vadd.f32 %v3387, %v3412
      %3414 = vrot.lane.b32.xlu0 %v3339, 48
      %v3415 = vpop.permute.xlu0 %3414
      %v3417 = vmul.f32 %v3338, %v3415
      %3419 = vrot.lane.b32.xlu0 %v3417, 80
      %v3420 = vpop.permute.xlu0 %3419
      %v3422 = vsel %vm3342, %v3420, 0.0
      %3423 = vadd.xlane.f32.xlu0 %v3422
      %v3424 = vpop.xlane.xlu0 %3423
      %v3426 = vrot.slane %v3424, 2
      %v3428 = vsel %vm415, %v3426, 0.0
      %v3429 = vrot.slane %v3428, 4
      %v3430 = vadd.f32 %v3428, %v3429
      %v3431 = vrot.slane %v3430, 2
      %v3432 = vadd.f32 %v3430, %v3431
      %v3433 = vrot.slane %v3432, 1
      %v3434 = vadd.f32 %v3432, %v3433
      %vm3435 = vmand %vm3356, %vm3167
      %v3436 = vsel %vm3435, 1, 0
      %v3437 = vcvt.s32.f32 %v3436
      %v3438 = vmul.f32 %v3434, %v3437
      %v3439 = vadd.f32 %v3413, %v3438
      %v3440 = vld [vmem:[#allocation5 + $0x8] sm:$0x7c]
      %3441 = vrot.lane.b32.xlu0 %v3339, 64
      %v3442 = vpop.permute.xlu0 %3441
      %v3444 = vmul.f32 %v3338, %v3442
      %v3445 = vmul.f32 %v3440, %v3442
      %3448 = vrot.lane.b32.xlu0 %v3444, 64
      %v3449 = vpop.permute.xlu0 %3448
      %3450 = vrot.lane.b32.xlu0 %v3445, 64
      %v3451 = vpop.permute.xlu0 %3450
      %v3452 = vsel %vm3185, %v3449, %v3451
      %v3454 = vsel %vm3342, %v3452, 0.0
      %3455 = vadd.xlane.f32.xlu0 %v3454
      %v3456 = vpop.xlane.xlu0 %3455
      %v3458 = vrot.slane %v3456, 2
      %v3460 = vsel %vm415, %v3458, 0.0
      %v3461 = vrot.slane %v3460, 4
      %v3462 = vadd.f32 %v3460, %v3461
      %v3463 = vrot.slane %v3462, 2
      %v3464 = vadd.f32 %v3462, %v3463
      %v3465 = vrot.slane %v3464, 1
      %v3466 = vadd.f32 %v3464, %v3465
      %vm3467 = vmand %vm3356, %vm3198
      %v3468 = vsel %vm3467, 1, 0
      %v3469 = vcvt.s32.f32 %v3468
      %v3470 = vmul.f32 %v3466, %v3469
      %v3471 = vadd.f32 %v3439, %v3470
      %v3472 = vld [vmem:[#allocation5] sm:$0xf8]
      %v3473 = vrot.slane %v3076, 5
      %v3475 = vmul.f32 %v3472, %v3473
      %vm3476 = vcmask 654339
      %v3477 = vsel %vm3476, %v3475, 0.0
      %3478 = vadd.xlane.f32.xlu0 %v3477
      %v3479 = vpop.xlane.xlu0 %3478
      %v3481 = vrot.slane %v3479, 3
      %v3483 = vsel %vm415, %v3481, 0.0
      %v3484 = vrot.slane %v3483, 4
      %v3485 = vadd.f32 %v3483, %v3484
      %v3486 = vrot.slane %v3485, 2
      %v3487 = vadd.f32 %v3485, %v3486
      %v3488 = vrot.slane %v3487, 1
      %v3489 = vadd.f32 %v3487, %v3488
      %vm3490 = vcmp.eq.s32.totalorder %v3078, 3
      %vm3491 = vmand %vm3490, %vm3094
      %v3492 = vsel %vm3491, 1, 0
      %v3493 = vcvt.s32.f32 %v3492
      %v3494 = vmul.f32 %v3489, %v3493
      %v3495 = vadd.f32 %v3471, %v3494
      %3496 = vrot.lane.b32.xlu0 %v3473, 16
      %v3497 = vpop.permute.xlu0 %3496
      %v3499 = vmul.f32 %v3472, %v3497
      %3501 = vrot.lane.b32.xlu0 %v3499, 112
      %v3502 = vpop.permute.xlu0 %3501
      %v3504 = vsel %vm3476, %v3502, 0.0
      %3505 = vadd.xlane.f32.xlu0 %v3504
      %v3506 = vpop.xlane.xlu0 %3505
      %v3508 = vrot.slane %v3506, 3
      %v3510 = vsel %vm415, %v3508, 0.0
      %v3511 = vrot.slane %v3510, 4
      %v3512 = vadd.f32 %v3510, %v3511
      %v3513 = vrot.slane %v3512, 2
      %v3514 = vadd.f32 %v3512, %v3513
      %v3515 = vrot.slane %v3514, 1
      %v3516 = vadd.f32 %v3514, %v3515
      %vm3517 = vmand %vm3490, %vm3119
      %v3518 = vsel %vm3517, 1, 0
      %v3519 = vcvt.s32.f32 %v3518
      %v3520 = vmul.f32 %v3516, %v3519
      %v3521 = vadd.f32 %v3495, %v3520
      %3522 = vrot.lane.b32.xlu0 %v3473, 32
      %v3523 = vpop.permute.xlu0 %3522
      %v3525 = vmul.f32 %v3472, %v3523
      %3527 = vrot.lane.b32.xlu0 %v3525, 96
      %v3528 = vpop.permute.xlu0 %3527
      %v3530 = vsel %vm3476, %v3528, 0.0
      %3531 = vadd.xlane.f32.xlu0 %v3530
      %v3532 = vpop.xlane.xlu0 %3531
      %v3534 = vrot.slane %v3532, 3
      %v3536 = vsel %vm415, %v3534, 0.0
      %v3537 = vrot.slane %v3536, 4
      %v3538 = vadd.f32 %v3536, %v3537
      %v3539 = vrot.slane %v3538, 2
      %v3540 = vadd.f32 %v3538, %v3539
      %v3541 = vrot.slane %v3540, 1
      %v3542 = vadd.f32 %v3540, %v3541
      %vm3543 = vmand %vm3490, %vm3143
      %v3544 = vsel %vm3543, 1, 0
      %v3545 = vcvt.s32.f32 %v3544
      %v3546 = vmul.f32 %v3542, %v3545
      %v3547 = vadd.f32 %v3521, %v3546
      %3548 = vrot.lane.b32.xlu0 %v3473, 48
      %v3549 = vpop.permute.xlu0 %3548
      %v3551 = vmul.f32 %v3472, %v3549
      %3553 = vrot.lane.b32.xlu0 %v3551, 80
      %v3554 = vpop.permute.xlu0 %3553
      %v3556 = vsel %vm3476, %v3554, 0.0
      %3557 = vadd.xlane.f32.xlu0 %v3556
      %v3558 = vpop.xlane.xlu0 %3557
      %v3560 = vrot.slane %v3558, 3
      %v3562 = vsel %vm415, %v3560, 0.0
      %v3563 = vrot.slane %v3562, 4
      %v3564 = vadd.f32 %v3562, %v3563
      %v3565 = vrot.slane %v3564, 2
      %v3566 = vadd.f32 %v3564, %v3565
      %v3567 = vrot.slane %v3566, 1
      %v3568 = vadd.f32 %v3566, %v3567
      %vm3569 = vmand %vm3490, %vm3167
      %v3570 = vsel %vm3569, 1, 0
      %v3571 = vcvt.s32.f32 %v3570
      %v3572 = vmul.f32 %v3568, %v3571
      %v3573 = vadd.f32 %v3547, %v3572
      %v3574 = vld [vmem:[#allocation5 + $0x8] sm:$0xf8]
      %3575 = vrot.lane.b32.xlu0 %v3473, 64
      %v3576 = vpop.permute.xlu0 %3575
      %v3578 = vmul.f32 %v3472, %v3576
      %v3579 = vmul.f32 %v3574, %v3576
      %3582 = vrot.lane.b32.xlu0 %v3578, 64
      %v3583 = vpop.permute.xlu0 %3582
      %3584 = vrot.lane.b32.xlu0 %v3579, 64
      %v3585 = vpop.permute.xlu0 %3584
      %v3586 = vsel %vm3185, %v3583, %v3585
      %v3588 = vsel %vm3476, %v3586, 0.0
      %3589 = vadd.xlane.f32.xlu0 %v3588
      %v3590 = vpop.xlane.xlu0 %3589
      %v3592 = vrot.slane %v3590, 3
      %v3594 = vsel %vm415, %v3592, 0.0
      %v3595 = vrot.slane %v3594, 4
      %v3596 = vadd.f32 %v3594, %v3595
      %v3597 = vrot.slane %v3596, 2
      %v3598 = vadd.f32 %v3596, %v3597
      %v3599 = vrot.slane %v3598, 1
      %v3600 = vadd.f32 %v3598, %v3599
      %vm3601 = vmand %vm3490, %vm3198
      %v3602 = vsel %vm3601, 1, 0
      %v3603 = vcvt.s32.f32 %v3602
      %v3604 = vmul.f32 %v3600, %v3603
      %v3605 = vadd.f32 %v3573, %v3604
      %v3606 = vld [vmem:[#allocation5] sm:$0xf0]
      %v3607 = vld [vmem:[#allocation5 + $0x10] sm:$0x1]
      %v3608 = vrot.slane %v3076, 4
      %v3610 = vmul.f32 %v3606, %v3608
      %v3611 = vmul.f32 %v3607, %v3608
      %vm3612 = vcmask 654340
      %v3613 = vsel %vm3612, %v3610, 0.0
      %3614 = vadd.xlane.f32.xlu0 %v3613
      %v3615 = vpop.xlane.xlu0 %3614
      %vm3616 = vcmask 647168
      %v3617 = vsel %vm3616, %v3611, 0.0
      %3618 = vadd.xlane.f32.xlu0 %v3617
      %v3619 = vpop.xlane.xlu0 %3618
      %v3622 = vrot.slane %v3615, 4
      %v3623 = vrot.slane %v3619, 4
      %v3624 = vsel %vm861, %v3622, %v3623
      %v3626 = vsel %vm415, %v3624, 0.0
      %v3627 = vrot.slane %v3626, 4
      %v3628 = vadd.f32 %v3626, %v3627
      %v3629 = vrot.slane %v3628, 2
      %v3630 = vadd.f32 %v3628, %v3629
      %v3631 = vrot.slane %v3630, 1
      %v3632 = vadd.f32 %v3630, %v3631
      %vm3633 = vcmp.eq.s32.totalorder %v3078, 4
      %vm3634 = vmand %vm3633, %vm3094
      %v3635 = vsel %vm3634, 1, 0
      %v3636 = vcvt.s32.f32 %v3635
      %v3637 = vmul.f32 %v3632, %v3636
      %v3638 = vadd.f32 %v3605, %v3637
      %3639 = vrot.lane.b32.xlu0 %v3608, 16
      %v3640 = vpop.permute.xlu0 %3639
      %v3642 = vmul.f32 %v3606, %v3640
      %v3643 = vmul.f32 %v3607, %v3640
      %3646 = vrot.lane.b32.xlu0 %v3642, 112
      %v3647 = vpop.permute.xlu0 %3646
      %3648 = vrot.lane.b32.xlu0 %v3643, 112
      %v3649 = vpop.permute.xlu0 %3648
      %v3652 = vsel %vm3612, %v3647, 0.0
      %3653 = vadd.xlane.f32.xlu0 %v3652
      %v3654 = vpop.xlane.xlu0 %3653
      %v3655 = vsel %vm3616, %v3649, 0.0
      %3656 = vadd.xlane.f32.xlu0 %v3655
      %v3657 = vpop.xlane.xlu0 %3656
      %v3660 = vrot.slane %v3654, 4
      %v3661 = vrot.slane %v3657, 4
      %v3662 = vsel %vm861, %v3660, %v3661
      %v3664 = vsel %vm415, %v3662, 0.0
      %v3665 = vrot.slane %v3664, 4
      %v3666 = vadd.f32 %v3664, %v3665
      %v3667 = vrot.slane %v3666, 2
      %v3668 = vadd.f32 %v3666, %v3667
      %v3669 = vrot.slane %v3668, 1
      %v3670 = vadd.f32 %v3668, %v3669
      %vm3671 = vmand %vm3633, %vm3119
      %v3672 = vsel %vm3671, 1, 0
      %v3673 = vcvt.s32.f32 %v3672
      %v3674 = vmul.f32 %v3670, %v3673
      %v3675 = vadd.f32 %v3638, %v3674
      %3676 = vrot.lane.b32.xlu0 %v3608, 32
      %v3677 = vpop.permute.xlu0 %3676
      %v3679 = vmul.f32 %v3606, %v3677
      %v3680 = vmul.f32 %v3607, %v3677
      %3683 = vrot.lane.b32.xlu0 %v3679, 96
      %v3684 = vpop.permute.xlu0 %3683
      %3685 = vrot.lane.b32.xlu0 %v3680, 96
      %v3686 = vpop.permute.xlu0 %3685
      %v3689 = vsel %vm3612, %v3684, 0.0
      %3690 = vadd.xlane.f32.xlu0 %v3689
      %v3691 = vpop.xlane.xlu0 %3690
      %v3692 = vsel %vm3616, %v3686, 0.0
      %3693 = vadd.xlane.f32.xlu0 %v3692
      %v3694 = vpop.xlane.xlu0 %3693
      %v3697 = vrot.slane %v3691, 4
      %v3698 = vrot.slane %v3694, 4
      %v3699 = vsel %vm861, %v3697, %v3698
      %v3701 = vsel %vm415, %v3699, 0.0
      %v3702 = vrot.slane %v3701, 4
      %v3703 = vadd.f32 %v3701, %v3702
      %v3704 = vrot.slane %v3703, 2
      %v3705 = vadd.f32 %v3703, %v3704
      %v3706 = vrot.slane %v3705, 1
      %v3707 = vadd.f32 %v3705, %v3706
      %vm3708 = vmand %vm3633, %vm3143
      %v3709 = vsel %vm3708, 1, 0
      %v3710 = vcvt.s32.f32 %v3709
      %v3711 = vmul.f32 %v3707, %v3710
      %v3712 = vadd.f32 %v3675, %v3711
      %3713 = vrot.lane.b32.xlu0 %v3608, 48
      %v3714 = vpop.permute.xlu0 %3713
      %v3716 = vmul.f32 %v3606, %v3714
      %v3717 = vmul.f32 %v3607, %v3714
      %3720 = vrot.lane.b32.xlu0 %v3716, 80
      %v3721 = vpop.permute.xlu0 %3720
      %3722 = vrot.lane.b32.xlu0 %v3717, 80
      %v3723 = vpop.permute.xlu0 %3722
      %v3726 = vsel %vm3612, %v3721, 0.0
      %3727 = vadd.xlane.f32.xlu0 %v3726
      %v3728 = vpop.xlane.xlu0 %3727
      %v3729 = vsel %vm3616, %v3723, 0.0
      %3730 = vadd.xlane.f32.xlu0 %v3729
      %v3731 = vpop.xlane.xlu0 %3730
      %v3734 = vrot.slane %v3728, 4
      %v3735 = vrot.slane %v3731, 4
      %v3736 = vsel %vm861, %v3734, %v3735
      %v3738 = vsel %vm415, %v3736, 0.0
      %v3739 = vrot.slane %v3738, 4
      %v3740 = vadd.f32 %v3738, %v3739
      %v3741 = vrot.slane %v3740, 2
      %v3742 = vadd.f32 %v3740, %v3741
      %v3743 = vrot.slane %v3742, 1
      %v3744 = vadd.f32 %v3742, %v3743
      %vm3745 = vmand %vm3633, %vm3167
      %v3746 = vsel %vm3745, 1, 0
      %v3747 = vcvt.s32.f32 %v3746
      %v3748 = vmul.f32 %v3744, %v3747
      %v3749 = vadd.f32 %v3712, %v3748
      %v3750 = vld [vmem:[#allocation5 + $0x8] sm:$0xf0]
      %v3751 = vld [vmem:[#allocation5 + $0x18] sm:$0x1]
      %3752 = vrot.lane.b32.xlu0 %v3608, 64
      %v3753 = vpop.permute.xlu0 %3752
      %v3755 = vmul.f32 %v3606, %v3753
      %v3756 = vmul.f32 %v3750, %v3753
      %v3757 = vmul.f32 %v3607, %v3753
      %v3758 = vmul.f32 %v3751, %v3753
      %3763 = vrot.lane.b32.xlu0 %v3755, 64
      %v3764 = vpop.permute.xlu0 %3763
      %3765 = vrot.lane.b32.xlu0 %v3756, 64
      %v3766 = vpop.permute.xlu0 %3765
      %3767 = vrot.lane.b32.xlu0 %v3757, 64
      %v3768 = vpop.permute.xlu0 %3767
      %3769 = vrot.lane.b32.xlu0 %v3758, 64
      %v3770 = vpop.permute.xlu0 %3769
      %v3771 = vsel %vm3185, %v3764, %v3766
      %v3772 = vsel %vm3185, %v3768, %v3770
      %v3775 = vsel %vm3612, %v3771, 0.0
      %3776 = vadd.xlane.f32.xlu0 %v3775
      %v3777 = vpop.xlane.xlu0 %3776
      %v3778 = vsel %vm3616, %v3772, 0.0
      %3779 = vadd.xlane.f32.xlu0 %v3778
      %v3780 = vpop.xlane.xlu0 %3779
      %v3783 = vrot.slane %v3777, 4
      %v3784 = vrot.slane %v3780, 4
      %v3785 = vsel %vm861, %v3783, %v3784
      %v3787 = vsel %vm415, %v3785, 0.0
      %v3788 = vrot.slane %v3787, 4
      %v3789 = vadd.f32 %v3787, %v3788
      %v3790 = vrot.slane %v3789, 2
      %v3791 = vadd.f32 %v3789, %v3790
      %v3792 = vrot.slane %v3791, 1
      %v3793 = vadd.f32 %v3791, %v3792
      %vm3794 = vmand %vm3633, %vm3198
      %v3795 = vsel %vm3794, 1, 0
      %v3796 = vcvt.s32.f32 %v3795
      %v3797 = vmul.f32 %v3793, %v3796
      %v3798 = vadd.f32 %v3749, %v3797
      %v3799 = vmul.f32 %v3798, 0.001
      %vm3800 = vcmask 36864
      %3801 = vst.msk [vmem:[%s374] sm:$0x1f] %vm3800, %v3799
      %p3802 = scmp.lt.s32.totalorder %s21, 1
      %s3803 = scalar_select %p3802, %s21, 1
      %s3804 = smul.addr %s3803, 8
      %s3805 = scalar_lea.vmem %s10, %s3804
      // Predicated region
      $region61: #{siam_uav_forward.1} parent=59 // pred_check
        %p3806 = pneg %p259
      $region62: #{siam_uav_forward.1} parent=59 // pred_check_branch
        %3808 = sbr.rel (%p3806) target = $region64
      $region63: #{siam_uav_forward.1} parent=59 // pred_region
        _
      $region64: #{siam_uav_forward.1} parent=59 // pred_fallthru
        _
    $region60: #{siam_uav_forward.1} parent=5 // pred_fallthru
      _
    %p3809 = scmp.le.s32.totalorder 2, %s16
    // Predicated region
    $region65: #{siam_uav_forward.1} parent=5 // pred_check
      %p3810 = pneg %p3809
    $region66: #{siam_uav_forward.1} parent=5 // pred_check_branch
      %3812 = sbr.rel (%p3810) target = $region68
    $region67: #{siam_uav_forward.1} parent=5 // pred_region
      %s3813 = ssub.s32 %s16, 2
      // Predicated region
      $region69: #{siam_uav_forward.1} parent=67 // pred_check
        %p3814 = pneg %p265
      $region70: #{siam_uav_forward.1} parent=67 // pred_check_branch
        %3816 = sbr.rel (%p3814) target = $region72
      $region71: #{siam_uav_forward.1} parent=67 // pred_region
        %p3817 = scmp.lt.s32.totalorder %s22, 1
        %s3818 = scalar_select %p3817, %s22, 1
        %s3819 = smul.addr %s3818, 8
        %s3820 = scalar_lea.vmem %s10, %s3819
      $region72: #{siam_uav_forward.1} parent=67 // pred_fallthru
        _
    $region68: #{siam_uav_forward.1} parent=5 // pred_fallthru
      _
  $region6: #{siam_uav_forward.1} parent=0 // loop_footer
    %s20 = sadd.s32 1, %s16
  $region7: #{siam_uav_forward.1} parent=0 // loop_footer_branch
    %15 = sbr.rel target = $region3
  $region8: #{siam_uav_forward.1} parent=0 // loop_exit
    _

</llo_original>
